<compile_context>
chip_gen: v7x
topology: tpu7x:2x2x1
jax: 0.10.0
libtpu: 0.0.40
codegen_flags: <defaults>
</compile_context>

<pallas_src>
import functools

import jax
import jax.numpy as jnp
from jax.experimental import pallas as pl
from jax.experimental.pallas import tpu as pltpu

LANE = 128
SUBLANE = 8


def _round_up(x, m):
    return ((x + m - 1) // m) * m


# ----------------------------------------------------------------------------
# Kernel 1: fused bidirectional LSTM layer (input projection + recurrence),
# time-blocked.  Per grid step:
#   1. one (tb*Bp, K)@(K, 4Hp) bf16 GEMM per direction -> f32 gate scratch
#   2. per-step loop: (Bp, Hp)@(Hp, 4Hp) hidden matmul per direction + fused
#      (2Bp, 4Hp) gate elementwise math; h/c carried in VMEM scratch.
# Gate column order is [i, f, o, g] (sigmoid on one 3Hp slab, tanh on Hp).
# ----------------------------------------------------------------------------
def _bilstm_layer_kernel(n_in, tb, seq_len, *refs):
    xf_refs = refs[:n_in]                       # fwd-order input blocks
    xb_refs = refs[n_in:2 * n_in]               # bwd-order input blocks
    wih_f, wih_b, whh_f, whh_b, b_f, b_b = refs[2 * n_in:2 * n_in + 6]
    of_ref, ob_ref = refs[2 * n_in + 6:2 * n_in + 8]
    projf_st, projb_st, h_st, c_st = refs[2 * n_in + 8:]

    Bp = of_ref.shape[1]
    Hp = of_ref.shape[2]
    G = 4 * Hp
    blk = pl.program_id(0)
    n_blk = pl.num_programs(0)

    @pl.when(blk == 0)
    def _():
        h_st[...] = jnp.zeros_like(h_st)        # rows [:Bp] fwd, [Bp:] bwd
        c_st[...] = jnp.zeros_like(c_st)

    # Hoisted per-block input projection (bias folded in), f32 accumulation.
    def block_proj(x_refs, wih_ref, b_ref, out_st):
        acc = None
        off = 0
        for xr in x_refs:
            K = xr.shape[-1]
            d = jnp.dot(xr[...].reshape(tb * Bp, K),
                        wih_ref[off:off + K, :],
                        preferred_element_type=jnp.float32)
            acc = d if acc is None else acc + d
            off += K
        out_st[...] = (acc + b_ref[0]).reshape(tb, Bp, G)

    block_proj(xf_refs, wih_f, b_f, projf_st)
    block_proj(xb_refs, wih_b, b_b, projb_st)

    @pl.loop(0, tb)
    def _(s):
        sb = tb - 1 - s                          # bwd local (reversed) index
        hf32 = h_st[0:Bp]
        hb32 = h_st[Bp:2 * Bp]
        gf = projf_st[s] + jnp.dot(hf32.astype(jnp.bfloat16), whh_f[...],
                                   preferred_element_type=jnp.float32)
        gb = projb_st[sb] + jnp.dot(hb32.astype(jnp.bfloat16), whh_b[...],
                                    preferred_element_type=jnp.float32)
        gates = jnp.concatenate([gf, gb], axis=0)        # (2Bp, 4Hp) f32

        sig = jax.nn.sigmoid(gates[:, 0:3 * Hp])          # [i | f | o]
        i_g = sig[:, 0:Hp]
        f_g = sig[:, Hp:2 * Hp]
        o_g = sig[:, 2 * Hp:3 * Hp]
        g_g = jnp.tanh(gates[:, 3 * Hp:4 * Hp])

        c_new = f_g * c_st[...] + i_g * g_g
        h_new = o_g * jnp.tanh(c_new)

        # Forward direction: always commit (padded tail is processed last and
        # its outputs are discarded by the caller).
        h_st[0:Bp] = h_new[0:Bp]
        c_st[0:Bp] = c_new[0:Bp]
        of_ref[pl.ds(s, 1)] = h_new[0:Bp].astype(of_ref.dtype).reshape(1, Bp, Hp)

        # Backward direction: output write is harmless in the padded tail, but
        # state commits must be masked so the real reverse scan starts clean.
        ob_ref[pl.ds(sb, 1)] = h_new[Bp:2 * Bp].astype(ob_ref.dtype).reshape(1, Bp, Hp)
        t_bwd = (n_blk - 1 - blk) * tb + sb

        @pl.when(t_bwd < seq_len)
        def _():
            h_st[Bp:2 * Bp] = h_new[Bp:2 * Bp]
            c_st[Bp:2 * Bp] = c_new[Bp:2 * Bp]


def bilstm_layer(xs, wih_f, wih_b, whh_f, whh_b, b_f, b_b, *, seq_len, time_block):
    """xs: list of time-major bf16 inputs (Tp, Bp, Kj) -> (h_fwd, h_bwd) bf16."""
    Tp, Bp, _ = xs[0].shape
    Hp = whh_f.shape[0]
    G = 4 * Hp
    n_in = len(xs)
    tb = time_block
    nTb = Tp // tb
    assert nTb * tb == Tp

    in_specs = []
    for x in xs:                                            # fwd-order blocks
        K = x.shape[-1]
        in_specs.append(pl.BlockSpec((tb, Bp, K), lambda i: (i, 0, 0)))
    for x in xs:                                            # bwd-order blocks
        K = x.shape[-1]
        in_specs.append(pl.BlockSpec((tb, Bp, K), lambda i, n=nTb: (n - 1 - i, 0, 0)))
    for w in (wih_f, wih_b, whh_f, whh_b, b_f, b_b):        # resident weights
        in_specs.append(pl.BlockSpec(w.shape, lambda i: (0, 0)))

    out_sds = jax.ShapeDtypeStruct((Tp, Bp, Hp), jnp.bfloat16)
    out_specs = (
        pl.BlockSpec((tb, Bp, Hp), lambda i: (i, 0, 0)),
        pl.BlockSpec((tb, Bp, Hp), lambda i, n=nTb: (n - 1 - i, 0, 0)),
    )

    kernel = functools.partial(_bilstm_layer_kernel, n_in, tb, seq_len)
    return pl.pallas_call(
        kernel,
        out_shape=(out_sds, out_sds),
        grid=(nTb,),
        in_specs=in_specs,
        out_specs=out_specs,
        scratch_shapes=[
            pltpu.VMEM((tb, Bp, G), jnp.float32),   # fwd projected gates
            pltpu.VMEM((tb, Bp, G), jnp.float32),   # bwd projected gates
            pltpu.VMEM((2 * Bp, Hp), jnp.float32),  # h state (fwd|bwd rows)
            pltpu.VMEM((2 * Bp, Hp), jnp.float32),  # c state
        ],
        compiler_params=pltpu.CompilerParams(
            dimension_semantics=("arbitrary",)),    # recurrence: sequential
    )(*xs, *xs, wih_f, wih_b, whh_f, whh_b, b_f, b_b)


# ----------------------------------------------------------------------------
# Kernel 2: fused dual-input projection  out = xf @ w[:Hp] + xb @ w[Hp:] + b.
# Used for the final fc; reads the fwd/bwd halves once each, no HBM concat.
# ----------------------------------------------------------------------------
def _proj_dual_kernel(xf_ref, xb_ref, w_ref, b_ref, o_ref):
    hp = xf_ref.shape[-1]
    o_ref[...] = (
        jnp.dot(xf_ref[...], w_ref[0:hp, :], preferred_element_type=jnp.float32)
        + jnp.dot(xb_ref[...], w_ref[hp:2 * hp, :],
                  preferred_element_type=jnp.float32)
        + b_ref[0]
    )


def proj_dual(xf, xb, w, b, *, row_block=512):
    """xf/xb: (N, Hp) bf16, w: (2*Hp, G) bf16, b: (1, G) f32 -> (N, G) f32."""
    N, Hp = xf.shape
    G = w.shape[1]
    rb = min(row_block, N)
    return pl.pallas_call(
        _proj_dual_kernel,
        out_shape=jax.ShapeDtypeStruct((N, G), jnp.float32),
        grid=(pl.cdiv(N, rb),),
        in_specs=[
            pl.BlockSpec((rb, Hp), lambda i: (i, 0)),
            pl.BlockSpec((rb, Hp), lambda i: (i, 0)),
            pl.BlockSpec(w.shape, lambda i: (0, 0)),
            pl.BlockSpec(b.shape, lambda i: (0, 0)),
        ],
        out_specs=pl.BlockSpec((rb, G), lambda i: (i, 0)),
        compiler_params=pltpu.CompilerParams(
            dimension_semantics=("parallel",)),
    )(xf, xb, w, b)


# ----------------------------------------------------------------------------
# Parameter init (TPU-padded layouts, PyTorch-equivalent semantics).
# Weights stored bf16 (MXU operands); biases/state stay f32.
# ----------------------------------------------------------------------------
def init_params(key, word_size, d_model, hid_dim, n_layers, output_size):
    H = hid_dim
    Hp = _round_up(H, LANE)
    Dp = _round_up(d_model, LANE)
    Op = _round_up(output_size, LANE)
    G = 4 * Hp
    gate_perm = jnp.array([0, 1, 3, 2])      # PyTorch [i,f,g,o] -> [i,f,o,g]

    def pad_gate_cols(w):
        # (..., 4H) -> (..., 4Hp): reorder gates, zero-pad each block to Hp.
        lead = w.shape[:-1]
        w4 = w.reshape(*lead, 4, H)
        w4 = jnp.take(w4, gate_perm, axis=-2)
        pad = [(0, 0)] * len(lead) + [(0, 0), (0, Hp - H)]
        return jnp.pad(w4, pad).reshape(*lead, G)

    def pad_row_blocks(w, nblk, r, rp):
        # (nblk*r, C) -> (nblk*rp, C): each row block zero-padded to rp rows.
        c = w.shape[-1]
        w3 = w.reshape(nblk, r, c)
        return jnp.pad(w3, ((0, 0), (0, rp - r), (0, 0))).reshape(nblk * rp, c)

    params = {}
    k_emb, key = jax.random.split(key)
    emb = 0.1 * jax.random.normal(k_emb, (word_size, d_model), jnp.float32)
    emb = emb.at[0].set(0.0)                              # padding_idx = 0
    params["embedding"] = jnp.pad(
        emb, ((0, 0), (0, Dp - d_model))).astype(jnp.bfloat16)

    lstm = []
    for layer in range(n_layers):
        layer_p = {}
        for direction in ("fwd", "bwd"):
            key, k1, k2, k3, k4 = jax.random.split(key, 5)
            din = d_model if layer == 0 else 2 * H
            w_ih = 0.1 * jax.random.normal(k1, (din, 4 * H), jnp.float32)
            w_hh = 0.1 * jax.random.normal(k2, (H, 4 * H), jnp.float32)
            b_ih = 0.1 * jax.random.normal(k3, (4 * H,), jnp.float32)
            b_hh = 0.1 * jax.random.normal(k4, (4 * H,), jnp.float32)

            w_ih_p = pad_gate_cols(w_ih)
            if layer == 0:
                w_ih_p = pad_row_blocks(w_ih_p, 1, d_model, Dp)   # (Dp, G)
            else:
                w_ih_p = pad_row_blocks(w_ih_p, 2, H, Hp)         # (2Hp, G)
            w_hh_p = pad_row_blocks(pad_gate_cols(w_hh), 1, H, Hp)  # (Hp, G)
            b_p = pad_gate_cols((b_ih + b_hh).reshape(1, 4 * H))    # (1, G) f32

            layer_p[direction] = {
                "w_ih": w_ih_p.astype(jnp.bfloat16),
                "w_hh": w_hh_p.astype(jnp.bfloat16),
                "b": b_p,
            }
        lstm.append(layer_p)
    params["lstm"] = lstm

    key, k1, k2 = jax.random.split(key, 3)
    fc_w = 0.1 * jax.random.normal(k1, (2 * H, output_size), jnp.float32)
    fc_b = 0.1 * jax.random.normal(k2, (output_size,), jnp.float32)
    fc_w_p = pad_row_blocks(fc_w, 2, H, Hp)                        # (2Hp, O)
    params["fc_w"] = jnp.pad(
        fc_w_p, ((0, 0), (0, Op - output_size))).astype(jnp.bfloat16)
    params["fc_b"] = jnp.pad(fc_b.reshape(1, output_size),
                             ((0, 0), (0, Op - output_size)))
    return params


# ----------------------------------------------------------------------------
# Forward pass: JAX glue (embedding gather, padding, final flatten) + kernels.
# ----------------------------------------------------------------------------
@functools.partial(jax.jit, static_argnames=("output_size", "time_block"))
def seq_tagger_forward(params, token_ids, *, output_size, time_block=128):
    """token_ids: (B, T) int32 -> (B*T, output_size) f32."""
    B, T = token_ids.shape
    Bp = _round_up(B, SUBLANE)
    emb = params["embedding"]

    tb = min(time_block, T)
    nTb = (T + tb - 1) // tb
    Tp = nTb * tb

    # Pad the batch with padding tokens (embedding row 0 is zero), gather
    # time-major directly (no activation transpose in HBM), pad time to Tp.
    ids_p = jnp.zeros((Bp, T), token_ids.dtype).at[:B, :].set(token_ids)
    x = jnp.take(emb, ids_p.T, axis=0)                    # (T, Bp, Dp) bf16
    if Tp != T:
        x = jnp.pad(x, ((0, Tp - T), (0, 0), (0, 0)))

    hs = [x]                                              # layer 0: single input
    for lp in params["lstm"]:
        hf, hb = bilstm_layer(
            hs, lp["fwd"]["w_ih"], lp["bwd"]["w_ih"],
            lp["fwd"]["w_hh"], lp["bwd"]["w_hh"],
            lp["fwd"]["b"], lp["bwd"]["b"],
            seq_len=T, time_block=tb)
        hs = [hf, hb]                                     # layers > 0: dual input

    hf, hb = hs
    N = Tp * Bp
    Hp = hf.shape[-1]
    logits_p = proj_dual(hf.reshape(N, Hp), hb.reshape(N, Hp),
                         params["fc_w"], params["fc_b"])            # (N, Op) f32
    Op = logits_p.shape[-1]
    logits = logits_p.reshape(Tp, Bp, Op)[:T, :B, :output_size]     # (T, B, O)
    # Batch-major flatten == torch `out.view(-1, out.size(-1))` (batch_first).
    return jnp.transpose(logits, (1, 0, 2)).reshape(B * T, output_size)


if __name__ == "__main__":
    args = {
        "word_size": 32,
        "d_model": 16,
        "hid_dim": 32,
        "n_layers": 2,
        "dropout": 0.0,
        "output_size": 8,
    }
    B, T = 2, 8

    key = jax.random.PRNGKey(0)
    k_params, k_tokens = jax.random.split(key)
    params = init_params(
        k_params,
        args["word_size"],
        args["d_model"],
        args["hid_dim"],
        args["n_layers"],
        args["output_size"],
    )
    token_ids = jax.random.randint(
        k_tokens, (B, T), minval=0, maxval=args["word_size"], dtype=jnp.int32
    )

    out = seq_tagger_forward(params, token_ids, output_size=args["output_size"])
    out = jax.block_until_ready(out)
    assert out.shape == (B * T, args["output_size"])
    assert bool(jnp.all(jnp.isfinite(out)))
    print("KERNEL_OK")
</pallas_src>

<mosaic_0001>
module attributes {stable_mosaic.version = 11 : i64} {
  func.func @_bilstm_layer_kernel(%arg0: i32, %arg1: memref<8x8x128xbf16, #tpu.memory_space<vmem>>, %arg2: memref<8x8x128xbf16, #tpu.memory_space<vmem>>, %arg3: memref<128x512xbf16, #tpu.memory_space<vmem>>, %arg4: memref<128x512xbf16, #tpu.memory_space<vmem>>, %arg5: memref<128x512xbf16, #tpu.memory_space<vmem>>, %arg6: memref<128x512xbf16, #tpu.memory_space<vmem>>, %arg7: memref<1x512xf32, #tpu.memory_space<vmem>>, %arg8: memref<1x512xf32, #tpu.memory_space<vmem>>, %arg9: memref<8x8x128xbf16, #tpu.memory_space<vmem>>, %arg10: memref<8x8x128xbf16, #tpu.memory_space<vmem>>, %arg11: memref<8x8x512xf32, #tpu.memory_space<vmem>>, %arg12: memref<8x8x512xf32, #tpu.memory_space<vmem>>, %arg13: memref<16x128xf32, #tpu.memory_space<vmem>>, %arg14: memref<16x128xf32, #tpu.memory_space<vmem>>) attributes {dimension_semantics = [#tpu.dimension_semantics<arbitrary>], iteration_bounds = array<i64: 1>, scalar_prefetch = 0 : i64, scratch_operands = 4 : i64, tpu.core_type = #tpu.core_type<tc>, window_params = [{transform_indices = @transform_0, window_bounds = array<i64: 8, 8, 128>}, {transform_indices = @transform_1, window_bounds = array<i64: 8, 8, 128>}, {pipeline_mode = #tpu.pipeline_mode<synchronous>, transform_indices = @transform_2, window_bounds = array<i64: 128, 512>}, {pipeline_mode = #tpu.pipeline_mode<synchronous>, transform_indices = @transform_3, window_bounds = array<i64: 128, 512>}, {pipeline_mode = #tpu.pipeline_mode<synchronous>, transform_indices = @transform_4, window_bounds = array<i64: 128, 512>}, {pipeline_mode = #tpu.pipeline_mode<synchronous>, transform_indices = @transform_5, window_bounds = array<i64: 128, 512>}, {pipeline_mode = #tpu.pipeline_mode<synchronous>, transform_indices = @transform_6, window_bounds = array<i64: 1, 512>}, {pipeline_mode = #tpu.pipeline_mode<synchronous>, transform_indices = @transform_7, window_bounds = array<i64: 1, 512>}, {transform_indices = @transform_8, window_bounds = array<i64: 8, 8, 128>}, {transform_indices = @transform_9, window_bounds = array<i64: 8, 8, 128>}]} {
    %c0_i32 = arith.constant 0 : i32
    %0 = arith.cmpi eq, %arg0, %c0_i32 : i32
    %1 = arith.extui %0 : i1 to i32
    %c0_i32_0 = arith.constant 0 : i32
    %2 = arith.cmpi ne, %1, %c0_i32_0 : i32
    scf.if %2 {
      %cst_23 = arith.constant 0.000000e+00 : f32
      %26 = vector.broadcast %cst_23 : f32 to vector<16x128xf32>
      %c0_24 = arith.constant 0 : index
      %c0_25 = arith.constant 0 : index
      %27 = vector.load %arg13[%c0_24, %c0_25] : memref<16x128xf32, #tpu.memory_space<vmem>>, vector<16x128xf32>
      tpu.vector_store %arg13[%c0_24, %c0_25], %26 {strides = array<i32>} : memref<16x128xf32, #tpu.memory_space<vmem>>, vector<16x128xf32>,
      %cst_26 = arith.constant 0.000000e+00 : f32
      %28 = vector.broadcast %cst_26 : f32 to vector<16x128xf32>
      %c0_27 = arith.constant 0 : index
      %c0_28 = arith.constant 0 : index
      %29 = vector.load %arg14[%c0_27, %c0_28] : memref<16x128xf32, #tpu.memory_space<vmem>>, vector<16x128xf32>
      tpu.vector_store %arg14[%c0_27, %c0_28], %28 {strides = array<i32>} : memref<16x128xf32, #tpu.memory_space<vmem>>, vector<16x128xf32>,
    } else {
    }
    %c0 = arith.constant 0 : index
    %c0_1 = arith.constant 0 : index
    %c0_2 = arith.constant 0 : index
    %3 = vector.load %arg1[%c0, %c0_1, %c0_2] : memref<8x8x128xbf16, #tpu.memory_space<vmem>>, vector<8x8x128xbf16>
    %4 = vector.shape_cast %3 : vector<8x8x128xbf16> to vector<64x128xbf16>
    %c0_3 = arith.constant 0 : index
    %c0_4 = arith.constant 0 : index
    %5 = vector.load %arg3[%c0_3, %c0_4] : memref<128x512xbf16, #tpu.memory_space<vmem>>, vector<128x512xbf16>
    %cst = arith.constant dense<0.000000e+00> : vector<64x512xf32>
    %6 = tpu.matmul %4, %5, %cst {dimension_numbers = #tpu.dot_dimension_numbers<[1], [0], [0], [1], [0, 0, 1, 1], [], []>} : vector<64x128xbf16>, vector<128x512xbf16>, vector<64x512xf32> -> vector<64x512xf32>
    %c0_5 = arith.constant 0 : index
    %c0_6 = arith.constant 0 : index
    %7 = vector.load %arg7[%c0_5, %c0_6] : memref<1x512xf32, #tpu.memory_space<vmem>>, vector<1x512xf32>
    %8 = vector.shape_cast %7 : vector<1x512xf32> to vector<512xf32>
    %9 = vector.shape_cast %8 : vector<512xf32> to vector<1x512xf32>
    %10 = vector.broadcast %9 : vector<1x512xf32> to vector<64x512xf32>
    %11 = arith.addf %6, %10 : vector<64x512xf32>
    %12 = vector.shape_cast %11 : vector<64x512xf32> to vector<8x8x512xf32>
    %c0_7 = arith.constant 0 : index
    %c0_8 = arith.constant 0 : index
    %c0_9 = arith.constant 0 : index
    %13 = vector.load %arg11[%c0_7, %c0_8, %c0_9] : memref<8x8x512xf32, #tpu.memory_space<vmem>>, vector<8x8x512xf32>
    tpu.vector_store %arg11[%c0_7, %c0_8, %c0_9], %12 {strides = array<i32>} : memref<8x8x512xf32, #tpu.memory_space<vmem>>, vector<8x8x512xf32>,
    %c0_10 = arith.constant 0 : index
    %c0_11 = arith.constant 0 : index
    %c0_12 = arith.constant 0 : index
    %14 = vector.load %arg2[%c0_10, %c0_11, %c0_12] : memref<8x8x128xbf16, #tpu.memory_space<vmem>>, vector<8x8x128xbf16>
    %15 = vector.shape_cast %14 : vector<8x8x128xbf16> to vector<64x128xbf16>
    %c0_13 = arith.constant 0 : index
    %c0_14 = arith.constant 0 : index
    %16 = vector.load %arg4[%c0_13, %c0_14] : memref<128x512xbf16, #tpu.memory_space<vmem>>, vector<128x512xbf16>
    %cst_15 = arith.constant dense<0.000000e+00> : vector<64x512xf32>
    %17 = tpu.matmul %15, %16, %cst_15 {dimension_numbers = #tpu.dot_dimension_numbers<[1], [0], [0], [1], [0, 0, 1, 1], [], []>} : vector<64x128xbf16>, vector<128x512xbf16>, vector<64x512xf32> -> vector<64x512xf32>
    %c0_16 = arith.constant 0 : index
    %c0_17 = arith.constant 0 : index
    %18 = vector.load %arg8[%c0_16, %c0_17] : memref<1x512xf32, #tpu.memory_space<vmem>>, vector<1x512xf32>
    %19 = vector.shape_cast %18 : vector<1x512xf32> to vector<512xf32>
    %20 = vector.shape_cast %19 : vector<512xf32> to vector<1x512xf32>
    %21 = vector.broadcast %20 : vector<1x512xf32> to vector<64x512xf32>
    %22 = arith.addf %17, %21 : vector<64x512xf32>
    %23 = vector.shape_cast %22 : vector<64x512xf32> to vector<8x8x512xf32>
    %c0_18 = arith.constant 0 : index
    %c0_19 = arith.constant 0 : index
    %c0_20 = arith.constant 0 : index
    %24 = vector.load %arg12[%c0_18, %c0_19, %c0_20] : memref<8x8x512xf32, #tpu.memory_space<vmem>>, vector<8x8x512xf32>
    tpu.vector_store %arg12[%c0_18, %c0_19, %c0_20], %23 {strides = array<i32>} : memref<8x8x512xf32, #tpu.memory_space<vmem>>, vector<8x8x512xf32>,
    %c0_i32_21 = arith.constant 0 : i32
    %c8_i32 = arith.constant 8 : i32
    %25 = arith.addi %c0_i32_21, %c8_i32 : i32
    %c1_i32 = arith.constant 1 : i32
    scf.for %arg15 = %c0_i32_21 to %25 step %c1_i32  : i32 {
      %c1_i32_23 = arith.constant 1 : i32
      %26 = arith.muli %arg15, %c1_i32_23 : i32
      %c0_i32_24 = arith.constant 0 : i32
      %27 = arith.addi %c0_i32_24, %26 : i32
      %c7_i32 = arith.constant 7 : i32
      %28 = arith.subi %c7_i32, %27 : i32
      %c0_25 = arith.constant 0 : index
      %c0_26 = arith.constant 0 : index
      %29 = vector.load %arg13[%c0_25, %c0_26] : memref<16x128xf32, #tpu.memory_space<vmem>>, vector<8x128xf32>
      %c8 = arith.constant 8 : index
      %c0_27 = arith.constant 0 : index
      %30 = vector.load %arg13[%c8, %c0_27] : memref<16x128xf32, #tpu.memory_space<vmem>>, vector<8x128xf32>
      %31 = arith.index_cast %27 : i32 to index
      %c0_28 = arith.constant 0 : index
      %c0_29 = arith.constant 0 : index
      %32 = vector.load %arg11[%31, %c0_28, %c0_29] : memref<8x8x512xf32, #tpu.memory_space<vmem>>, vector<1x8x512xf32>
      %33 = vector.shape_cast %32 : vector<1x8x512xf32> to vector<8x512xf32>
      %34 = arith.truncf %29 : vector<8x128xf32> to vector<8x128xbf16>
      %c0_30 = arith.constant 0 : index
      %c0_31 = arith.constant 0 : index
      %35 = vector.load %arg5[%c0_30, %c0_31] : memref<128x512xbf16, #tpu.memory_space<vmem>>, vector<128x512xbf16>
      %cst_32 = arith.constant dense<0.000000e+00> : vector<8x512xf32>
      %36 = tpu.matmul %34, %35, %cst_32 {dimension_numbers = #tpu.dot_dimension_numbers<[1], [0], [0], [1], [0, 0, 1, 1], [], []>} : vector<8x128xbf16>, vector<128x512xbf16>, vector<8x512xf32> -> vector<8x512xf32>
      %37 = arith.addf %33, %36 : vector<8x512xf32>
      %38 = arith.index_cast %28 : i32 to index
      %c0_33 = arith.constant 0 : index
      %c0_34 = arith.constant 0 : index
      %39 = vector.load %arg12[%38, %c0_33, %c0_34] : memref<8x8x512xf32, #tpu.memory_space<vmem>>, vector<1x8x512xf32>
      %40 = vector.shape_cast %39 : vector<1x8x512xf32> to vector<8x512xf32>
      %41 = arith.truncf %30 : vector<8x128xf32> to vector<8x128xbf16>
      %c0_35 = arith.constant 0 : index
      %c0_36 = arith.constant 0 : index
      %42 = vector.load %arg6[%c0_35, %c0_36] : memref<128x512xbf16, #tpu.memory_space<vmem>>, vector<128x512xbf16>
      %cst_37 = arith.constant dense<0.000000e+00> : vector<8x512xf32>
      %43 = tpu.matmul %41, %42, %cst_37 {dimension_numbers = #tpu.dot_dimension_numbers<[1], [0], [0], [1], [0, 0, 1, 1], [], []>} : vector<8x128xbf16>, vector<128x512xbf16>, vector<8x512xf32> -> vector<8x512xf32>
      %44 = arith.addf %40, %43 : vector<8x512xf32>
      %45 = tpu.concatenate %37, %44 in 0 : vector<8x512xf32>, vector<8x512xf32> -> vector<16x512xf32>
      %46 = vector.extract_strided_slice %45 {offsets = [0, 0], sizes = [16, 384], strides = [1, 1]} : vector<16x512xf32> to vector<16x384xf32>
      %47 = arith.negf %46 : vector<16x384xf32>
      %48 = math.exp %47 : vector<16x384xf32>
      %cst_38 = arith.constant 1.000000e+00 : f32
      %49 = vector.broadcast %cst_38 : f32 to vector<16x384xf32>
      %50 = arith.addf %49, %48 : vector<16x384xf32>
      %51 = arith.divf %49, %50 : vector<16x384xf32>
      %52 = vector.extract_strided_slice %51 {offsets = [0, 0], sizes = [16, 128], strides = [1, 1]} : vector<16x384xf32> to vector<16x128xf32>
      %53 = vector.extract_strided_slice %51 {offsets = [0, 128], sizes = [16, 128], strides = [1, 1]} : vector<16x384xf32> to vector<16x128xf32>
      %54 = vector.extract_strided_slice %51 {offsets = [0, 256], sizes = [16, 128], strides = [1, 1]} : vector<16x384xf32> to vector<16x128xf32>
      %55 = vector.extract_strided_slice %45 {offsets = [0, 384], sizes = [16, 128], strides = [1, 1]} : vector<16x512xf32> to vector<16x128xf32>
      %56 = math.tanh %55 : vector<16x128xf32>
      %c0_39 = arith.constant 0 : index
      %c0_40 = arith.constant 0 : index
      %57 = vector.load %arg14[%c0_39, %c0_40] : memref<16x128xf32, #tpu.memory_space<vmem>>, vector<16x128xf32>
      %58 = arith.mulf %53, %57 : vector<16x128xf32>
      %59 = arith.mulf %52, %56 : vector<16x128xf32>
      %60 = arith.addf %58, %59 : vector<16x128xf32>
      %61 = math.tanh %60 : vector<16x128xf32>
      %62 = arith.mulf %54, %61 : vector<16x128xf32>
      %63 = vector.extract_strided_slice %62 {offsets = [0, 0], sizes = [8, 128], strides = [1, 1]} : vector<16x128xf32> to vector<8x128xf32>
      %c0_41 = arith.constant 0 : index
      %c0_42 = arith.constant 0 : index
      %64 = vector.load %arg13[%c0_41, %c0_42] : memref<16x128xf32, #tpu.memory_space<vmem>>, vector<8x128xf32>
      tpu.vector_store %arg13[%c0_41, %c0_42], %63 {strides = array<i32>} : memref<16x128xf32, #tpu.memory_space<vmem>>, vector<8x128xf32>,
      %65 = vector.extract_strided_slice %60 {offsets = [0, 0], sizes = [8, 128], strides = [1, 1]} : vector<16x128xf32> to vector<8x128xf32>
      %c0_43 = arith.constant 0 : index
      %c0_44 = arith.constant 0 : index
      %66 = vector.load %arg14[%c0_43, %c0_44] : memref<16x128xf32, #tpu.memory_space<vmem>>, vector<8x128xf32>
      tpu.vector_store %arg14[%c0_43, %c0_44], %65 {strides = array<i32>} : memref<16x128xf32, #tpu.memory_space<vmem>>, vector<8x128xf32>,
      %67 = vector.extract_strided_slice %62 {offsets = [0, 0], sizes = [8, 128], strides = [1, 1]} : vector<16x128xf32> to vector<8x128xf32>
      %68 = arith.truncf %67 : vector<8x128xf32> to vector<8x128xbf16>
      %69 = vector.shape_cast %68 : vector<8x128xbf16> to vector<1x8x128xbf16>
      %70 = arith.index_cast %27 : i32 to index
      %c0_45 = arith.constant 0 : index
      %c0_46 = arith.constant 0 : index
      %71 = vector.load %arg9[%70, %c0_45, %c0_46] : memref<8x8x128xbf16, #tpu.memory_space<vmem>>, vector<1x8x128xbf16>
      tpu.vector_store %arg9[%70, %c0_45, %c0_46], %69 {strides = array<i32>} : memref<8x8x128xbf16, #tpu.memory_space<vmem>>, vector<1x8x128xbf16>,
      %72 = vector.extract_strided_slice %62 {offsets = [8, 0], sizes = [8, 128], strides = [1, 1]} : vector<16x128xf32> to vector<8x128xf32>
      %73 = arith.truncf %72 : vector<8x128xf32> to vector<8x128xbf16>
      %74 = vector.shape_cast %73 : vector<8x128xbf16> to vector<1x8x128xbf16>
      %75 = arith.index_cast %28 : i32 to index
      %c0_47 = arith.constant 0 : index
      %c0_48 = arith.constant 0 : index
      %76 = vector.load %arg10[%75, %c0_47, %c0_48] : memref<8x8x128xbf16, #tpu.memory_space<vmem>>, vector<1x8x128xbf16>
      tpu.vector_store %arg10[%75, %c0_47, %c0_48], %74 {strides = array<i32>} : memref<8x8x128xbf16, #tpu.memory_space<vmem>>, vector<1x8x128xbf16>,
      %c0_i32_49 = arith.constant 0 : i32
      %77 = arith.subi %c0_i32_49, %arg0 : i32
      %c8_i32_50 = arith.constant 8 : i32
      %78 = arith.muli %77, %c8_i32_50 : i32
      %79 = arith.addi %78, %28 : i32
      %c8_i32_51 = arith.constant 8 : i32
      %80 = arith.cmpi slt, %79, %c8_i32_51 : i32
      %81 = arith.extui %80 : i1 to i32
      %c0_i32_52 = arith.constant 0 : i32
      %82 = arith.cmpi ne, %81, %c0_i32_52 : i32
      scf.if %82 {
        %83 = vector.extract_strided_slice %62 {offsets = [8, 0], sizes = [8, 128], strides = [1, 1]} : vector<16x128xf32> to vector<8x128xf32>
        %c8_53 = arith.constant 8 : index
        %c0_54 = arith.constant 0 : index
        %84 = vector.load %arg13[%c8_53, %c0_54] : memref<16x128xf32, #tpu.memory_space<vmem>>, vector<8x128xf32>
        tpu.vector_store %arg13[%c8_53, %c0_54], %83 {strides = array<i32>} : memref<16x128xf32, #tpu.memory_space<vmem>>, vector<8x128xf32>,
        %85 = vector.extract_strided_slice %60 {offsets = [8, 0], sizes = [8, 128], strides = [1, 1]} : vector<16x128xf32> to vector<8x128xf32>
        %c8_55 = arith.constant 8 : index
        %c0_56 = arith.constant 0 : index
        %86 = vector.load %arg14[%c8_55, %c0_56] : memref<16x128xf32, #tpu.memory_space<vmem>>, vector<8x128xf32>
        tpu.vector_store %arg14[%c8_55, %c0_56], %85 {strides = array<i32>} : memref<16x128xf32, #tpu.memory_space<vmem>>, vector<8x128xf32>,
      } else {
      }
    }
    %c8_i32_22 = arith.constant 8 : i32
    return
  }
  func.func @transform_0(%arg0: i32) -> (i32, i32, i32) {
    %c0_i32 = arith.constant 0 : i32
    %c0_i32_0 = arith.constant 0 : i32
    %c0_i32_1 = arith.constant 0 : i32
    return %arg0, %c0_i32, %c0_i32_0 : i32, i32, i32
  }
  func.func @transform_1(%arg0: i32) -> (i32, i32, i32) {
    %c0_i32 = arith.constant 0 : i32
    %0 = arith.subi %c0_i32, %arg0 : i32
    %c0_i32_0 = arith.constant 0 : i32
    %c0_i32_1 = arith.constant 0 : i32
    %c0_i32_2 = arith.constant 0 : i32
    return %0, %c0_i32_0, %c0_i32_1 : i32, i32, i32
  }
  func.func @transform_2(%arg0: i32) -> (i32, i32) {
    %c0_i32 = arith.constant 0 : i32
    %c0_i32_0 = arith.constant 0 : i32
    %c0_i32_1 = arith.constant 0 : i32
    return %c0_i32, %c0_i32_0 : i32, i32
  }
  func.func @transform_3(%arg0: i32) -> (i32, i32) {
    %c0_i32 = arith.constant 0 : i32
    %c0_i32_0 = arith.constant 0 : i32
    %c0_i32_1 = arith.constant 0 : i32
    return %c0_i32, %c0_i32_0 : i32, i32
  }
  func.func @transform_4(%arg0: i32) -> (i32, i32) {
    %c0_i32 = arith.constant 0 : i32
    %c0_i32_0 = arith.constant 0 : i32
    %c0_i32_1 = arith.constant 0 : i32
    return %c0_i32, %c0_i32_0 : i32, i32
  }
  func.func @transform_5(%arg0: i32) -> (i32, i32) {
    %c0_i32 = arith.constant 0 : i32
    %c0_i32_0 = arith.constant 0 : i32
    %c0_i32_1 = arith.constant 0 : i32
    return %c0_i32, %c0_i32_0 : i32, i32
  }
  func.func @transform_6(%arg0: i32) -> (i32, i32) {
    %c0_i32 = arith.constant 0 : i32
    %c0_i32_0 = arith.constant 0 : i32
    %c0_i32_1 = arith.constant 0 : i32
    return %c0_i32, %c0_i32_0 : i32, i32
  }
  func.func @transform_7(%arg0: i32) -> (i32, i32) {
    %c0_i32 = arith.constant 0 : i32
    %c0_i32_0 = arith.constant 0 : i32
    %c0_i32_1 = arith.constant 0 : i32
    return %c0_i32, %c0_i32_0 : i32, i32
  }
  func.func @transform_8(%arg0: i32) -> (i32, i32, i32) {
    %c0_i32 = arith.constant 0 : i32
    %c0_i32_0 = arith.constant 0 : i32
    %c0_i32_1 = arith.constant 0 : i32
    return %arg0, %c0_i32, %c0_i32_0 : i32, i32, i32
  }
  func.func @transform_9(%arg0: i32) -> (i32, i32, i32) {
    %c0_i32 = arith.constant 0 : i32
    %0 = arith.subi %c0_i32, %arg0 : i32
    %c0_i32_0 = arith.constant 0 : i32
    %c0_i32_1 = arith.constant 0 : i32
    %c0_i32_2 = arith.constant 0 : i32
    return %0, %c0_i32_0, %c0_i32_1 : i32, i32, i32
  }
}

module attributes {stable_mosaic.version = 11 : i64} {
  func.func @_proj_dual_kernel(%arg0: i32, %arg1: memref<64x128xbf16, #tpu.memory_space<vmem>>, %arg2: memref<64x128xbf16, #tpu.memory_space<vmem>>, %arg3: memref<256x128xbf16, #tpu.memory_space<vmem>>, %arg4: memref<1x128xf32, #tpu.memory_space<vmem>>, %arg5: memref<64x128xf32, #tpu.memory_space<vmem>>) attributes {dimension_semantics = [#tpu.dimension_semantics<parallel>], iteration_bounds = array<i64: 1>, scalar_prefetch = 0 : i64, scratch_operands = 0 : i64, tpu.core_type = #tpu.core_type<tc>, window_params = [{transform_indices = @transform_0, window_bounds = array<i64: 64, 128>}, {transform_indices = @transform_1, window_bounds = array<i64: 64, 128>}, {pipeline_mode = #tpu.pipeline_mode<synchronous>, transform_indices = @transform_2, window_bounds = array<i64: 256, 128>}, {pipeline_mode = #tpu.pipeline_mode<synchronous>, transform_indices = @transform_3, window_bounds = array<i64: 1, 128>}, {transform_indices = @transform_4, window_bounds = array<i64: 64, 128>}]} {
    %c0 = arith.constant 0 : index
    %c0_0 = arith.constant 0 : index
    %0 = vector.load %arg1[%c0, %c0_0] : memref<64x128xbf16, #tpu.memory_space<vmem>>, vector<64x128xbf16>
    %c0_1 = arith.constant 0 : index
    %c0_2 = arith.constant 0 : index
    %1 = vector.load %arg3[%c0_1, %c0_2] : memref<256x128xbf16, #tpu.memory_space<vmem>>, vector<128x128xbf16>
    %cst = arith.constant dense<0.000000e+00> : vector<64x128xf32>
    %2 = tpu.matmul %0, %1, %cst {dimension_numbers = #tpu.dot_dimension_numbers<[1], [0], [0], [1], [0, 0, 1, 1], [], []>} : vector<64x128xbf16>, vector<128x128xbf16>, vector<64x128xf32> -> vector<64x128xf32>
    %c0_3 = arith.constant 0 : index
    %c0_4 = arith.constant 0 : index
    %3 = vector.load %arg2[%c0_3, %c0_4] : memref<64x128xbf16, #tpu.memory_space<vmem>>, vector<64x128xbf16>
    %c128 = arith.constant 128 : index
    %c0_5 = arith.constant 0 : index
    %4 = vector.load %arg3[%c128, %c0_5] : memref<256x128xbf16, #tpu.memory_space<vmem>>, vector<128x128xbf16>
    %cst_6 = arith.constant dense<0.000000e+00> : vector<64x128xf32>
    %5 = tpu.matmul %3, %4, %cst_6 {dimension_numbers = #tpu.dot_dimension_numbers<[1], [0], [0], [1], [0, 0, 1, 1], [], []>} : vector<64x128xbf16>, vector<128x128xbf16>, vector<64x128xf32> -> vector<64x128xf32>
    %6 = arith.addf %2, %5 : vector<64x128xf32>
    %c0_7 = arith.constant 0 : index
    %c0_8 = arith.constant 0 : index
    %7 = vector.load %arg4[%c0_7, %c0_8] : memref<1x128xf32, #tpu.memory_space<vmem>>, vector<1x128xf32>
    %8 = vector.shape_cast %7 : vector<1x128xf32> to vector<128xf32>
    %9 = vector.shape_cast %8 : vector<128xf32> to vector<1x128xf32>
    %10 = vector.broadcast %9 : vector<1x128xf32> to vector<64x128xf32>
    %11 = arith.addf %6, %10 : vector<64x128xf32>
    %c0_9 = arith.constant 0 : index
    %c0_10 = arith.constant 0 : index
    %12 = vector.load %arg5[%c0_9, %c0_10] : memref<64x128xf32, #tpu.memory_space<vmem>>, vector<64x128xf32>
    tpu.vector_store %arg5[%c0_9, %c0_10], %11 {strides = array<i32>} : memref<64x128xf32, #tpu.memory_space<vmem>>, vector<64x128xf32>,
    return
  }
  func.func @transform_0(%arg0: i32) -> (i32, i32) {
    %c0_i32 = arith.constant 0 : i32
    %c0_i32_0 = arith.constant 0 : i32
    return %arg0, %c0_i32 : i32, i32
  }
  func.func @transform_1(%arg0: i32) -> (i32, i32) {
    %c0_i32 = arith.constant 0 : i32
    %c0_i32_0 = arith.constant 0 : i32
    return %arg0, %c0_i32 : i32, i32
  }
  func.func @transform_2(%arg0: i32) -> (i32, i32) {
    %c0_i32 = arith.constant 0 : i32
    %c0_i32_0 = arith.constant 0 : i32
    %c0_i32_1 = arith.constant 0 : i32
    return %c0_i32, %c0_i32_0 : i32, i32
  }
  func.func @transform_3(%arg0: i32) -> (i32, i32) {
    %c0_i32 = arith.constant 0 : i32
    %c0_i32_0 = arith.constant 0 : i32
    %c0_i32_1 = arith.constant 0 : i32
    return %c0_i32, %c0_i32_0 : i32, i32
  }
  func.func @transform_4(%arg0: i32) -> (i32, i32) {
    %c0_i32 = arith.constant 0 : i32
    %c0_i32_0 = arith.constant 0 : i32
    return %arg0, %c0_i32 : i32, i32
  }
}

module attributes {stable_mosaic.version = 11 : i64} {
  func.func @_bilstm_layer_kernel(%arg0: i32, %arg1: memref<8x8x128xbf16, #tpu.memory_space<vmem>>, %arg2: memref<8x8x128xbf16, #tpu.memory_space<vmem>>, %arg3: memref<8x8x128xbf16, #tpu.memory_space<vmem>>, %arg4: memref<8x8x128xbf16, #tpu.memory_space<vmem>>, %arg5: memref<256x512xbf16, #tpu.memory_space<vmem>>, %arg6: memref<256x512xbf16, #tpu.memory_space<vmem>>, %arg7: memref<128x512xbf16, #tpu.memory_space<vmem>>, %arg8: memref<128x512xbf16, #tpu.memory_space<vmem>>, %arg9: memref<1x512xf32, #tpu.memory_space<vmem>>, %arg10: memref<1x512xf32, #tpu.memory_space<vmem>>, %arg11: memref<8x8x128xbf16, #tpu.memory_space<vmem>>, %arg12: memref<8x8x128xbf16, #tpu.memory_space<vmem>>, %arg13: memref<8x8x512xf32, #tpu.memory_space<vmem>>, %arg14: memref<8x8x512xf32, #tpu.memory_space<vmem>>, %arg15: memref<16x128xf32, #tpu.memory_space<vmem>>, %arg16: memref<16x128xf32, #tpu.memory_space<vmem>>) attributes {dimension_semantics = [#tpu.dimension_semantics<arbitrary>], iteration_bounds = array<i64: 1>, scalar_prefetch = 0 : i64, scratch_operands = 4 : i64, tpu.core_type = #tpu.core_type<tc>, window_params = [{transform_indices = @transform_0, window_bounds = array<i64: 8, 8, 128>}, {transform_indices = @transform_1, window_bounds = array<i64: 8, 8, 128>}, {transform_indices = @transform_2, window_bounds = array<i64: 8, 8, 128>}, {transform_indices = @transform_3, window_bounds = array<i64: 8, 8, 128>}, {pipeline_mode = #tpu.pipeline_mode<synchronous>, transform_indices = @transform_4, window_bounds = array<i64: 256, 512>}, {pipeline_mode = #tpu.pipeline_mode<synchronous>, transform_indices = @transform_5, window_bounds = array<i64: 256, 512>}, {pipeline_mode = #tpu.pipeline_mode<synchronous>, transform_indices = @transform_6, window_bounds = array<i64: 128, 512>}, {pipeline_mode = #tpu.pipeline_mode<synchronous>, transform_indices = @transform_7, window_bounds = array<i64: 128, 512>}, {pipeline_mode = #tpu.pipeline_mode<synchronous>, transform_indices = @transform_8, window_bounds = array<i64: 1, 512>}, {pipeline_mode = #tpu.pipeline_mode<synchronous>, transform_indices = @transform_9, window_bounds = array<i64: 1, 512>}, {transform_indices = @transform_10, window_bounds = array<i64: 8, 8, 128>}, {transform_indices = @transform_11, window_bounds = array<i64: 8, 8, 128>}]} {
    %c0_i32 = arith.constant 0 : i32
    %0 = arith.cmpi eq, %arg0, %c0_i32 : i32
    %1 = arith.extui %0 : i1 to i32
    %c0_i32_0 = arith.constant 0 : i32
    %2 = arith.cmpi ne, %1, %c0_i32_0 : i32
    scf.if %2 {
      %cst_34 = arith.constant 0.000000e+00 : f32
      %36 = vector.broadcast %cst_34 : f32 to vector<16x128xf32>
      %c0_35 = arith.constant 0 : index
      %c0_36 = arith.constant 0 : index
      %37 = vector.load %arg15[%c0_35, %c0_36] : memref<16x128xf32, #tpu.memory_space<vmem>>, vector<16x128xf32>
      tpu.vector_store %arg15[%c0_35, %c0_36], %36 {strides = array<i32>} : memref<16x128xf32, #tpu.memory_space<vmem>>, vector<16x128xf32>,
      %cst_37 = arith.constant 0.000000e+00 : f32
      %38 = vector.broadcast %cst_37 : f32 to vector<16x128xf32>
      %c0_38 = arith.constant 0 : index
      %c0_39 = arith.constant 0 : index
      %39 = vector.load %arg16[%c0_38, %c0_39] : memref<16x128xf32, #tpu.memory_space<vmem>>, vector<16x128xf32>
      tpu.vector_store %arg16[%c0_38, %c0_39], %38 {strides = array<i32>} : memref<16x128xf32, #tpu.memory_space<vmem>>, vector<16x128xf32>,
    } else {
    }
    %c0 = arith.constant 0 : index
    %c0_1 = arith.constant 0 : index
    %c0_2 = arith.constant 0 : index
    %3 = vector.load %arg1[%c0, %c0_1, %c0_2] : memref<8x8x128xbf16, #tpu.memory_space<vmem>>, vector<8x8x128xbf16>
    %4 = vector.shape_cast %3 : vector<8x8x128xbf16> to vector<64x128xbf16>
    %c0_3 = arith.constant 0 : index
    %c0_4 = arith.constant 0 : index
    %5 = vector.load %arg5[%c0_3, %c0_4] : memref<256x512xbf16, #tpu.memory_space<vmem>>, vector<128x512xbf16>
    %cst = arith.constant dense<0.000000e+00> : vector<64x512xf32>
    %6 = tpu.matmul %4, %5, %cst {dimension_numbers = #tpu.dot_dimension_numbers<[1], [0], [0], [1], [0, 0, 1, 1], [], []>} : vector<64x128xbf16>, vector<128x512xbf16>, vector<64x512xf32> -> vector<64x512xf32>
    %c0_5 = arith.constant 0 : index
    %c0_6 = arith.constant 0 : index
    %c0_7 = arith.constant 0 : index
    %7 = vector.load %arg2[%c0_5, %c0_6, %c0_7] : memref<8x8x128xbf16, #tpu.memory_space<vmem>>, vector<8x8x128xbf16>
    %8 = vector.shape_cast %7 : vector<8x8x128xbf16> to vector<64x128xbf16>
    %c128 = arith.constant 128 : index
    %c0_8 = arith.constant 0 : index
    %9 = vector.load %arg5[%c128, %c0_8] : memref<256x512xbf16, #tpu.memory_space<vmem>>, vector<128x512xbf16>
    %cst_9 = arith.constant dense<0.000000e+00> : vector<64x512xf32>
    %10 = tpu.matmul %8, %9, %cst_9 {dimension_numbers = #tpu.dot_dimension_numbers<[1], [0], [0], [1], [0, 0, 1, 1], [], []>} : vector<64x128xbf16>, vector<128x512xbf16>, vector<64x512xf32> -> vector<64x512xf32>
    %11 = arith.addf %6, %10 : vector<64x512xf32>
    %c0_10 = arith.constant 0 : index
    %c0_11 = arith.constant 0 : index
    %12 = vector.load %arg9[%c0_10, %c0_11] : memref<1x512xf32, #tpu.memory_space<vmem>>, vector<1x512xf32>
    %13 = vector.shape_cast %12 : vector<1x512xf32> to vector<512xf32>
    %14 = vector.shape_cast %13 : vector<512xf32> to vector<1x512xf32>
    %15 = vector.broadcast %14 : vector<1x512xf32> to vector<64x512xf32>
    %16 = arith.addf %11, %15 : vector<64x512xf32>
    %17 = vector.shape_cast %16 : vector<64x512xf32> to vector<8x8x512xf32>
    %c0_12 = arith.constant 0 : index
    %c0_13 = arith.constant 0 : index
    %c0_14 = arith.constant 0 : index
    %18 = vector.load %arg13[%c0_12, %c0_13, %c0_14] : memref<8x8x512xf32, #tpu.memory_space<vmem>>, vector<8x8x512xf32>
    tpu.vector_store %arg13[%c0_12, %c0_13, %c0_14], %17 {strides = array<i32>} : memref<8x8x512xf32, #tpu.memory_space<vmem>>, vector<8x8x512xf32>,
    %c0_15 = arith.constant 0 : index
    %c0_16 = arith.constant 0 : index
    %c0_17 = arith.constant 0 : index
    %19 = vector.load %arg3[%c0_15, %c0_16, %c0_17] : memref<8x8x128xbf16, #tpu.memory_space<vmem>>, vector<8x8x128xbf16>
    %20 = vector.shape_cast %19 : vector<8x8x128xbf16> to vector<64x128xbf16>
    %c0_18 = arith.constant 0 : index
    %c0_19 = arith.constant 0 : index
    %21 = vector.load %arg6[%c0_18, %c0_19] : memref<256x512xbf16, #tpu.memory_space<vmem>>, vector<128x512xbf16>
    %cst_20 = arith.constant dense<0.000000e+00> : vector<64x512xf32>
    %22 = tpu.matmul %20, %21, %cst_20 {dimension_numbers = #tpu.dot_dimension_numbers<[1], [0], [0], [1], [0, 0, 1, 1], [], []>} : vector<64x128xbf16>, vector<128x512xbf16>, vector<64x512xf32> -> vector<64x512xf32>
    %c0_21 = arith.constant 0 : index
    %c0_22 = arith.constant 0 : index
    %c0_23 = arith.constant 0 : index
    %23 = vector.load %arg4[%c0_21, %c0_22, %c0_23] : memref<8x8x128xbf16, #tpu.memory_space<vmem>>, vector<8x8x128xbf16>
    %24 = vector.shape_cast %23 : vector<8x8x128xbf16> to vector<64x128xbf16>
    %c128_24 = arith.constant 128 : index
    %c0_25 = arith.constant 0 : index
    %25 = vector.load %arg6[%c128_24, %c0_25] : memref<256x512xbf16, #tpu.memory_space<vmem>>, vector<128x512xbf16>
    %cst_26 = arith.constant dense<0.000000e+00> : vector<64x512xf32>
    %26 = tpu.matmul %24, %25, %cst_26 {dimension_numbers = #tpu.dot_dimension_numbers<[1], [0], [0], [1], [0, 0, 1, 1], [], []>} : vector<64x128xbf16>, vector<128x512xbf16>, vector<64x512xf32> -> vector<64x512xf32>
    %27 = arith.addf %22, %26 : vector<64x512xf32>
    %c0_27 = arith.constant 0 : index
    %c0_28 = arith.constant 0 : index
    %28 = vector.load %arg10[%c0_27, %c0_28] : memref<1x512xf32, #tpu.memory_space<vmem>>, vector<1x512xf32>
    %29 = vector.shape_cast %28 : vector<1x512xf32> to vector<512xf32>
    %30 = vector.shape_cast %29 : vector<512xf32> to vector<1x512xf32>
    %31 = vector.broadcast %30 : vector<1x512xf32> to vector<64x512xf32>
    %32 = arith.addf %27, %31 : vector<64x512xf32>
    %33 = vector.shape_cast %32 : vector<64x512xf32> to vector<8x8x512xf32>
    %c0_29 = arith.constant 0 : index
    %c0_30 = arith.constant 0 : index
    %c0_31 = arith.constant 0 : index
    %34 = vector.load %arg14[%c0_29, %c0_30, %c0_31] : memref<8x8x512xf32, #tpu.memory_space<vmem>>, vector<8x8x512xf32>
    tpu.vector_store %arg14[%c0_29, %c0_30, %c0_31], %33 {strides = array<i32>} : memref<8x8x512xf32, #tpu.memory_space<vmem>>, vector<8x8x512xf32>,
    %c0_i32_32 = arith.constant 0 : i32
    %c8_i32 = arith.constant 8 : i32
    %35 = arith.addi %c0_i32_32, %c8_i32 : i32
    %c1_i32 = arith.constant 1 : i32
    scf.for %arg17 = %c0_i32_32 to %35 step %c1_i32  : i32 {
      %c1_i32_34 = arith.constant 1 : i32
      %36 = arith.muli %arg17, %c1_i32_34 : i32
      %c0_i32_35 = arith.constant 0 : i32
      %37 = arith.addi %c0_i32_35, %36 : i32
      %c7_i32 = arith.constant 7 : i32
      %38 = arith.subi %c7_i32, %37 : i32
      %c0_36 = arith.constant 0 : index
      %c0_37 = arith.constant 0 : index
      %39 = vector.load %arg15[%c0_36, %c0_37] : memref<16x128xf32, #tpu.memory_space<vmem>>, vector<8x128xf32>
      %c8 = arith.constant 8 : index
      %c0_38 = arith.constant 0 : index
      %40 = vector.load %arg15[%c8, %c0_38] : memref<16x128xf32, #tpu.memory_space<vmem>>, vector<8x128xf32>
      %41 = arith.index_cast %37 : i32 to index
      %c0_39 = arith.constant 0 : index
      %c0_40 = arith.constant 0 : index
      %42 = vector.load %arg13[%41, %c0_39, %c0_40] : memref<8x8x512xf32, #tpu.memory_space<vmem>>, vector<1x8x512xf32>
      %43 = vector.shape_cast %42 : vector<1x8x512xf32> to vector<8x512xf32>
      %44 = arith.truncf %39 : vector<8x128xf32> to vector<8x128xbf16>
      %c0_41 = arith.constant 0 : index
      %c0_42 = arith.constant 0 : index
      %45 = vector.load %arg7[%c0_41, %c0_42] : memref<128x512xbf16, #tpu.memory_space<vmem>>, vector<128x512xbf16>
      %cst_43 = arith.constant dense<0.000000e+00> : vector<8x512xf32>
      %46 = tpu.matmul %44, %45, %cst_43 {dimension_numbers = #tpu.dot_dimension_numbers<[1], [0], [0], [1], [0, 0, 1, 1], [], []>} : vector<8x128xbf16>, vector<128x512xbf16>, vector<8x512xf32> -> vector<8x512xf32>
      %47 = arith.addf %43, %46 : vector<8x512xf32>
      %48 = arith.index_cast %38 : i32 to index
      %c0_44 = arith.constant 0 : index
      %c0_45 = arith.constant 0 : index
      %49 = vector.load %arg14[%48, %c0_44, %c0_45] : memref<8x8x512xf32, #tpu.memory_space<vmem>>, vector<1x8x512xf32>
      %50 = vector.shape_cast %49 : vector<1x8x512xf32> to vector<8x512xf32>
      %51 = arith.truncf %40 : vector<8x128xf32> to vector<8x128xbf16>
      %c0_46 = arith.constant 0 : index
      %c0_47 = arith.constant 0 : index
      %52 = vector.load %arg8[%c0_46, %c0_47] : memref<128x512xbf16, #tpu.memory_space<vmem>>, vector<128x512xbf16>
      %cst_48 = arith.constant dense<0.000000e+00> : vector<8x512xf32>
      %53 = tpu.matmul %51, %52, %cst_48 {dimension_numbers = #tpu.dot_dimension_numbers<[1], [0], [0], [1], [0, 0, 1, 1], [], []>} : vector<8x128xbf16>, vector<128x512xbf16>, vector<8x512xf32> -> vector<8x512xf32>
      %54 = arith.addf %50, %53 : vector<8x512xf32>
      %55 = tpu.concatenate %47, %54 in 0 : vector<8x512xf32>, vector<8x512xf32> -> vector<16x512xf32>
      %56 = vector.extract_strided_slice %55 {offsets = [0, 0], sizes = [16, 384], strides = [1, 1]} : vector<16x512xf32> to vector<16x384xf32>
      %57 = arith.negf %56 : vector<16x384xf32>
      %58 = math.exp %57 : vector<16x384xf32>
      %cst_49 = arith.constant 1.000000e+00 : f32
      %59 = vector.broadcast %cst_49 : f32 to vector<16x384xf32>
      %60 = arith.addf %59, %58 : vector<16x384xf32>
      %61 = arith.divf %59, %60 : vector<16x384xf32>
      %62 = vector.extract_strided_slice %61 {offsets = [0, 0], sizes = [16, 128], strides = [1, 1]} : vector<16x384xf32> to vector<16x128xf32>
      %63 = vector.extract_strided_slice %61 {offsets = [0, 128], sizes = [16, 128], strides = [1, 1]} : vector<16x384xf32> to vector<16x128xf32>
      %64 = vector.extract_strided_slice %61 {offsets = [0, 256], sizes = [16, 128], strides = [1, 1]} : vector<16x384xf32> to vector<16x128xf32>
      %65 = vector.extract_strided_slice %55 {offsets = [0, 384], sizes = [16, 128], strides = [1, 1]} : vector<16x512xf32> to vector<16x128xf32>
      %66 = math.tanh %65 : vector<16x128xf32>
      %c0_50 = arith.constant 0 : index
      %c0_51 = arith.constant 0 : index
      %67 = vector.load %arg16[%c0_50, %c0_51] : memref<16x128xf32, #tpu.memory_space<vmem>>, vector<16x128xf32>
      %68 = arith.mulf %63, %67 : vector<16x128xf32>
      %69 = arith.mulf %62, %66 : vector<16x128xf32>
      %70 = arith.addf %68, %69 : vector<16x128xf32>
      %71 = math.tanh %70 : vector<16x128xf32>
      %72 = arith.mulf %64, %71 : vector<16x128xf32>
      %73 = vector.extract_strided_slice %72 {offsets = [0, 0], sizes = [8, 128], strides = [1, 1]} : vector<16x128xf32> to vector<8x128xf32>
      %c0_52 = arith.constant 0 : index
      %c0_53 = arith.constant 0 : index
      %74 = vector.load %arg15[%c0_52, %c0_53] : memref<16x128xf32, #tpu.memory_space<vmem>>, vector<8x128xf32>
      tpu.vector_store %arg15[%c0_52, %c0_53], %73 {strides = array<i32>} : memref<16x128xf32, #tpu.memory_space<vmem>>, vector<8x128xf32>,
      %75 = vector.extract_strided_slice %70 {offsets = [0, 0], sizes = [8, 128], strides = [1, 1]} : vector<16x128xf32> to vector<8x128xf32>
      %c0_54 = arith.constant 0 : index
      %c0_55 = arith.constant 0 : index
      %76 = vector.load %arg16[%c0_54, %c0_55] : memref<16x128xf32, #tpu.memory_space<vmem>>, vector<8x128xf32>
      tpu.vector_store %arg16[%c0_54, %c0_55], %75 {strides = array<i32>} : memref<16x128xf32, #tpu.memory_space<vmem>>, vector<8x128xf32>,
      %77 = vector.extract_strided_slice %72 {offsets = [0, 0], sizes = [8, 128], strides = [1, 1]} : vector<16x128xf32> to vector<8x128xf32>
      %78 = arith.truncf %77 : vector<8x128xf32> to vector<8x128xbf16>
      %79 = vector.shape_cast %78 : vector<8x128xbf16> to vector<1x8x128xbf16>
      %80 = arith.index_cast %37 : i32 to index
      %c0_56 = arith.constant 0 : index
      %c0_57 = arith.constant 0 : index
      %81 = vector.load %arg11[%80, %c0_56, %c0_57] : memref<8x8x128xbf16, #tpu.memory_space<vmem>>, vector<1x8x128xbf16>
      tpu.vector_store %arg11[%80, %c0_56, %c0_57], %79 {strides = array<i32>} : memref<8x8x128xbf16, #tpu.memory_space<vmem>>, vector<1x8x128xbf16>,
      %82 = vector.extract_strided_slice %72 {offsets = [8, 0], sizes = [8, 128], strides = [1, 1]} : vector<16x128xf32> to vector<8x128xf32>
      %83 = arith.truncf %82 : vector<8x128xf32> to vector<8x128xbf16>
      %84 = vector.shape_cast %83 : vector<8x128xbf16> to vector<1x8x128xbf16>
      %85 = arith.index_cast %38 : i32 to index
      %c0_58 = arith.constant 0 : index
      %c0_59 = arith.constant 0 : index
      %86 = vector.load %arg12[%85, %c0_58, %c0_59] : memref<8x8x128xbf16, #tpu.memory_space<vmem>>, vector<1x8x128xbf16>
      tpu.vector_store %arg12[%85, %c0_58, %c0_59], %84 {strides = array<i32>} : memref<8x8x128xbf16, #tpu.memory_space<vmem>>, vector<1x8x128xbf16>,
      %c0_i32_60 = arith.constant 0 : i32
      %87 = arith.subi %c0_i32_60, %arg0 : i32
      %c8_i32_61 = arith.constant 8 : i32
      %88 = arith.muli %87, %c8_i32_61 : i32
      %89 = arith.addi %88, %38 : i32
      %c8_i32_62 = arith.constant 8 : i32
      %90 = arith.cmpi slt, %89, %c8_i32_62 : i32
      %91 = arith.extui %90 : i1 to i32
      %c0_i32_63 = arith.constant 0 : i32
      %92 = arith.cmpi ne, %91, %c0_i32_63 : i32
      scf.if %92 {
        %93 = vector.extract_strided_slice %72 {offsets = [8, 0], sizes = [8, 128], strides = [1, 1]} : vector<16x128xf32> to vector<8x128xf32>
        %c8_64 = arith.constant 8 : index
        %c0_65 = arith.constant 0 : index
        %94 = vector.load %arg15[%c8_64, %c0_65] : memref<16x128xf32, #tpu.memory_space<vmem>>, vector<8x128xf32>
        tpu.vector_store %arg15[%c8_64, %c0_65], %93 {strides = array<i32>} : memref<16x128xf32, #tpu.memory_space<vmem>>, vector<8x128xf32>,
        %95 = vector.extract_strided_slice %70 {offsets = [8, 0], sizes = [8, 128], strides = [1, 1]} : vector<16x128xf32> to vector<8x128xf32>
        %c8_66 = arith.constant 8 : index
        %c0_67 = arith.constant 0 : index
        %96 = vector.load %arg16[%c8_66, %c0_67] : memref<16x128xf32, #tpu.memory_space<vmem>>, vector<8x128xf32>
        tpu.vector_store %arg16[%c8_66, %c0_67], %95 {strides = array<i32>} : memref<16x128xf32, #tpu.memory_space<vmem>>, vector<8x128xf32>,
      } else {
      }
    }
    %c8_i32_33 = arith.constant 8 : i32
    return
  }
  func.func @transform_0(%arg0: i32) -> (i32, i32, i32) {
    %c0_i32 = arith.constant 0 : i32
    %c0_i32_0 = arith.constant 0 : i32
    %c0_i32_1 = arith.constant 0 : i32
    return %arg0, %c0_i32, %c0_i32_0 : i32, i32, i32
  }
  func.func @transform_1(%arg0: i32) -> (i32, i32, i32) {
    %c0_i32 = arith.constant 0 : i32
    %c0_i32_0 = arith.constant 0 : i32
    %c0_i32_1 = arith.constant 0 : i32
    return %arg0, %c0_i32, %c0_i32_0 : i32, i32, i32
  }
  func.func @transform_2(%arg0: i32) -> (i32, i32, i32) {
    %c0_i32 = arith.constant 0 : i32
    %0 = arith.subi %c0_i32, %arg0 : i32
    %c0_i32_0 = arith.constant 0 : i32
    %c0_i32_1 = arith.constant 0 : i32
    %c0_i32_2 = arith.constant 0 : i32
    return %0, %c0_i32_0, %c0_i32_1 : i32, i32, i32
  }
  func.func @transform_3(%arg0: i32) -> (i32, i32, i32) {
    %c0_i32 = arith.constant 0 : i32
    %0 = arith.subi %c0_i32, %arg0 : i32
    %c0_i32_0 = arith.constant 0 : i32
    %c0_i32_1 = arith.constant 0 : i32
    %c0_i32_2 = arith.constant 0 : i32
    return %0, %c0_i32_0, %c0_i32_1 : i32, i32, i32
  }
  func.func @transform_4(%arg0: i32) -> (i32, i32) {
    %c0_i32 = arith.constant 0 : i32
    %c0_i32_0 = arith.constant 0 : i32
    %c0_i32_1 = arith.constant 0 : i32
    return %c0_i32, %c0_i32_0 : i32, i32
  }
  func.func @transform_5(%arg0: i32) -> (i32, i32) {
    %c0_i32 = arith.constant 0 : i32
    %c0_i32_0 = arith.constant 0 : i32
    %c0_i32_1 = arith.constant 0 : i32
    return %c0_i32, %c0_i32_0 : i32, i32
  }
  func.func @transform_6(%arg0: i32) -> (i32, i32) {
    %c0_i32 = arith.constant 0 : i32
    %c0_i32_0 = arith.constant 0 : i32
    %c0_i32_1 = arith.constant 0 : i32
    return %c0_i32, %c0_i32_0 : i32, i32
  }
  func.func @transform_7(%arg0: i32) -> (i32, i32) {
    %c0_i32 = arith.constant 0 : i32
    %c0_i32_0 = arith.constant 0 : i32
    %c0_i32_1 = arith.constant 0 : i32
    return %c0_i32, %c0_i32_0 : i32, i32
  }
  func.func @transform_8(%arg0: i32) -> (i32, i32) {
    %c0_i32 = arith.constant 0 : i32
    %c0_i32_0 = arith.constant 0 : i32
    %c0_i32_1 = arith.constant 0 : i32
    return %c0_i32, %c0_i32_0 : i32, i32
  }
  func.func @transform_9(%arg0: i32) -> (i32, i32) {
    %c0_i32 = arith.constant 0 : i32
    %c0_i32_0 = arith.constant 0 : i32
    %c0_i32_1 = arith.constant 0 : i32
    return %c0_i32, %c0_i32_0 : i32, i32
  }
  func.func @transform_10(%arg0: i32) -> (i32, i32, i32) {
    %c0_i32 = arith.constant 0 : i32
    %c0_i32_0 = arith.constant 0 : i32
    %c0_i32_1 = arith.constant 0 : i32
    return %arg0, %c0_i32, %c0_i32_0 : i32, i32, i32
  }
  func.func @transform_11(%arg0: i32) -> (i32, i32, i32) {
    %c0_i32 = arith.constant 0 : i32
    %0 = arith.subi %c0_i32, %arg0 : i32
    %c0_i32_0 = arith.constant 0 : i32
    %c0_i32_1 = arith.constant 0 : i32
    %c0_i32_2 = arith.constant 0 : i32
    return %0, %c0_i32_0, %c0_i32_1 : i32, i32, i32
  }
}

</mosaic_0001>

<llo_original>
// kernel: seq_tagger_forward.5
$region0: #{seq_tagger_forward.5}
  #allocation0 [shape = 'u32[]', space=smem, size = 0x4, offset = 0x4, fixed_abs, tag = 'smem constant byte address 0x4 - core index']
  #allocation1 [shape = 'u32[144,128]{1,0:T(1,128)}', space=vmem, size = 0x12000, scoped, tag = 'internal scratch']
  %s0 = inlined_call_operand.vmem [shape: bf16[64,128], index: 0, kind: input, shape index: {}]
  %s1 = inlined_call_operand.vmem [shape: bf16[64,128], index: 1, kind: input, shape index: {}]
  %s2 = inlined_call_operand.vmem [shape: bf16[256,128], index: 2, kind: input, shape index: {}]
  %s3 = inlined_call_operand.vmem [shape: f32[1,128], index: 3, kind: input, shape index: {}]
  %s4 = inlined_call_operand.vmem [shape: f32[64,128], index: 4, kind: output, shape index: {}]
  %s5 = sld [smem:[#allocation0]]
  $region26: #{seq_tagger_forward.5} parent=0
    _
  %s7 = ssub.s32 1, %s5
  %s8 = scalar_select 0, %s7, %s5
  // Predicated region
  $region2: #{seq_tagger_forward.5} parent=0 // pred_check
    _
  $region3: #{seq_tagger_forward.5} parent=0 // pred_check_branch
    %10 = sbr.rel (0) target = $region5
  $region4: #{seq_tagger_forward.5} parent=0 // pred_region
    _
  $region5: #{seq_tagger_forward.5} parent=0 // pred_fallthru
    _
  // Predicated region
  $region6: #{seq_tagger_forward.5} parent=0 // pred_check
    _
  $region7: #{seq_tagger_forward.5} parent=0 // pred_check_branch
    %12 = sbr.rel (0) target = $region9
  $region8: #{seq_tagger_forward.5} parent=0 // pred_region
    _
  $region9: #{seq_tagger_forward.5} parent=0 // pred_fallthru
    _
  // Predicated region
  $region10: #{seq_tagger_forward.5} parent=0 // pred_check
    _
  $region11: #{seq_tagger_forward.5} parent=0 // pred_check_branch
    %14 = sbr.rel (0) target = $region13
  $region12: #{seq_tagger_forward.5} parent=0 // pred_region
    _
  $region13: #{seq_tagger_forward.5} parent=0 // pred_fallthru
    _
  // Predicated region
  $region14: #{seq_tagger_forward.5} parent=0 // pred_check
    _
  $region15: #{seq_tagger_forward.5} parent=0 // pred_check_branch
    %16 = sbr.rel (0) target = $region17
  $region16: #{seq_tagger_forward.5} parent=0 // pred_region
    _
  $region17: #{seq_tagger_forward.5} parent=0 // pred_fallthru
    _
  %v18 = vld [vmem:[%s0] sm:$0xf]
  %v19 = vld [vmem:[%s0 + $0x4] sm:$0xf]
  %v20 = vld [vmem:[%s0 + $0x8] sm:$0xf]
  %v21 = vld [vmem:[%s0 + $0xc] sm:$0xf]
  %v22 = vld [vmem:[%s0 + $0x10] sm:$0xf]
  %v23 = vld [vmem:[%s0 + $0x14] sm:$0xf]
  %v24 = vld [vmem:[%s0 + $0x18] sm:$0xf]
  %v25 = vld [vmem:[%s0 + $0x1c] sm:$0xf]
  %v26 = vld [vmem:[%s2] sm:$0xf]
  %v27 = vld [vmem:[%s2 + $0x4] sm:$0xf]
  %v28 = vld [vmem:[%s2 + $0x8] sm:$0xf]
  %v29 = vld [vmem:[%s2 + $0xc] sm:$0xf]
  %v30 = vld [vmem:[%s2 + $0x10] sm:$0xf]
  %v31 = vld [vmem:[%s2 + $0x14] sm:$0xf]
  %v32 = vld [vmem:[%s2 + $0x18] sm:$0xf]
  %v33 = vld [vmem:[%s2 + $0x1c] sm:$0xf]
  %v34 = vld [vmem:[%s2 + $0x20] sm:$0xf]
  %v35 = vld [vmem:[%s2 + $0x24] sm:$0xf]
  %v36 = vld [vmem:[%s2 + $0x28] sm:$0xf]
  %v37 = vld [vmem:[%s2 + $0x2c] sm:$0xf]
  %v38 = vld [vmem:[%s2 + $0x30] sm:$0xf]
  %v39 = vld [vmem:[%s2 + $0x34] sm:$0xf]
  %v40 = vld [vmem:[%s2 + $0x38] sm:$0xf]
  %v41 = vld [vmem:[%s2 + $0x3c] sm:$0xf]
  %v42 = vld [vmem:[%s1] sm:$0xf]
  %v43 = vld [vmem:[%s1 + $0x4] sm:$0xf]
  %v44 = vld [vmem:[%s1 + $0x8] sm:$0xf]
  %v45 = vld [vmem:[%s1 + $0xc] sm:$0xf]
  %v46 = vld [vmem:[%s1 + $0x10] sm:$0xf]
  %v47 = vld [vmem:[%s1 + $0x14] sm:$0xf]
  %v48 = vld [vmem:[%s1 + $0x18] sm:$0xf]
  %v49 = vld [vmem:[%s1 + $0x1c] sm:$0xf]
  %v50 = vld [vmem:[%s2 + $0x40] sm:$0xf]
  %v51 = vld [vmem:[%s2 + $0x44] sm:$0xf]
  %v52 = vld [vmem:[%s2 + $0x48] sm:$0xf]
  %v53 = vld [vmem:[%s2 + $0x4c] sm:$0xf]
  %v54 = vld [vmem:[%s2 + $0x50] sm:$0xf]
  %v55 = vld [vmem:[%s2 + $0x54] sm:$0xf]
  %v56 = vld [vmem:[%s2 + $0x58] sm:$0xf]
  %v57 = vld [vmem:[%s2 + $0x5c] sm:$0xf]
  %v58 = vld [vmem:[%s2 + $0x60] sm:$0xf]
  %v59 = vld [vmem:[%s2 + $0x64] sm:$0xf]
  %v60 = vld [vmem:[%s2 + $0x68] sm:$0xf]
  %v61 = vld [vmem:[%s2 + $0x6c] sm:$0xf]
  %v62 = vld [vmem:[%s2 + $0x70] sm:$0xf]
  %v63 = vld [vmem:[%s2 + $0x74] sm:$0xf]
  %v64 = vld [vmem:[%s2 + $0x78] sm:$0xf]
  %v65 = vld [vmem:[%s2 + $0x7c] sm:$0xf]
  %v74 = vunpack.c.l.b16 %v42
  %v75 = vunpack.c.l.b16 %v43
  %v76 = vunpack.c.l.b16 %v44
  %v77 = vunpack.c.l.b16 %v45
  %v78 = vunpack.c.l.b16 %v46
  %v79 = vunpack.c.l.b16 %v47
  %v80 = vunpack.c.l.b16 %v48
  %v81 = vunpack.c.l.b16 %v49
  %v82 = vpack.c.b16 %v75, %v74
  %v83 = vpack.c.b16 %v77, %v76
  %v84 = vpack.c.b16 %v79, %v78
  %v85 = vpack.c.b16 %v81, %v80
  %v106 = vunpack.c.l.b16 %v50
  %v107 = vunpack.c.l.b16 %v51
  %v108 = vunpack.c.l.b16 %v52
  %v109 = vunpack.c.l.b16 %v53
  %v110 = vunpack.c.l.b16 %v54
  %v111 = vunpack.c.l.b16 %v55
  %v112 = vunpack.c.l.b16 %v56
  %v113 = vunpack.c.l.b16 %v57
  %v114 = vunpack.c.l.b16 %v58
  %v115 = vunpack.c.l.b16 %v59
  %v116 = vunpack.c.l.b16 %v60
  %v117 = vunpack.c.l.b16 %v61
  %v118 = vunpack.c.l.b16 %v62
  %v119 = vunpack.c.l.b16 %v63
  %v120 = vunpack.c.l.b16 %v64
  %v121 = vunpack.c.l.b16 %v65
  %v122 = vpack.c.b16 %v107, %v106
  %v123 = vpack.c.b16 %v109, %v108
  %v124 = vpack.c.b16 %v111, %v110
  %v125 = vpack.c.b16 %v113, %v112
  %v126 = vpack.c.b16 %v115, %v114
  %v127 = vpack.c.b16 %v117, %v116
  %v128 = vpack.c.b16 %v119, %v118
  %v129 = vpack.c.b16 %v121, %v120
  %138 = vmatprep.subr.bf16.mxu0 0
  %139 = vmatpush1.bf16.msra.mxu0 %v122
  %140 = vmatprep.subr.bf16.mxu0 0
  %141 = vmatpush1.bf16.msra.mxu0 %v123
  %142 = vmatprep.subr.bf16.mxu0 0
  %143 = vmatpush1.bf16.msra.mxu0 %v124
  %144 = vmatprep.subr.bf16.mxu0 0
  %145 = vmatpush1.bf16.msra.mxu0 %v125
  %146 = vmatprep.subr.bf16.mxu0 0
  %147 = vmatpush1.bf16.msra.mxu0 %v126
  %148 = vmatprep.subr.bf16.mxu0 0
  %149 = vmatpush1.bf16.msra.mxu0 %v127
  %150 = vmatprep.subr.bf16.mxu0 0
  %151 = vmatpush1.bf16.msra.mxu0 %v128
  %152 = vmatprep.subr.bf16.mxu0 0
  %153 = vmatpush1.bf16.msra.mxu0 %v129
  %154 = vmatprep.subr.bf16.mxu0 0
  %155 = vmatpush1.bf16.msra.mxu0 0
  %156 = vmatprep.subr.bf16.mxu0 0
  %157 = vmatpush1.bf16.msra.mxu0 0
  %158 = vmatprep.subr.bf16.mxu0 0
  %159 = vmatpush1.bf16.msra.mxu0 0
  %160 = vmatprep.subr.bf16.mxu0 0
  %161 = vmatpush1.bf16.msra.mxu0 0
  %162 = vmatprep.subr.bf16.mxu0 0
  %163 = vmatpush1.bf16.msra.mxu0 0
  %164 = vmatprep.subr.bf16.mxu0 0
  %165 = vmatpush1.bf16.msra.mxu0 0
  %166 = vmatprep.subr.bf16.mxu0 0
  %167 = vmatpush1.bf16.msra.mxu0 0
  %168 = vmatprep.subr.bf16.mxu0 0
  %169 = vmatpush1.bf16.msra.mxu0 0
  %170 = vmatprep.mubr.bf16.mxu0 0
  %171 = vmatmul.mubr.bf16.gmra.mrb[0].mxu0 %v82
  %v172 = vpop.f32.mrb[0].mxu0
  %v173 = vadd.f32 0.0, %v172
  %v174 = vpop.f32.mrb[0].mxu0
  %v175 = vpop.f32.mrb[0].mxu0
  %v176 = vadd.f32 0.0, %v175
  %v177 = vpop.f32.mrb[0].mxu0
  %178 = vmatprep.mubr.bf16.mxu0 0
  %179 = vmatmul.mubr.bf16.gmra.mrb[0].mxu0 %v83
  %v180 = vpop.f32.mrb[0].mxu0
  %v181 = vadd.f32 0.0, %v180
  %v182 = vpop.f32.mrb[0].mxu0
  %v183 = vpop.f32.mrb[0].mxu0
  %v184 = vadd.f32 0.0, %v183
  %v185 = vpop.f32.mrb[0].mxu0
  %186 = vmatprep.mubr.bf16.mxu0 0
  %187 = vmatmul.mubr.bf16.gmra.mrb[0].mxu0 %v84
  %v188 = vpop.f32.mrb[0].mxu0
  %v189 = vadd.f32 0.0, %v188
  %v190 = vpop.f32.mrb[0].mxu0
  %v191 = vpop.f32.mrb[0].mxu0
  %v192 = vadd.f32 0.0, %v191
  %v193 = vpop.f32.mrb[0].mxu0
  %194 = vmatprep.mubr.bf16.mxu0 0
  %195 = vmatmul.mubr.bf16.gmra.mrb[0].mxu0 %v85
  %v196 = vpop.f32.mrb[0].mxu0
  %v197 = vadd.f32 0.0, %v196
  %v198 = vpop.f32.mrb[0].mxu0
  %v199 = vpop.f32.mrb[0].mxu0
  %v200 = vadd.f32 0.0, %v199
  %v201 = vpop.f32.mrb[0].mxu0
  %202 = vdwg.mxu0
  %v211 = vunpack.c.l.b16 %v18
  %v212 = vunpack.c.l.b16 %v19
  %v213 = vunpack.c.l.b16 %v20
  %v214 = vunpack.c.l.b16 %v21
  %v215 = vunpack.c.l.b16 %v22
  %v216 = vunpack.c.l.b16 %v23
  %v217 = vunpack.c.l.b16 %v24
  %v218 = vunpack.c.l.b16 %v25
  %v219 = vpack.c.b16 %v212, %v211
  %v220 = vpack.c.b16 %v214, %v213
  %v221 = vpack.c.b16 %v216, %v215
  %v222 = vpack.c.b16 %v218, %v217
  %v243 = vunpack.c.l.b16 %v26
  %v244 = vunpack.c.l.b16 %v27
  %v245 = vunpack.c.l.b16 %v28
  %v246 = vunpack.c.l.b16 %v29
  %v247 = vunpack.c.l.b16 %v30
  %v248 = vunpack.c.l.b16 %v31
  %v249 = vunpack.c.l.b16 %v32
  %v250 = vunpack.c.l.b16 %v33
  %v251 = vunpack.c.l.b16 %v34
  %v252 = vunpack.c.l.b16 %v35
  %v253 = vunpack.c.l.b16 %v36
  %v254 = vunpack.c.l.b16 %v37
  %v255 = vunpack.c.l.b16 %v38
  %v256 = vunpack.c.l.b16 %v39
  %v257 = vunpack.c.l.b16 %v40
  %v258 = vunpack.c.l.b16 %v41
  %v259 = vpack.c.b16 %v244, %v243
  %v260 = vpack.c.b16 %v246, %v245
  %v261 = vpack.c.b16 %v248, %v247
  %v262 = vpack.c.b16 %v250, %v249
  %v263 = vpack.c.b16 %v252, %v251
  %v264 = vpack.c.b16 %v254, %v253
  %v265 = vpack.c.b16 %v256, %v255
  %v266 = vpack.c.b16 %v258, %v257
  %275 = vmatprep.subr.bf16.mxu0 0
  %276 = vmatpush1.bf16.msra.mxu0 %v259
  %277 = vmatprep.subr.bf16.mxu0 0
  %278 = vmatpush1.bf16.msra.mxu0 %v260
  %279 = vmatprep.subr.bf16.mxu0 0
  %280 = vmatpush1.bf16.msra.mxu0 %v261
  %281 = vmatprep.subr.bf16.mxu0 0
  %282 = vmatpush1.bf16.msra.mxu0 %v262
  %283 = vmatprep.subr.bf16.mxu0 0
  %284 = vmatpush1.bf16.msra.mxu0 %v263
  %285 = vmatprep.subr.bf16.mxu0 0
  %286 = vmatpush1.bf16.msra.mxu0 %v264
  %287 = vmatprep.subr.bf16.mxu0 0
  %288 = vmatpush1.bf16.msra.mxu0 %v265
  %289 = vmatprep.subr.bf16.mxu0 0
  %290 = vmatpush1.bf16.msra.mxu0 %v266
  %291 = vmatprep.subr.bf16.mxu0 0
  %292 = vmatpush1.bf16.msra.mxu0 0
  %293 = vmatprep.subr.bf16.mxu0 0
  %294 = vmatpush1.bf16.msra.mxu0 0
  %295 = vmatprep.subr.bf16.mxu0 0
  %296 = vmatpush1.bf16.msra.mxu0 0
  %297 = vmatprep.subr.bf16.mxu0 0
  %298 = vmatpush1.bf16.msra.mxu0 0
  %299 = vmatprep.subr.bf16.mxu0 0
  %300 = vmatpush1.bf16.msra.mxu0 0
  %301 = vmatprep.subr.bf16.mxu0 0
  %302 = vmatpush1.bf16.msra.mxu0 0
  %303 = vmatprep.subr.bf16.mxu0 0
  %304 = vmatpush1.bf16.msra.mxu0 0
  %305 = vmatprep.subr.bf16.mxu0 0
  %306 = vmatpush1.bf16.msra.mxu0 0
  %307 = vmatprep.mubr.bf16.mxu0 0
  %308 = vmatmul.mubr.bf16.gmra.mrb[0].mxu0 %v219
  %v309 = vpop.f32.mrb[0].mxu0
  %v310 = vadd.f32 %v173, %v309
  %v311 = vpop.f32.mrb[0].mxu0
  %v312 = vpop.f32.mrb[0].mxu0
  %v313 = vadd.f32 %v176, %v312
  %v314 = vpop.f32.mrb[0].mxu0
  %315 = vmatprep.mubr.bf16.mxu0 0
  %316 = vmatmul.mubr.bf16.gmra.mrb[0].mxu0 %v220
  %v317 = vpop.f32.mrb[0].mxu0
  %v318 = vadd.f32 %v181, %v317
  %v319 = vpop.f32.mrb[0].mxu0
  %v320 = vpop.f32.mrb[0].mxu0
  %v321 = vadd.f32 %v184, %v320
  %v322 = vpop.f32.mrb[0].mxu0
  %323 = vmatprep.mubr.bf16.mxu0 0
  %324 = vmatmul.mubr.bf16.gmra.mrb[0].mxu0 %v221
  %v325 = vpop.f32.mrb[0].mxu0
  %v326 = vadd.f32 %v189, %v325
  %v327 = vpop.f32.mrb[0].mxu0
  %v328 = vpop.f32.mrb[0].mxu0
  %v329 = vadd.f32 %v192, %v328
  %v330 = vpop.f32.mrb[0].mxu0
  %331 = vmatprep.mubr.bf16.mxu0 0
  %332 = vmatmul.mubr.bf16.gmra.mrb[0].mxu0 %v222
  %v333 = vpop.f32.mrb[0].mxu0
  %v334 = vadd.f32 %v197, %v333
  %v335 = vpop.f32.mrb[0].mxu0
  %v336 = vpop.f32.mrb[0].mxu0
  %v337 = vadd.f32 %v200, %v336
  %v338 = vpop.f32.mrb[0].mxu0
  %339 = vdwg.mxu0
  %v340 = vld [vmem:[%s3] sm:$0x1]
  %v342 = vlaneseq
  %v343 = vshrl.u32 %v342, 7
  %v344 = vsub.s32 0, %v343
  %v345 = vrot.slane %v340, %v344
  %v347 = vadd.f32 %v310, %v345
  %v348 = vadd.f32 %v313, %v345
  %v349 = vadd.f32 %v318, %v345
  %v350 = vadd.f32 %v321, %v345
  %v351 = vadd.f32 %v326, %v345
  %v352 = vadd.f32 %v329, %v345
  %v353 = vadd.f32 %v334, %v345
  %v354 = vadd.f32 %v337, %v345
  %355 = vst [vmem:[%s4] sm:$0xff] %v347
  %356 = vst [vmem:[%s4 + $0x8] sm:$0xff] %v348
  %357 = vst [vmem:[%s4 + $0x10] sm:$0xff] %v349
  %358 = vst [vmem:[%s4 + $0x18] sm:$0xff] %v350
  %359 = vst [vmem:[%s4 + $0x20] sm:$0xff] %v351
  %360 = vst [vmem:[%s4 + $0x28] sm:$0xff] %v352
  %361 = vst [vmem:[%s4 + $0x30] sm:$0xff] %v353
  %362 = vst [vmem:[%s4 + $0x38] sm:$0xff] %v354
  // Predicated region
  $region18: #{seq_tagger_forward.5} parent=0 // pred_check
    _
  $region19: #{seq_tagger_forward.5} parent=0 // pred_check_branch
    %364 = sbr.rel (0) target = $region21
  $region20: #{seq_tagger_forward.5} parent=0 // pred_region
    _
  $region21: #{seq_tagger_forward.5} parent=0 // pred_fallthru
    _
  // Predicated region
  $region22: #{seq_tagger_forward.5} parent=0 // pred_check
    _
  $region23: #{seq_tagger_forward.5} parent=0 // pred_check_branch
    %366 = sbr.rel (0) target = $region25
  $region24: #{seq_tagger_forward.5} parent=0 // pred_region
    _
  $region25: #{seq_tagger_forward.5} parent=0 // pred_fallthru
    _

// kernel: seq_tagger_forward.3
$region0: #{seq_tagger_forward.3}
  #allocation0 [shape = 'u32[]', space=smem, size = 0x4, offset = 0x4, fixed_abs, tag = 'smem constant byte address 0x4 - core index']
  #allocation1 [shape = 'u32[144,128]{1,0:T(1,128)}', space=vmem, size = 0x12000, scoped, tag = 'internal scratch']
  #allocation2 [shape = 'f32[8,8,512]{2,1,0:T(8,128)}', space=vmem, size = 0x20000, scoped, tag = 'scratch operand']
  #allocation3 [shape = 'f32[8,8,512]{2,1,0:T(8,128)}', space=vmem, size = 0x20000, scoped, tag = 'scratch operand']
  #allocation4 [shape = 'f32[16,128]{1,0:T(8,128)}', space=vmem, size = 0x2000, scoped, tag = 'scratch operand']
  #allocation5 [shape = 'f32[16,128]{1,0:T(8,128)}', space=vmem, size = 0x2000, scoped, tag = 'scratch operand']
  %s0 = inlined_call_operand.vmem [shape: bf16[8,8,128], index: 0, kind: input, shape index: {}, may-alias: {0,1}]
  %s1 = inlined_call_operand.vmem [shape: bf16[8,8,128], index: 1, kind: input, shape index: {}, may-alias: {0,1}]
  %s2 = inlined_call_operand.vmem [shape: bf16[128,512], index: 2, kind: input, shape index: {}]
  %s3 = inlined_call_operand.hbm [shape: bf16[128,512], index: 3, kind: input, shape index: {}]
  %s4 = inlined_call_operand.hbm [shape: bf16[128,512], index: 4, kind: input, shape index: {}]
  %s5 = inlined_call_operand.hbm [shape: bf16[128,512], index: 5, kind: input, shape index: {}]
  %s6 = inlined_call_operand.vmem [shape: f32[1,512], index: 6, kind: input, shape index: {}]
  %s7 = inlined_call_operand.vmem [shape: f32[1,512], index: 7, kind: input, shape index: {}]
  %s8 = inlined_call_operand.vmem [shape: bf16[8,8,128], index: 8, kind: output, shape index: {0}]
  %s9 = inlined_call_operand.vmem [shape: bf16[8,8,128], index: 9, kind: output, shape index: {1}]
  %10 = xla_tuple %s8, %s9
  %s11 = sld [smem:[#allocation0]]
  $region77: #{seq_tagger_forward.3} parent=0
    _
  %s13 = ssub.s32 1, %s11
  %s14 = scalar_select 0, %s13, %s11
  $region1: #{seq_tagger_forward.3} parent=0
    #allocation6 [shape = 'u8[131072]{0}', space=vmem, size = 0x20000, scoped, tag = 'input window, operand 3, single buffered']
    #allocation7 [shape = 's32[1]{0}', space=sflag, size = 0x4, scoped, tag = 'scoped memory for seq_tagger_forward.3']
    #allocation8 [shape = 'u8[131072]{0}', space=vmem, size = 0x20000, scoped, tag = 'input window, operand 4, single buffered']
    #allocation9 [shape = 's32[1]{0}', space=sflag, size = 0x4, scoped, tag = 'scoped memory for seq_tagger_forward.3']
    #allocation10 [shape = 'u8[131072]{0}', space=vmem, size = 0x20000, scoped, tag = 'input window, operand 5, single buffered']
    %15 = vsyncpa [#allocation7], 0
    %16 = vsyncpa [#allocation9], 0
    // Predicated region
    $region2: #{seq_tagger_forward.3} parent=1 // pred_check
      _
    $region3: #{seq_tagger_forward.3} parent=1 // pred_check_branch
      %18 = sbr.rel (0) target = $region5
    $region4: #{seq_tagger_forward.3} parent=1 // pred_region
      _
    $region5: #{seq_tagger_forward.3} parent=1 // pred_fallthru
      _
    // Predicated region
    $region6: #{seq_tagger_forward.3} parent=1 // pred_check
      _
    $region7: #{seq_tagger_forward.3} parent=1 // pred_check_branch
      %20 = sbr.rel (0) target = $region9
    $region8: #{seq_tagger_forward.3} parent=1 // pred_region
      %s21 = ssub.s32 0, 0
      %s22 = smul.u32 8, %s21
      %p23 = scmp.lt.s32.totalorder %s22, 7
      %s24 = scalar_select %p23, %s22, 7
      %s25 = smul.addr %s24, 4
      %s26 = scalar_lea.vmem %s1, %s25
      %s27 = ssub.s32 0, 0
      %s28 = smul.u32 8, %s27
    $region9: #{seq_tagger_forward.3} parent=1 // pred_fallthru
      _
    // Predicated region
    $region10: #{seq_tagger_forward.3} parent=1 // pred_check
      _
    $region11: #{seq_tagger_forward.3} parent=1 // pred_check_branch
      %30 = sbr.rel (0) target = $region13
    $region12: #{seq_tagger_forward.3} parent=1 // pred_region
      _
    $region13: #{seq_tagger_forward.3} parent=1 // pred_fallthru
      _
    // Predicated region
    $region14: #{seq_tagger_forward.3} parent=1 // pred_check
      _
    $region15: #{seq_tagger_forward.3} parent=1 // pred_check_branch
      %32 = sbr.rel (0) target = $region17
    $region16: #{seq_tagger_forward.3} parent=1 // pred_region
      %s34 = ssub.s32 4096, 4096
      %35 = vsyncadd [#allocation7], %s34
      %s36 = sshll.u32 [#allocation6], 4
      %s37 = int_to_ptr.vmem [resolvable:$true] %s36
      %42 = dma.hbm_to_vmem [thread:$0]  %s3, 4096, %s37, [#allocation7], 256, 256, 16
    $region17: #{seq_tagger_forward.3} parent=1 // pred_fallthru
      _
    // Predicated region
    $region18: #{seq_tagger_forward.3} parent=1 // pred_check
      _
    $region19: #{seq_tagger_forward.3} parent=1 // pred_check_branch
      %44 = sbr.rel (0) target = $region21
    $region20: #{seq_tagger_forward.3} parent=1 // pred_region
      %s46 = ssub.s32 4096, 4096
      %47 = vsyncadd [#allocation9], %s46
      %s48 = sshll.u32 [#allocation8], 4
      %s49 = int_to_ptr.vmem [resolvable:$true] %s48
      %54 = dma.hbm_to_vmem [thread:$0]  %s4, 4096, %s49, [#allocation9], 256, 256, 16
    $region21: #{seq_tagger_forward.3} parent=1 // pred_fallthru
      _
    // Predicated region
    $region22: #{seq_tagger_forward.3} parent=1 // pred_check
      _
    $region23: #{seq_tagger_forward.3} parent=1 // pred_check_branch
      %56 = sbr.rel (0) target = $region25
    $region24: #{seq_tagger_forward.3} parent=1 // pred_region
      %s58 = ssub.s32 4096, 4096
      %59 = vsyncadd [#allocation9], %s58
      %s60 = sshll.u32 [#allocation10], 4
      %s61 = int_to_ptr.vmem [resolvable:$true] %s60
      %66 = dma.hbm_to_vmem [thread:$0]  %s5, 4096, %s61, [#allocation9], 256, 256, 16
    $region25: #{seq_tagger_forward.3} parent=1 // pred_fallthru
      _
    // Predicated region
    $region26: #{seq_tagger_forward.3} parent=1 // pred_check
      _
    $region27: #{seq_tagger_forward.3} parent=1 // pred_check_branch
      %68 = sbr.rel (0) target = $region29
    $region28: #{seq_tagger_forward.3} parent=1 // pred_region
      _
    $region29: #{seq_tagger_forward.3} parent=1 // pred_fallthru
      _
    // Predicated region
    $region30: #{seq_tagger_forward.3} parent=1 // pred_check
      _
    $region31: #{seq_tagger_forward.3} parent=1 // pred_check_branch
      %70 = sbr.rel (0) target = $region33
    $region32: #{seq_tagger_forward.3} parent=1 // pred_region
      _
    $region33: #{seq_tagger_forward.3} parent=1 // pred_fallthru
      _
    // Predicated region
    $region34: #{seq_tagger_forward.3} parent=1 // pred_check
      _
    $region35: #{seq_tagger_forward.3} parent=1 // pred_check_branch
      %72 = sbr.rel (0) target = $region37
    $region36: #{seq_tagger_forward.3} parent=1 // pred_region
      %73 = dma.done [#allocation7], 4096
    $region37: #{seq_tagger_forward.3} parent=1 // pred_fallthru
      _
    // Predicated region
    $region38: #{seq_tagger_forward.3} parent=1 // pred_check
      _
    $region39: #{seq_tagger_forward.3} parent=1 // pred_check_branch
      %75 = sbr.rel (0) target = $region41
    $region40: #{seq_tagger_forward.3} parent=1 // pred_region
      %76 = dma.done [#allocation9], 4096
    $region41: #{seq_tagger_forward.3} parent=1 // pred_fallthru
      _
    // Predicated region
    $region42: #{seq_tagger_forward.3} parent=1 // pred_check
      _
    $region43: #{seq_tagger_forward.3} parent=1 // pred_check_branch
      %78 = sbr.rel (0) target = $region45
    $region44: #{seq_tagger_forward.3} parent=1 // pred_region
      %79 = dma.done [#allocation9], 4096
    $region45: #{seq_tagger_forward.3} parent=1 // pred_fallthru
      _
    %s80 = ssub.s32 0, 0
    %s81 = smul.u32 8, %s80
    %p82 = scmp.lt.s32.totalorder %s81, 7
    %s83 = scalar_select %p82, %s81, 7
    %s84 = smul.addr %s83, 4
    %s85 = scalar_lea.vmem %s1, %s84
    %s86 = ssub.s32 0, 0
    %s87 = smul.u32 8, %s86
    %p88 = scmp.lt.s32.totalorder %s87, 7
    %s89 = scalar_select %p88, %s87, 7
    %s90 = smul.addr %s89, 4
    %s91 = scalar_lea.vmem %s9, %s90
    %s92 = ssub.s32 0, 0
    %s93 = smul.u32 8, %s92
    %p94 = scmp.lt.s32.totalorder %s93, 7
    %s95 = scalar_select %p94, %s93, 7
    %s96 = smul.addr %s95, 4
    %s97 = scalar_lea.vmem %s1, %s96
    %s98 = ssub.s32 0, 0
    %s99 = smul.u32 8, %s98
    %s100 = ssub.s32 0, 0
    %s101 = smul.u32 8, %s100
    %p102 = scmp.lt.s32.totalorder %s101, 7
    %s103 = scalar_select %p102, %s101, 7
    %s104 = smul.addr %s103, 4
    %s105 = scalar_lea.vmem %s9, %s104
    %s106 = ssub.s32 0, 0
    %s107 = smul.u32 8, %s106
    %p109 = scmp.eq.s32.totalorder 0, 0
    // Predicated region
    $region46: #{seq_tagger_forward.3} parent=1 // pred_check
      %p110 = pneg %p109
    $region47: #{seq_tagger_forward.3} parent=1 // pred_check_branch
      %112 = sbr.rel (%p110) target = $region49
    $region48: #{seq_tagger_forward.3} parent=1 // pred_region
      %113 = vst [vmem:[#allocation4] sm:$0xff] 0.0
      %114 = vst [vmem:[#allocation4 + $0x8] sm:$0xff] 0.0
      %115 = vst [vmem:[#allocation5] sm:$0xff] 0.0
      %116 = vst [vmem:[#allocation5 + $0x8] sm:$0xff] 0.0
    $region49: #{seq_tagger_forward.3} parent=1 // pred_fallthru
      _
    %v117 = vld [vmem:[%s0] sm:$0xf]
    %v118 = vld [vmem:[%s0 + $0x4] sm:$0xf]
    %v119 = vld [vmem:[%s0 + $0x8] sm:$0xf]
    %v120 = vld [vmem:[%s0 + $0xc] sm:$0xf]
    %v121 = vld [vmem:[%s0 + $0x10] sm:$0xf]
    %v122 = vld [vmem:[%s0 + $0x14] sm:$0xf]
    %v123 = vld [vmem:[%s0 + $0x18] sm:$0xf]
    %v124 = vld [vmem:[%s0 + $0x1c] sm:$0xf]
    %v125 = vld [vmem:[%s2] sm:$0xff]
    %v126 = vld [vmem:[%s2 + $0x8] sm:$0xff]
    %v127 = vld [vmem:[%s2 + $0x10] sm:$0xff]
    %v128 = vld [vmem:[%s2 + $0x18] sm:$0xff]
    %v129 = vld [vmem:[%s2 + $0x20] sm:$0xff]
    %v130 = vld [vmem:[%s2 + $0x28] sm:$0xff]
    %v131 = vld [vmem:[%s2 + $0x30] sm:$0xff]
    %v132 = vld [vmem:[%s2 + $0x38] sm:$0xff]
    %v133 = vld [vmem:[%s2 + $0x40] sm:$0xff]
    %v134 = vld [vmem:[%s2 + $0x48] sm:$0xff]
    %v135 = vld [vmem:[%s2 + $0x50] sm:$0xff]
    %v136 = vld [vmem:[%s2 + $0x58] sm:$0xff]
    %v137 = vld [vmem:[%s2 + $0x60] sm:$0xff]
    %v138 = vld [vmem:[%s2 + $0x68] sm:$0xff]
    %v139 = vld [vmem:[%s2 + $0x70] sm:$0xff]
    %v140 = vld [vmem:[%s2 + $0x78] sm:$0xff]
    %v141 = vld [vmem:[%s2 + $0x80] sm:$0xff]
    %v142 = vld [vmem:[%s2 + $0x88] sm:$0xff]
    %v143 = vld [vmem:[%s2 + $0x90] sm:$0xff]
    %v144 = vld [vmem:[%s2 + $0x98] sm:$0xff]
    %v145 = vld [vmem:[%s2 + $0xa0] sm:$0xff]
    %v146 = vld [vmem:[%s2 + $0xa8] sm:$0xff]
    %v147 = vld [vmem:[%s2 + $0xb0] sm:$0xff]
    %v148 = vld [vmem:[%s2 + $0xb8] sm:$0xff]
    %v149 = vld [vmem:[%s2 + $0xc0] sm:$0xff]
    %v150 = vld [vmem:[%s2 + $0xc8] sm:$0xff]
    %v151 = vld [vmem:[%s2 + $0xd0] sm:$0xff]
    %v152 = vld [vmem:[%s2 + $0xd8] sm:$0xff]
    %v153 = vld [vmem:[%s2 + $0xe0] sm:$0xff]
    %v154 = vld [vmem:[%s2 + $0xe8] sm:$0xff]
    %v155 = vld [vmem:[%s2 + $0xf0] sm:$0xff]
    %v156 = vld [vmem:[%s2 + $0xf8] sm:$0xff]
    %v157 = vld [vmem:[%s6] sm:$0xf]
    %v159 = vlaneseq
    %v160 = vshrl.u32 %v159, 7
    %v161 = vsub.s32 0, %v160
    %v162 = vrot.slane %v157, %v161
    %v163 = vlaneseq
    %v164 = vshrl.u32 %v163, 7
    %v165 = vsub.s32 1, %v164
    %v166 = vrot.slane %v157, %v165
    %v167 = vlaneseq
    %v168 = vshrl.u32 %v167, 7
    %v169 = vsub.s32 2, %v168
    %v170 = vrot.slane %v157, %v169
    %v171 = vlaneseq
    %v172 = vshrl.u32 %v171, 7
    %v173 = vsub.s32 3, %v172
    %v174 = vrot.slane %v157, %v173
    %v187 = vunpack.c.l.b16 %v117
    %v188 = vunpack.c.l.b16 %v118
    %v189 = vunpack.c.l.b16 %v119
    %v190 = vunpack.c.l.b16 %v120
    %v191 = vunpack.c.l.b16 %v121
    %v192 = vunpack.c.l.b16 %v122
    %v193 = vunpack.c.l.b16 %v123
    %v194 = vunpack.c.l.b16 %v124
    %v195 = vpack.c.b16 %v188, %v187
    %v196 = vpack.c.b16 %v190, %v189
    %v197 = vpack.c.b16 %v192, %v191
    %v198 = vpack.c.b16 %v194, %v193
    %v235 = vunpack.c.l.b16 %v125
    %v236 = vunpack.c.h.b16 %v125
    %v237 = vunpack.c.l.b16 %v126
    %v238 = vunpack.c.h.b16 %v126
    %v239 = vunpack.c.l.b16 %v127
    %v240 = vunpack.c.h.b16 %v127
    %v241 = vunpack.c.l.b16 %v128
    %v242 = vunpack.c.h.b16 %v128
    %v243 = vunpack.c.l.b16 %v129
    %v244 = vunpack.c.h.b16 %v129
    %v245 = vunpack.c.l.b16 %v130
    %v246 = vunpack.c.h.b16 %v130
    %v247 = vunpack.c.l.b16 %v131
    %v248 = vunpack.c.h.b16 %v131
    %v249 = vunpack.c.l.b16 %v132
    %v250 = vunpack.c.h.b16 %v132
    %v251 = vunpack.c.l.b16 %v133
    %v252 = vunpack.c.h.b16 %v133
    %v253 = vunpack.c.l.b16 %v134
    %v254 = vunpack.c.h.b16 %v134
    %v255 = vunpack.c.l.b16 %v135
    %v256 = vunpack.c.h.b16 %v135
    %v257 = vunpack.c.l.b16 %v136
    %v258 = vunpack.c.h.b16 %v136
    %v259 = vunpack.c.l.b16 %v137
    %v260 = vunpack.c.h.b16 %v137
    %v261 = vunpack.c.l.b16 %v138
    %v262 = vunpack.c.h.b16 %v138
    %v263 = vunpack.c.l.b16 %v139
    %v264 = vunpack.c.h.b16 %v139
    %v265 = vunpack.c.l.b16 %v140
    %v266 = vunpack.c.h.b16 %v140
    %v267 = vunpack.c.l.b16 %v141
    %v268 = vunpack.c.h.b16 %v141
    %v269 = vunpack.c.l.b16 %v142
    %v270 = vunpack.c.h.b16 %v142
    %v271 = vunpack.c.l.b16 %v143
    %v272 = vunpack.c.h.b16 %v143
    %v273 = vunpack.c.l.b16 %v144
    %v274 = vunpack.c.h.b16 %v144
    %v275 = vunpack.c.l.b16 %v145
    %v276 = vunpack.c.h.b16 %v145
    %v277 = vunpack.c.l.b16 %v146
    %v278 = vunpack.c.h.b16 %v146
    %v279 = vunpack.c.l.b16 %v147
    %v280 = vunpack.c.h.b16 %v147
    %v281 = vunpack.c.l.b16 %v148
    %v282 = vunpack.c.h.b16 %v148
    %v283 = vunpack.c.l.b16 %v149
    %v284 = vunpack.c.h.b16 %v149
    %v285 = vunpack.c.l.b16 %v150
    %v286 = vunpack.c.h.b16 %v150
    %v287 = vunpack.c.l.b16 %v151
    %v288 = vunpack.c.h.b16 %v151
    %v289 = vunpack.c.l.b16 %v152
    %v290 = vunpack.c.h.b16 %v152
    %v291 = vunpack.c.l.b16 %v153
    %v292 = vunpack.c.h.b16 %v153
    %v293 = vunpack.c.l.b16 %v154
    %v294 = vunpack.c.h.b16 %v154
    %v295 = vunpack.c.l.b16 %v155
    %v296 = vunpack.c.h.b16 %v155
    %v297 = vunpack.c.l.b16 %v156
    %v298 = vunpack.c.h.b16 %v156
    %v299 = vpack.c.b16 %v239, %v235
    %v300 = vpack.c.b16 %v240, %v236
    %v301 = vpack.c.b16 %v241, %v237
    %v302 = vpack.c.b16 %v242, %v238
    %v303 = vpack.c.b16 %v247, %v243
    %v304 = vpack.c.b16 %v248, %v244
    %v305 = vpack.c.b16 %v249, %v245
    %v306 = vpack.c.b16 %v250, %v246
    %v307 = vpack.c.b16 %v255, %v251
    %v308 = vpack.c.b16 %v256, %v252
    %v309 = vpack.c.b16 %v257, %v253
    %v310 = vpack.c.b16 %v258, %v254
    %v311 = vpack.c.b16 %v263, %v259
    %v312 = vpack.c.b16 %v264, %v260
    %v313 = vpack.c.b16 %v265, %v261
    %v314 = vpack.c.b16 %v266, %v262
    %v315 = vpack.c.b16 %v271, %v267
    %v316 = vpack.c.b16 %v272, %v268
    %v317 = vpack.c.b16 %v273, %v269
    %v318 = vpack.c.b16 %v274, %v270
    %v319 = vpack.c.b16 %v279, %v275
    %v320 = vpack.c.b16 %v280, %v276
    %v321 = vpack.c.b16 %v281, %v277
    %v322 = vpack.c.b16 %v282, %v278
    %v323 = vpack.c.b16 %v287, %v283
    %v324 = vpack.c.b16 %v288, %v284
    %v325 = vpack.c.b16 %v289, %v285
    %v326 = vpack.c.b16 %v290, %v286
    %v327 = vpack.c.b16 %v295, %v291
    %v328 = vpack.c.b16 %v296, %v292
    %v329 = vpack.c.b16 %v297, %v293
    %v330 = vpack.c.b16 %v298, %v294
    %363 = vmatprep.subr.bf16.mxu0 %v300
    %364 = vmatpush1.bf16.msra.mxu0 %v299
    %365 = vmatprep.subr.bf16.mxu0 %v304
    %366 = vmatpush1.bf16.msra.mxu0 %v303
    %367 = vmatprep.subr.bf16.mxu0 %v308
    %368 = vmatpush1.bf16.msra.mxu0 %v307
    %369 = vmatprep.subr.bf16.mxu0 %v312
    %370 = vmatpush1.bf16.msra.mxu0 %v311
    %371 = vmatprep.subr.bf16.mxu0 %v316
    %372 = vmatpush1.bf16.msra.mxu0 %v315
    %373 = vmatprep.subr.bf16.mxu0 %v320
    %374 = vmatpush1.bf16.msra.mxu0 %v319
    %375 = vmatprep.subr.bf16.mxu0 %v324
    %376 = vmatpush1.bf16.msra.mxu0 %v323
    %377 = vmatprep.subr.bf16.mxu0 %v328
    %378 = vmatpush1.bf16.msra.mxu0 %v327
    %379 = vmatprep.subr.bf16.mxu0 0
    %380 = vmatpush1.bf16.msra.mxu0 0
    %381 = vmatprep.subr.bf16.mxu0 0
    %382 = vmatpush1.bf16.msra.mxu0 0
    %383 = vmatprep.subr.bf16.mxu0 0
    %384 = vmatpush1.bf16.msra.mxu0 0
    %385 = vmatprep.subr.bf16.mxu0 0
    %386 = vmatpush1.bf16.msra.mxu0 0
    %387 = vmatprep.subr.bf16.mxu0 0
    %388 = vmatpush1.bf16.msra.mxu0 0
    %389 = vmatprep.subr.bf16.mxu0 0
    %390 = vmatpush1.bf16.msra.mxu0 0
    %391 = vmatprep.subr.bf16.mxu0 0
    %392 = vmatpush1.bf16.msra.mxu0 0
    %393 = vmatprep.subr.bf16.mxu0 0
    %394 = vmatpush1.bf16.msra.mxu0 0
    %395 = vmatprep.mubr.bf16.mxu0 0
    %396 = vmatmul.mubr.bf16.gmra.mrb[0].mxu0 %v195
    %v397 = vpop.f32.mrb[0].mxu0
    %v398 = vadd.f32 %v162, %v397
    %v399 = vpop.f32.mrb[0].mxu0
    %v400 = vadd.f32 %v166, %v399
    %v401 = vpop.f32.mrb[0].mxu0
    %v402 = vadd.f32 %v162, %v401
    %v403 = vpop.f32.mrb[0].mxu0
    %v404 = vadd.f32 %v166, %v403
    %405 = vmatprep.mubr.bf16.mxu0 0
    %406 = vmatmul.mubr.bf16.gmra.mrb[0].mxu0 %v196
    %v407 = vpop.f32.mrb[0].mxu0
    %v408 = vadd.f32 %v162, %v407
    %v409 = vpop.f32.mrb[0].mxu0
    %v410 = vadd.f32 %v166, %v409
    %v411 = vpop.f32.mrb[0].mxu0
    %v412 = vadd.f32 %v162, %v411
    %v413 = vpop.f32.mrb[0].mxu0
    %v414 = vadd.f32 %v166, %v413
    %415 = vmatprep.mubr.bf16.mxu0 0
    %416 = vmatmul.mubr.bf16.gmra.mrb[0].mxu0 %v197
    %v417 = vpop.f32.mrb[0].mxu0
    %v418 = vadd.f32 %v162, %v417
    %v419 = vpop.f32.mrb[0].mxu0
    %v420 = vadd.f32 %v166, %v419
    %v421 = vpop.f32.mrb[0].mxu0
    %v422 = vadd.f32 %v162, %v421
    %v423 = vpop.f32.mrb[0].mxu0
    %v424 = vadd.f32 %v166, %v423
    %425 = vmatprep.mubr.bf16.mxu0 0
    %426 = vmatmul.mubr.bf16.gmra.mrb[0].mxu0 %v198
    %v427 = vpop.f32.mrb[0].mxu0
    %v428 = vadd.f32 %v162, %v427
    %v429 = vpop.f32.mrb[0].mxu0
    %v430 = vadd.f32 %v166, %v429
    %v431 = vpop.f32.mrb[0].mxu0
    %v432 = vadd.f32 %v162, %v431
    %v433 = vpop.f32.mrb[0].mxu0
    %v434 = vadd.f32 %v166, %v433
    %435 = vdwg.mxu0
    %436 = vmatprep.subr.bf16.mxu0 %v302
    %437 = vmatpush1.bf16.msra.mxu0 %v301
    %438 = vmatprep.subr.bf16.mxu0 %v306
    %439 = vmatpush1.bf16.msra.mxu0 %v305
    %440 = vmatprep.subr.bf16.mxu0 %v310
    %441 = vmatpush1.bf16.msra.mxu0 %v309
    %442 = vmatprep.subr.bf16.mxu0 %v314
    %443 = vmatpush1.bf16.msra.mxu0 %v313
    %444 = vmatprep.subr.bf16.mxu0 %v318
    %445 = vmatpush1.bf16.msra.mxu0 %v317
    %446 = vmatprep.subr.bf16.mxu0 %v322
    %447 = vmatpush1.bf16.msra.mxu0 %v321
    %448 = vmatprep.subr.bf16.mxu0 %v326
    %449 = vmatpush1.bf16.msra.mxu0 %v325
    %450 = vmatprep.subr.bf16.mxu0 %v330
    %451 = vmatpush1.bf16.msra.mxu0 %v329
    %452 = vmatprep.subr.bf16.mxu0 0
    %453 = vmatpush1.bf16.msra.mxu0 0
    %454 = vmatprep.subr.bf16.mxu0 0
    %455 = vmatpush1.bf16.msra.mxu0 0
    %456 = vmatprep.subr.bf16.mxu0 0
    %457 = vmatpush1.bf16.msra.mxu0 0
    %458 = vmatprep.subr.bf16.mxu0 0
    %459 = vmatpush1.bf16.msra.mxu0 0
    %460 = vmatprep.subr.bf16.mxu0 0
    %461 = vmatpush1.bf16.msra.mxu0 0
    %462 = vmatprep.subr.bf16.mxu0 0
    %463 = vmatpush1.bf16.msra.mxu0 0
    %464 = vmatprep.subr.bf16.mxu0 0
    %465 = vmatpush1.bf16.msra.mxu0 0
    %466 = vmatprep.subr.bf16.mxu0 0
    %467 = vmatpush1.bf16.msra.mxu0 0
    %468 = vmatprep.mubr.bf16.mxu0 0
    %469 = vmatmul.mubr.bf16.gmra.mrb[0].mxu0 %v195
    %v470 = vpop.f32.mrb[0].mxu0
    %v471 = vadd.f32 %v170, %v470
    %v472 = vpop.f32.mrb[0].mxu0
    %v473 = vadd.f32 %v174, %v472
    %v474 = vpop.f32.mrb[0].mxu0
    %v475 = vadd.f32 %v170, %v474
    %v476 = vpop.f32.mrb[0].mxu0
    %v477 = vadd.f32 %v174, %v476
    %478 = vmatprep.mubr.bf16.mxu0 0
    %479 = vmatmul.mubr.bf16.gmra.mrb[0].mxu0 %v196
    %v480 = vpop.f32.mrb[0].mxu0
    %v481 = vadd.f32 %v170, %v480
    %v482 = vpop.f32.mrb[0].mxu0
    %v483 = vadd.f32 %v174, %v482
    %v484 = vpop.f32.mrb[0].mxu0
    %v485 = vadd.f32 %v170, %v484
    %v486 = vpop.f32.mrb[0].mxu0
    %v487 = vadd.f32 %v174, %v486
    %488 = vmatprep.mubr.bf16.mxu0 0
    %489 = vmatmul.mubr.bf16.gmra.mrb[0].mxu0 %v197
    %v490 = vpop.f32.mrb[0].mxu0
    %v491 = vadd.f32 %v170, %v490
    %v492 = vpop.f32.mrb[0].mxu0
    %v493 = vadd.f32 %v174, %v492
    %v494 = vpop.f32.mrb[0].mxu0
    %v495 = vadd.f32 %v170, %v494
    %v496 = vpop.f32.mrb[0].mxu0
    %v497 = vadd.f32 %v174, %v496
    %498 = vmatprep.mubr.bf16.mxu0 0
    %499 = vmatmul.mubr.bf16.gmra.mrb[0].mxu0 %v198
    %v500 = vpop.f32.mrb[0].mxu0
    %v501 = vadd.f32 %v170, %v500
    %v502 = vpop.f32.mrb[0].mxu0
    %v503 = vadd.f32 %v174, %v502
    %v504 = vpop.f32.mrb[0].mxu0
    %v505 = vadd.f32 %v170, %v504
    %v506 = vpop.f32.mrb[0].mxu0
    %v507 = vadd.f32 %v174, %v506
    %508 = vdwg.mxu0
    %509 = vst [vmem:[#allocation2] sm:$0xff] %v398
    %510 = vst [vmem:[#allocation2 + $0x8] sm:$0xff] %v400
    %511 = vst [vmem:[#allocation2 + $0x10] sm:$0xff] %v471
    %512 = vst [vmem:[#allocation2 + $0x18] sm:$0xff] %v473
    %513 = vst [vmem:[#allocation2 + $0x20] sm:$0xff] %v402
    %514 = vst [vmem:[#allocation2 + $0x28] sm:$0xff] %v404
    %515 = vst [vmem:[#allocation2 + $0x30] sm:$0xff] %v475
    %516 = vst [vmem:[#allocation2 + $0x38] sm:$0xff] %v477
    %517 = vst [vmem:[#allocation2 + $0x40] sm:$0xff] %v408
    %518 = vst [vmem:[#allocation2 + $0x48] sm:$0xff] %v410
    %519 = vst [vmem:[#allocation2 + $0x50] sm:$0xff] %v481
    %520 = vst [vmem:[#allocation2 + $0x58] sm:$0xff] %v483
    %521 = vst [vmem:[#allocation2 + $0x60] sm:$0xff] %v412
    %522 = vst [vmem:[#allocation2 + $0x68] sm:$0xff] %v414
    %523 = vst [vmem:[#allocation2 + $0x70] sm:$0xff] %v485
    %524 = vst [vmem:[#allocation2 + $0x78] sm:$0xff] %v487
    %525 = vst [vmem:[#allocation2 + $0x80] sm:$0xff] %v418
    %526 = vst [vmem:[#allocation2 + $0x88] sm:$0xff] %v420
    %527 = vst [vmem:[#allocation2 + $0x90] sm:$0xff] %v491
    %528 = vst [vmem:[#allocation2 + $0x98] sm:$0xff] %v493
    %529 = vst [vmem:[#allocation2 + $0xa0] sm:$0xff] %v422
    %530 = vst [vmem:[#allocation2 + $0xa8] sm:$0xff] %v424
    %531 = vst [vmem:[#allocation2 + $0xb0] sm:$0xff] %v495
    %532 = vst [vmem:[#allocation2 + $0xb8] sm:$0xff] %v497
    %533 = vst [vmem:[#allocation2 + $0xc0] sm:$0xff] %v428
    %534 = vst [vmem:[#allocation2 + $0xc8] sm:$0xff] %v430
    %535 = vst [vmem:[#allocation2 + $0xd0] sm:$0xff] %v501
    %536 = vst [vmem:[#allocation2 + $0xd8] sm:$0xff] %v503
    %537 = vst [vmem:[#allocation2 + $0xe0] sm:$0xff] %v432
    %538 = vst [vmem:[#allocation2 + $0xe8] sm:$0xff] %v434
    %539 = vst [vmem:[#allocation2 + $0xf0] sm:$0xff] %v505
    %540 = vst [vmem:[#allocation2 + $0xf8] sm:$0xff] %v507
    %v541 = vld [vmem:[%s97] sm:$0xf]
    %v542 = vld [vmem:[%s97 + $0x4] sm:$0xf]
    %v543 = vld [vmem:[%s97 + $0x8] sm:$0xf]
    %v544 = vld [vmem:[%s97 + $0xc] sm:$0xf]
    %v545 = vld [vmem:[%s97 + $0x10] sm:$0xf]
    %v546 = vld [vmem:[%s97 + $0x14] sm:$0xf]
    %v547 = vld [vmem:[%s97 + $0x18] sm:$0xf]
    %v548 = vld [vmem:[%s97 + $0x1c] sm:$0xf]
    %v549 = vld [vmem:[#allocation6] sm:$0xff]
    %v550 = vld [vmem:[#allocation6 + $0x8] sm:$0xff]
    %v551 = vld [vmem:[#allocation6 + $0x10] sm:$0xff]
    %v552 = vld [vmem:[#allocation6 + $0x18] sm:$0xff]
    %v553 = vld [vmem:[#allocation6 + $0x20] sm:$0xff]
    %v554 = vld [vmem:[#allocation6 + $0x28] sm:$0xff]
    %v555 = vld [vmem:[#allocation6 + $0x30] sm:$0xff]
    %v556 = vld [vmem:[#allocation6 + $0x38] sm:$0xff]
    %v557 = vld [vmem:[#allocation6 + $0x40] sm:$0xff]
    %v558 = vld [vmem:[#allocation6 + $0x48] sm:$0xff]
    %v559 = vld [vmem:[#allocation6 + $0x50] sm:$0xff]
    %v560 = vld [vmem:[#allocation6 + $0x58] sm:$0xff]
    %v561 = vld [vmem:[#allocation6 + $0x60] sm:$0xff]
    %v562 = vld [vmem:[#allocation6 + $0x68] sm:$0xff]
    %v563 = vld [vmem:[#allocation6 + $0x70] sm:$0xff]
    %v564 = vld [vmem:[#allocation6 + $0x78] sm:$0xff]
    %v565 = vld [vmem:[#allocation6 + $0x80] sm:$0xff]
    %v566 = vld [vmem:[#allocation6 + $0x88] sm:$0xff]
    %v567 = vld [vmem:[#allocation6 + $0x90] sm:$0xff]
    %v568 = vld [vmem:[#allocation6 + $0x98] sm:$0xff]
    %v569 = vld [vmem:[#allocation6 + $0xa0] sm:$0xff]
    %v570 = vld [vmem:[#allocation6 + $0xa8] sm:$0xff]
    %v571 = vld [vmem:[#allocation6 + $0xb0] sm:$0xff]
    %v572 = vld [vmem:[#allocation6 + $0xb8] sm:$0xff]
    %v573 = vld [vmem:[#allocation6 + $0xc0] sm:$0xff]
    %v574 = vld [vmem:[#allocation6 + $0xc8] sm:$0xff]
    %v575 = vld [vmem:[#allocation6 + $0xd0] sm:$0xff]
    %v576 = vld [vmem:[#allocation6 + $0xd8] sm:$0xff]
    %v577 = vld [vmem:[#allocation6 + $0xe0] sm:$0xff]
    %v578 = vld [vmem:[#allocation6 + $0xe8] sm:$0xff]
    %v579 = vld [vmem:[#allocation6 + $0xf0] sm:$0xff]
    %v580 = vld [vmem:[#allocation6 + $0xf8] sm:$0xff]
    %v581 = vld [vmem:[%s7] sm:$0xf]
    %v583 = vlaneseq
    %v584 = vshrl.u32 %v583, 7
    %v585 = vsub.s32 0, %v584
    %v586 = vrot.slane %v581, %v585
    %v587 = vlaneseq
    %v588 = vshrl.u32 %v587, 7
    %v589 = vsub.s32 1, %v588
    %v590 = vrot.slane %v581, %v589
    %v591 = vlaneseq
    %v592 = vshrl.u32 %v591, 7
    %v593 = vsub.s32 2, %v592
    %v594 = vrot.slane %v581, %v593
    %v595 = vlaneseq
    %v596 = vshrl.u32 %v595, 7
    %v597 = vsub.s32 3, %v596
    %v598 = vrot.slane %v581, %v597
    %v611 = vunpack.c.l.b16 %v541
    %v612 = vunpack.c.l.b16 %v542
    %v613 = vunpack.c.l.b16 %v543
    %v614 = vunpack.c.l.b16 %v544
    %v615 = vunpack.c.l.b16 %v545
    %v616 = vunpack.c.l.b16 %v546
    %v617 = vunpack.c.l.b16 %v547
    %v618 = vunpack.c.l.b16 %v548
    %v619 = vpack.c.b16 %v612, %v611
    %v620 = vpack.c.b16 %v614, %v613
    %v621 = vpack.c.b16 %v616, %v615
    %v622 = vpack.c.b16 %v618, %v617
    %v659 = vunpack.c.l.b16 %v549
    %v660 = vunpack.c.h.b16 %v549
    %v661 = vunpack.c.l.b16 %v550
    %v662 = vunpack.c.h.b16 %v550
    %v663 = vunpack.c.l.b16 %v551
    %v664 = vunpack.c.h.b16 %v551
    %v665 = vunpack.c.l.b16 %v552
    %v666 = vunpack.c.h.b16 %v552
    %v667 = vunpack.c.l.b16 %v553
    %v668 = vunpack.c.h.b16 %v553
    %v669 = vunpack.c.l.b16 %v554
    %v670 = vunpack.c.h.b16 %v554
    %v671 = vunpack.c.l.b16 %v555
    %v672 = vunpack.c.h.b16 %v555
    %v673 = vunpack.c.l.b16 %v556
    %v674 = vunpack.c.h.b16 %v556
    %v675 = vunpack.c.l.b16 %v557
    %v676 = vunpack.c.h.b16 %v557
    %v677 = vunpack.c.l.b16 %v558
    %v678 = vunpack.c.h.b16 %v558
    %v679 = vunpack.c.l.b16 %v559
    %v680 = vunpack.c.h.b16 %v559
    %v681 = vunpack.c.l.b16 %v560
    %v682 = vunpack.c.h.b16 %v560
    %v683 = vunpack.c.l.b16 %v561
    %v684 = vunpack.c.h.b16 %v561
    %v685 = vunpack.c.l.b16 %v562
    %v686 = vunpack.c.h.b16 %v562
    %v687 = vunpack.c.l.b16 %v563
    %v688 = vunpack.c.h.b16 %v563
    %v689 = vunpack.c.l.b16 %v564
    %v690 = vunpack.c.h.b16 %v564
    %v691 = vunpack.c.l.b16 %v565
    %v692 = vunpack.c.h.b16 %v565
    %v693 = vunpack.c.l.b16 %v566
    %v694 = vunpack.c.h.b16 %v566
    %v695 = vunpack.c.l.b16 %v567
    %v696 = vunpack.c.h.b16 %v567
    %v697 = vunpack.c.l.b16 %v568
    %v698 = vunpack.c.h.b16 %v568
    %v699 = vunpack.c.l.b16 %v569
    %v700 = vunpack.c.h.b16 %v569
    %v701 = vunpack.c.l.b16 %v570
    %v702 = vunpack.c.h.b16 %v570
    %v703 = vunpack.c.l.b16 %v571
    %v704 = vunpack.c.h.b16 %v571
    %v705 = vunpack.c.l.b16 %v572
    %v706 = vunpack.c.h.b16 %v572
    %v707 = vunpack.c.l.b16 %v573
    %v708 = vunpack.c.h.b16 %v573
    %v709 = vunpack.c.l.b16 %v574
    %v710 = vunpack.c.h.b16 %v574
    %v711 = vunpack.c.l.b16 %v575
    %v712 = vunpack.c.h.b16 %v575
    %v713 = vunpack.c.l.b16 %v576
    %v714 = vunpack.c.h.b16 %v576
    %v715 = vunpack.c.l.b16 %v577
    %v716 = vunpack.c.h.b16 %v577
    %v717 = vunpack.c.l.b16 %v578
    %v718 = vunpack.c.h.b16 %v578
    %v719 = vunpack.c.l.b16 %v579
    %v720 = vunpack.c.h.b16 %v579
    %v721 = vunpack.c.l.b16 %v580
    %v722 = vunpack.c.h.b16 %v580
    %v723 = vpack.c.b16 %v663, %v659
    %v724 = vpack.c.b16 %v664, %v660
    %v725 = vpack.c.b16 %v665, %v661
    %v726 = vpack.c.b16 %v666, %v662
    %v727 = vpack.c.b16 %v671, %v667
    %v728 = vpack.c.b16 %v672, %v668
    %v729 = vpack.c.b16 %v673, %v669
    %v730 = vpack.c.b16 %v674, %v670
    %v731 = vpack.c.b16 %v679, %v675
    %v732 = vpack.c.b16 %v680, %v676
    %v733 = vpack.c.b16 %v681, %v677
    %v734 = vpack.c.b16 %v682, %v678
    %v735 = vpack.c.b16 %v687, %v683
    %v736 = vpack.c.b16 %v688, %v684
    %v737 = vpack.c.b16 %v689, %v685
    %v738 = vpack.c.b16 %v690, %v686
    %v739 = vpack.c.b16 %v695, %v691
    %v740 = vpack.c.b16 %v696, %v692
    %v741 = vpack.c.b16 %v697, %v693
    %v742 = vpack.c.b16 %v698, %v694
    %v743 = vpack.c.b16 %v703, %v699
    %v744 = vpack.c.b16 %v704, %v700
    %v745 = vpack.c.b16 %v705, %v701
    %v746 = vpack.c.b16 %v706, %v702
    %v747 = vpack.c.b16 %v711, %v707
    %v748 = vpack.c.b16 %v712, %v708
    %v749 = vpack.c.b16 %v713, %v709
    %v750 = vpack.c.b16 %v714, %v710
    %v751 = vpack.c.b16 %v719, %v715
    %v752 = vpack.c.b16 %v720, %v716
    %v753 = vpack.c.b16 %v721, %v717
    %v754 = vpack.c.b16 %v722, %v718
    %787 = vmatprep.subr.bf16.mxu0 %v724
    %788 = vmatpush1.bf16.msra.mxu0 %v723
    %789 = vmatprep.subr.bf16.mxu0 %v728
    %790 = vmatpush1.bf16.msra.mxu0 %v727
    %791 = vmatprep.subr.bf16.mxu0 %v732
    %792 = vmatpush1.bf16.msra.mxu0 %v731
    %793 = vmatprep.subr.bf16.mxu0 %v736
    %794 = vmatpush1.bf16.msra.mxu0 %v735
    %795 = vmatprep.subr.bf16.mxu0 %v740
    %796 = vmatpush1.bf16.msra.mxu0 %v739
    %797 = vmatprep.subr.bf16.mxu0 %v744
    %798 = vmatpush1.bf16.msra.mxu0 %v743
    %799 = vmatprep.subr.bf16.mxu0 %v748
    %800 = vmatpush1.bf16.msra.mxu0 %v747
    %801 = vmatprep.subr.bf16.mxu0 %v752
    %802 = vmatpush1.bf16.msra.mxu0 %v751
    %803 = vmatprep.subr.bf16.mxu0 0
    %804 = vmatpush1.bf16.msra.mxu0 0
    %805 = vmatprep.subr.bf16.mxu0 0
    %806 = vmatpush1.bf16.msra.mxu0 0
    %807 = vmatprep.subr.bf16.mxu0 0
    %808 = vmatpush1.bf16.msra.mxu0 0
    %809 = vmatprep.subr.bf16.mxu0 0
    %810 = vmatpush1.bf16.msra.mxu0 0
    %811 = vmatprep.subr.bf16.mxu0 0
    %812 = vmatpush1.bf16.msra.mxu0 0
    %813 = vmatprep.subr.bf16.mxu0 0
    %814 = vmatpush1.bf16.msra.mxu0 0
    %815 = vmatprep.subr.bf16.mxu0 0
    %816 = vmatpush1.bf16.msra.mxu0 0
    %817 = vmatprep.subr.bf16.mxu0 0
    %818 = vmatpush1.bf16.msra.mxu0 0
    %819 = vmatprep.mubr.bf16.mxu0 0
    %820 = vmatmul.mubr.bf16.gmra.mrb[0].mxu0 %v619
    %v821 = vpop.f32.mrb[0].mxu0
    %v822 = vadd.f32 %v586, %v821
    %v823 = vpop.f32.mrb[0].mxu0
    %v824 = vadd.f32 %v590, %v823
    %v825 = vpop.f32.mrb[0].mxu0
    %v826 = vadd.f32 %v586, %v825
    %v827 = vpop.f32.mrb[0].mxu0
    %v828 = vadd.f32 %v590, %v827
    %829 = vmatprep.mubr.bf16.mxu0 0
    %830 = vmatmul.mubr.bf16.gmra.mrb[0].mxu0 %v620
    %v831 = vpop.f32.mrb[0].mxu0
    %v832 = vadd.f32 %v586, %v831
    %v833 = vpop.f32.mrb[0].mxu0
    %v834 = vadd.f32 %v590, %v833
    %v835 = vpop.f32.mrb[0].mxu0
    %v836 = vadd.f32 %v586, %v835
    %v837 = vpop.f32.mrb[0].mxu0
    %v838 = vadd.f32 %v590, %v837
    %839 = vmatprep.mubr.bf16.mxu0 0
    %840 = vmatmul.mubr.bf16.gmra.mrb[0].mxu0 %v621
    %v841 = vpop.f32.mrb[0].mxu0
    %v842 = vadd.f32 %v586, %v841
    %v843 = vpop.f32.mrb[0].mxu0
    %v844 = vadd.f32 %v590, %v843
    %v845 = vpop.f32.mrb[0].mxu0
    %v846 = vadd.f32 %v586, %v845
    %v847 = vpop.f32.mrb[0].mxu0
    %v848 = vadd.f32 %v590, %v847
    %849 = vmatprep.mubr.bf16.mxu0 0
    %850 = vmatmul.mubr.bf16.gmra.mrb[0].mxu0 %v622
    %v851 = vpop.f32.mrb[0].mxu0
    %v852 = vadd.f32 %v586, %v851
    %v853 = vpop.f32.mrb[0].mxu0
    %v854 = vadd.f32 %v590, %v853
    %v855 = vpop.f32.mrb[0].mxu0
    %v856 = vadd.f32 %v586, %v855
    %v857 = vpop.f32.mrb[0].mxu0
    %v858 = vadd.f32 %v590, %v857
    %859 = vdwg.mxu0
    %860 = vmatprep.subr.bf16.mxu0 %v726
    %861 = vmatpush1.bf16.msra.mxu0 %v725
    %862 = vmatprep.subr.bf16.mxu0 %v730
    %863 = vmatpush1.bf16.msra.mxu0 %v729
    %864 = vmatprep.subr.bf16.mxu0 %v734
    %865 = vmatpush1.bf16.msra.mxu0 %v733
    %866 = vmatprep.subr.bf16.mxu0 %v738
    %867 = vmatpush1.bf16.msra.mxu0 %v737
    %868 = vmatprep.subr.bf16.mxu0 %v742
    %869 = vmatpush1.bf16.msra.mxu0 %v741
    %870 = vmatprep.subr.bf16.mxu0 %v746
    %871 = vmatpush1.bf16.msra.mxu0 %v745
    %872 = vmatprep.subr.bf16.mxu0 %v750
    %873 = vmatpush1.bf16.msra.mxu0 %v749
    %874 = vmatprep.subr.bf16.mxu0 %v754
    %875 = vmatpush1.bf16.msra.mxu0 %v753
    %876 = vmatprep.subr.bf16.mxu0 0
    %877 = vmatpush1.bf16.msra.mxu0 0
    %878 = vmatprep.subr.bf16.mxu0 0
    %879 = vmatpush1.bf16.msra.mxu0 0
    %880 = vmatprep.subr.bf16.mxu0 0
    %881 = vmatpush1.bf16.msra.mxu0 0
    %882 = vmatprep.subr.bf16.mxu0 0
    %883 = vmatpush1.bf16.msra.mxu0 0
    %884 = vmatprep.subr.bf16.mxu0 0
    %885 = vmatpush1.bf16.msra.mxu0 0
    %886 = vmatprep.subr.bf16.mxu0 0
    %887 = vmatpush1.bf16.msra.mxu0 0
    %888 = vmatprep.subr.bf16.mxu0 0
    %889 = vmatpush1.bf16.msra.mxu0 0
    %890 = vmatprep.subr.bf16.mxu0 0
    %891 = vmatpush1.bf16.msra.mxu0 0
    %892 = vmatprep.mubr.bf16.mxu0 0
    %893 = vmatmul.mubr.bf16.gmra.mrb[0].mxu0 %v619
    %v894 = vpop.f32.mrb[0].mxu0
    %v895 = vadd.f32 %v594, %v894
    %v896 = vpop.f32.mrb[0].mxu0
    %v897 = vadd.f32 %v598, %v896
    %v898 = vpop.f32.mrb[0].mxu0
    %v899 = vadd.f32 %v594, %v898
    %v900 = vpop.f32.mrb[0].mxu0
    %v901 = vadd.f32 %v598, %v900
    %902 = vmatprep.mubr.bf16.mxu0 0
    %903 = vmatmul.mubr.bf16.gmra.mrb[0].mxu0 %v620
    %v904 = vpop.f32.mrb[0].mxu0
    %v905 = vadd.f32 %v594, %v904
    %v906 = vpop.f32.mrb[0].mxu0
    %v907 = vadd.f32 %v598, %v906
    %v908 = vpop.f32.mrb[0].mxu0
    %v909 = vadd.f32 %v594, %v908
    %v910 = vpop.f32.mrb[0].mxu0
    %v911 = vadd.f32 %v598, %v910
    %912 = vmatprep.mubr.bf16.mxu0 0
    %913 = vmatmul.mubr.bf16.gmra.mrb[0].mxu0 %v621
    %v914 = vpop.f32.mrb[0].mxu0
    %v915 = vadd.f32 %v594, %v914
    %v916 = vpop.f32.mrb[0].mxu0
    %v917 = vadd.f32 %v598, %v916
    %v918 = vpop.f32.mrb[0].mxu0
    %v919 = vadd.f32 %v594, %v918
    %v920 = vpop.f32.mrb[0].mxu0
    %v921 = vadd.f32 %v598, %v920
    %922 = vmatprep.mubr.bf16.mxu0 0
    %923 = vmatmul.mubr.bf16.gmra.mrb[0].mxu0 %v622
    %v924 = vpop.f32.mrb[0].mxu0
    %v925 = vadd.f32 %v594, %v924
    %v926 = vpop.f32.mrb[0].mxu0
    %v927 = vadd.f32 %v598, %v926
    %v928 = vpop.f32.mrb[0].mxu0
    %v929 = vadd.f32 %v594, %v928
    %v930 = vpop.f32.mrb[0].mxu0
    %v931 = vadd.f32 %v598, %v930
    %932 = vdwg.mxu0
    %933 = vst [vmem:[#allocation3] sm:$0xff] %v822
    %934 = vst [vmem:[#allocation3 + $0x8] sm:$0xff] %v824
    %935 = vst [vmem:[#allocation3 + $0x10] sm:$0xff] %v895
    %936 = vst [vmem:[#allocation3 + $0x18] sm:$0xff] %v897
    %937 = vst [vmem:[#allocation3 + $0x20] sm:$0xff] %v826
    %938 = vst [vmem:[#allocation3 + $0x28] sm:$0xff] %v828
    %939 = vst [vmem:[#allocation3 + $0x30] sm:$0xff] %v899
    %940 = vst [vmem:[#allocation3 + $0x38] sm:$0xff] %v901
    %941 = vst [vmem:[#allocation3 + $0x40] sm:$0xff] %v832
    %942 = vst [vmem:[#allocation3 + $0x48] sm:$0xff] %v834
    %943 = vst [vmem:[#allocation3 + $0x50] sm:$0xff] %v905
    %944 = vst [vmem:[#allocation3 + $0x58] sm:$0xff] %v907
    %945 = vst [vmem:[#allocation3 + $0x60] sm:$0xff] %v836
    %946 = vst [vmem:[#allocation3 + $0x68] sm:$0xff] %v838
    %947 = vst [vmem:[#allocation3 + $0x70] sm:$0xff] %v909
    %948 = vst [vmem:[#allocation3 + $0x78] sm:$0xff] %v911
    %949 = vst [vmem:[#allocation3 + $0x80] sm:$0xff] %v842
    %950 = vst [vmem:[#allocation3 + $0x88] sm:$0xff] %v844
    %951 = vst [vmem:[#allocation3 + $0x90] sm:$0xff] %v915
    %952 = vst [vmem:[#allocation3 + $0x98] sm:$0xff] %v917
    %953 = vst [vmem:[#allocation3 + $0xa0] sm:$0xff] %v846
    %954 = vst [vmem:[#allocation3 + $0xa8] sm:$0xff] %v848
    %955 = vst [vmem:[#allocation3 + $0xb0] sm:$0xff] %v919
    %956 = vst [vmem:[#allocation3 + $0xb8] sm:$0xff] %v921
    %957 = vst [vmem:[#allocation3 + $0xc0] sm:$0xff] %v852
    %958 = vst [vmem:[#allocation3 + $0xc8] sm:$0xff] %v854
    %959 = vst [vmem:[#allocation3 + $0xd0] sm:$0xff] %v925
    %960 = vst [vmem:[#allocation3 + $0xd8] sm:$0xff] %v927
    %961 = vst [vmem:[#allocation3 + $0xe0] sm:$0xff] %v856
    %962 = vst [vmem:[#allocation3 + $0xe8] sm:$0xff] %v858
    %963 = vst [vmem:[#allocation3 + $0xf0] sm:$0xff] %v929
    %964 = vst [vmem:[#allocation3 + $0xf8] sm:$0xff] %v931
    loop: start=0, step=1, limit=8
    $region50: #{seq_tagger_forward.3} parent=1 // loop_pre_header
      _
    $region51: #{seq_tagger_forward.3} parent=1 // loop_header
      %s966 = sphi 0, %s970
      %p967 = scmp.ge.s32.totalorder %s966, 8
    $region52: #{seq_tagger_forward.3} parent=1 // loop_header_branch
      %969 = sbr.rel (%p967) target = $region56
    $region53: #{seq_tagger_forward.3} parent=1 // loop_body
      %s971 = ssub.s32 7, %s966
      %v972 = vld [vmem:[#allocation4] sm:$0xff]
      %v973 = vld [vmem:[#allocation4 + $0x8] sm:$0xff]
      %s974 = smul.u32 %s966, 4
      %s975 = smul.addr %s974, 8
      %s976 = scalar_lea.vmem [#allocation2], %s975
      %v977 = vld [vmem:[%s976] sm:$0xff]
      %v978 = vld [vmem:[%s976 + $0x8] sm:$0xff]
      %v979 = vld [vmem:[%s976 + $0x10] sm:$0xff]
      %v980 = vld [vmem:[%s976 + $0x18] sm:$0xff]
      %v981 = vpack.c.bf16 %v972, %v972
      %v982 = vld [vmem:[#allocation8] sm:$0xff]
      %v983 = vld [vmem:[#allocation8 + $0x8] sm:$0xff]
      %v984 = vld [vmem:[#allocation8 + $0x10] sm:$0xff]
      %v985 = vld [vmem:[#allocation8 + $0x18] sm:$0xff]
      %v986 = vld [vmem:[#allocation8 + $0x20] sm:$0xff]
      %v987 = vld [vmem:[#allocation8 + $0x28] sm:$0xff]
      %v988 = vld [vmem:[#allocation8 + $0x30] sm:$0xff]
      %v989 = vld [vmem:[#allocation8 + $0x38] sm:$0xff]
      %v990 = vld [vmem:[#allocation8 + $0x40] sm:$0xff]
      %v991 = vld [vmem:[#allocation8 + $0x48] sm:$0xff]
      %v992 = vld [vmem:[#allocation8 + $0x50] sm:$0xff]
      %v993 = vld [vmem:[#allocation8 + $0x58] sm:$0xff]
      %v994 = vld [vmem:[#allocation8 + $0x60] sm:$0xff]
      %v995 = vld [vmem:[#allocation8 + $0x68] sm:$0xff]
      %v996 = vld [vmem:[#allocation8 + $0x70] sm:$0xff]
      %v997 = vld [vmem:[#allocation8 + $0x78] sm:$0xff]
      %v998 = vld [vmem:[#allocation8 + $0x80] sm:$0xff]
      %v999 = vld [vmem:[#allocation8 + $0x88] sm:$0xff]
      %v1000 = vld [vmem:[#allocation8 + $0x90] sm:$0xff]
      %v1001 = vld [vmem:[#allocation8 + $0x98] sm:$0xff]
      %v1002 = vld [vmem:[#allocation8 + $0xa0] sm:$0xff]
      %v1003 = vld [vmem:[#allocation8 + $0xa8] sm:$0xff]
      %v1004 = vld [vmem:[#allocation8 + $0xb0] sm:$0xff]
      %v1005 = vld [vmem:[#allocation8 + $0xb8] sm:$0xff]
      %v1006 = vld [vmem:[#allocation8 + $0xc0] sm:$0xff]
      %v1007 = vld [vmem:[#allocation8 + $0xc8] sm:$0xff]
      %v1008 = vld [vmem:[#allocation8 + $0xd0] sm:$0xff]
      %v1009 = vld [vmem:[#allocation8 + $0xd8] sm:$0xff]
      %v1010 = vld [vmem:[#allocation8 + $0xe0] sm:$0xff]
      %v1011 = vld [vmem:[#allocation8 + $0xe8] sm:$0xff]
      %v1012 = vld [vmem:[#allocation8 + $0xf0] sm:$0xff]
      %v1013 = vld [vmem:[#allocation8 + $0xf8] sm:$0xff]
      %v1046 = vunpack.c.l.b16 %v982
      %v1047 = vunpack.c.h.b16 %v982
      %v1048 = vunpack.c.l.b16 %v983
      %v1049 = vunpack.c.h.b16 %v983
      %v1050 = vunpack.c.l.b16 %v984
      %v1051 = vunpack.c.h.b16 %v984
      %v1052 = vunpack.c.l.b16 %v985
      %v1053 = vunpack.c.h.b16 %v985
      %v1054 = vunpack.c.l.b16 %v986
      %v1055 = vunpack.c.h.b16 %v986
      %v1056 = vunpack.c.l.b16 %v987
      %v1057 = vunpack.c.h.b16 %v987
      %v1058 = vunpack.c.l.b16 %v988
      %v1059 = vunpack.c.h.b16 %v988
      %v1060 = vunpack.c.l.b16 %v989
      %v1061 = vunpack.c.h.b16 %v989
      %v1062 = vunpack.c.l.b16 %v990
      %v1063 = vunpack.c.h.b16 %v990
      %v1064 = vunpack.c.l.b16 %v991
      %v1065 = vunpack.c.h.b16 %v991
      %v1066 = vunpack.c.l.b16 %v992
      %v1067 = vunpack.c.h.b16 %v992
      %v1068 = vunpack.c.l.b16 %v993
      %v1069 = vunpack.c.h.b16 %v993
      %v1070 = vunpack.c.l.b16 %v994
      %v1071 = vunpack.c.h.b16 %v994
      %v1072 = vunpack.c.l.b16 %v995
      %v1073 = vunpack.c.h.b16 %v995
      %v1074 = vunpack.c.l.b16 %v996
      %v1075 = vunpack.c.h.b16 %v996
      %v1076 = vunpack.c.l.b16 %v997
      %v1077 = vunpack.c.h.b16 %v997
      %v1078 = vunpack.c.l.b16 %v998
      %v1079 = vunpack.c.h.b16 %v998
      %v1080 = vunpack.c.l.b16 %v999
      %v1081 = vunpack.c.h.b16 %v999
      %v1082 = vunpack.c.l.b16 %v1000
      %v1083 = vunpack.c.h.b16 %v1000
      %v1084 = vunpack.c.l.b16 %v1001
      %v1085 = vunpack.c.h.b16 %v1001
      %v1086 = vunpack.c.l.b16 %v1002
      %v1087 = vunpack.c.h.b16 %v1002
      %v1088 = vunpack.c.l.b16 %v1003
      %v1089 = vunpack.c.h.b16 %v1003
      %v1090 = vunpack.c.l.b16 %v1004
      %v1091 = vunpack.c.h.b16 %v1004
      %v1092 = vunpack.c.l.b16 %v1005
      %v1093 = vunpack.c.h.b16 %v1005
      %v1094 = vunpack.c.l.b16 %v1006
      %v1095 = vunpack.c.h.b16 %v1006
      %v1096 = vunpack.c.l.b16 %v1007
      %v1097 = vunpack.c.h.b16 %v1007
      %v1098 = vunpack.c.l.b16 %v1008
      %v1099 = vunpack.c.h.b16 %v1008
      %v1100 = vunpack.c.l.b16 %v1009
      %v1101 = vunpack.c.h.b16 %v1009
      %v1102 = vunpack.c.l.b16 %v1010
      %v1103 = vunpack.c.h.b16 %v1010
      %v1104 = vunpack.c.l.b16 %v1011
      %v1105 = vunpack.c.h.b16 %v1011
      %v1106 = vunpack.c.l.b16 %v1012
      %v1107 = vunpack.c.h.b16 %v1012
      %v1108 = vunpack.c.l.b16 %v1013
      %v1109 = vunpack.c.h.b16 %v1013
      %v1110 = vpack.c.b16 %v1050, %v1046
      %v1111 = vpack.c.b16 %v1051, %v1047
      %v1112 = vpack.c.b16 %v1052, %v1048
      %v1113 = vpack.c.b16 %v1053, %v1049
      %v1114 = vpack.c.b16 %v1058, %v1054
      %v1115 = vpack.c.b16 %v1059, %v1055
      %v1116 = vpack.c.b16 %v1060, %v1056
      %v1117 = vpack.c.b16 %v1061, %v1057
      %v1118 = vpack.c.b16 %v1066, %v1062
      %v1119 = vpack.c.b16 %v1067, %v1063
      %v1120 = vpack.c.b16 %v1068, %v1064
      %v1121 = vpack.c.b16 %v1069, %v1065
      %v1122 = vpack.c.b16 %v1074, %v1070
      %v1123 = vpack.c.b16 %v1075, %v1071
      %v1124 = vpack.c.b16 %v1076, %v1072
      %v1125 = vpack.c.b16 %v1077, %v1073
      %v1126 = vpack.c.b16 %v1082, %v1078
      %v1127 = vpack.c.b16 %v1083, %v1079
      %v1128 = vpack.c.b16 %v1084, %v1080
      %v1129 = vpack.c.b16 %v1085, %v1081
      %v1130 = vpack.c.b16 %v1090, %v1086
      %v1131 = vpack.c.b16 %v1091, %v1087
      %v1132 = vpack.c.b16 %v1092, %v1088
      %v1133 = vpack.c.b16 %v1093, %v1089
      %v1134 = vpack.c.b16 %v1098, %v1094
      %v1135 = vpack.c.b16 %v1099, %v1095
      %v1136 = vpack.c.b16 %v1100, %v1096
      %v1137 = vpack.c.b16 %v1101, %v1097
      %v1138 = vpack.c.b16 %v1106, %v1102
      %v1139 = vpack.c.b16 %v1107, %v1103
      %v1140 = vpack.c.b16 %v1108, %v1104
      %v1141 = vpack.c.b16 %v1109, %v1105
      %1174 = vmatprep.subr.bf16.mxu0 %v1111
      %1175 = vmatpush1.bf16.msra.mxu0 %v1110
      %1176 = vmatprep.subr.bf16.mxu0 %v1115
      %1177 = vmatpush1.bf16.msra.mxu0 %v1114
      %1178 = vmatprep.subr.bf16.mxu0 %v1119
      %1179 = vmatpush1.bf16.msra.mxu0 %v1118
      %1180 = vmatprep.subr.bf16.mxu0 %v1123
      %1181 = vmatpush1.bf16.msra.mxu0 %v1122
      %1182 = vmatprep.subr.bf16.mxu0 %v1127
      %1183 = vmatpush1.bf16.msra.mxu0 %v1126
      %1184 = vmatprep.subr.bf16.mxu0 %v1131
      %1185 = vmatpush1.bf16.msra.mxu0 %v1130
      %1186 = vmatprep.subr.bf16.mxu0 %v1135
      %1187 = vmatpush1.bf16.msra.mxu0 %v1134
      %1188 = vmatprep.subr.bf16.mxu0 %v1139
      %1189 = vmatpush1.bf16.msra.mxu0 %v1138
      %1190 = vmatprep.subr.bf16.mxu0 0
      %1191 = vmatpush1.bf16.msra.mxu0 0
      %1192 = vmatprep.subr.bf16.mxu0 0
      %1193 = vmatpush1.bf16.msra.mxu0 0
      %1194 = vmatprep.subr.bf16.mxu0 0
      %1195 = vmatpush1.bf16.msra.mxu0 0
      %1196 = vmatprep.subr.bf16.mxu0 0
      %1197 = vmatpush1.bf16.msra.mxu0 0
      %1198 = vmatprep.subr.bf16.mxu0 0
      %1199 = vmatpush1.bf16.msra.mxu0 0
      %1200 = vmatprep.subr.bf16.mxu0 0
      %1201 = vmatpush1.bf16.msra.mxu0 0
      %1202 = vmatprep.subr.bf16.mxu0 0
      %1203 = vmatpush1.bf16.msra.mxu0 0
      %1204 = vmatprep.subr.bf16.mxu0 0
      %1205 = vmatpush1.bf16.msra.mxu0 0
      %1206 = vmatprep.mubr.bf16.mxu0 0
      %1207 = vmatmul.mubr.bf16.gmra.mrb[0].mxu0 %v981
      %v1208 = vpop.f32.mrb[0].mxu0
      %v1209 = vadd.f32 0.0, %v1208
      %v1210 = vpop.f32.mrb[0].mxu0
      %v1211 = vadd.f32 0.0, %v1210
      %v1212 = vpop.f32.mrb[0].mxu0
      %v1213 = vpop.f32.mrb[0].mxu0
      %1214 = vdwg.mxu0
      %1215 = vmatprep.subr.bf16.mxu0 %v1113
      %1216 = vmatpush1.bf16.msra.mxu0 %v1112
      %1217 = vmatprep.subr.bf16.mxu0 %v1117
      %1218 = vmatpush1.bf16.msra.mxu0 %v1116
      %1219 = vmatprep.subr.bf16.mxu0 %v1121
      %1220 = vmatpush1.bf16.msra.mxu0 %v1120
      %1221 = vmatprep.subr.bf16.mxu0 %v1125
      %1222 = vmatpush1.bf16.msra.mxu0 %v1124
      %1223 = vmatprep.subr.bf16.mxu0 %v1129
      %1224 = vmatpush1.bf16.msra.mxu0 %v1128
      %1225 = vmatprep.subr.bf16.mxu0 %v1133
      %1226 = vmatpush1.bf16.msra.mxu0 %v1132
      %1227 = vmatprep.subr.bf16.mxu0 %v1137
      %1228 = vmatpush1.bf16.msra.mxu0 %v1136
      %1229 = vmatprep.subr.bf16.mxu0 %v1141
      %1230 = vmatpush1.bf16.msra.mxu0 %v1140
      %1231 = vmatprep.subr.bf16.mxu0 0
      %1232 = vmatpush1.bf16.msra.mxu0 0
      %1233 = vmatprep.subr.bf16.mxu0 0
      %1234 = vmatpush1.bf16.msra.mxu0 0
      %1235 = vmatprep.subr.bf16.mxu0 0
      %1236 = vmatpush1.bf16.msra.mxu0 0
      %1237 = vmatprep.subr.bf16.mxu0 0
      %1238 = vmatpush1.bf16.msra.mxu0 0
      %1239 = vmatprep.subr.bf16.mxu0 0
      %1240 = vmatpush1.bf16.msra.mxu0 0
      %1241 = vmatprep.subr.bf16.mxu0 0
      %1242 = vmatpush1.bf16.msra.mxu0 0
      %1243 = vmatprep.subr.bf16.mxu0 0
      %1244 = vmatpush1.bf16.msra.mxu0 0
      %1245 = vmatprep.subr.bf16.mxu0 0
      %1246 = vmatpush1.bf16.msra.mxu0 0
      %1247 = vmatprep.mubr.bf16.mxu0 0
      %1248 = vmatmul.mubr.bf16.gmra.mrb[0].mxu0 %v981
      %v1249 = vpop.f32.mrb[0].mxu0
      %v1250 = vadd.f32 0.0, %v1249
      %v1251 = vpop.f32.mrb[0].mxu0
      %v1252 = vadd.f32 0.0, %v1251
      %v1253 = vpop.f32.mrb[0].mxu0
      %v1254 = vpop.f32.mrb[0].mxu0
      %1255 = vdwg.mxu0
      %v1256 = vadd.f32 %v977, %v1209
      %v1257 = vadd.f32 %v978, %v1211
      %v1258 = vadd.f32 %v979, %v1250
      %v1259 = vadd.f32 %v980, %v1252
      %s1260 = smul.u32 %s971, 4
      %s1261 = smul.addr %s1260, 8
      %s1262 = scalar_lea.vmem [#allocation3], %s1261
      %v1263 = vld [vmem:[%s1262] sm:$0xff]
      %v1264 = vld [vmem:[%s1262 + $0x8] sm:$0xff]
      %v1265 = vld [vmem:[%s1262 + $0x10] sm:$0xff]
      %v1266 = vld [vmem:[%s1262 + $0x18] sm:$0xff]
      %v1267 = vpack.c.bf16 %v973, %v973
      %v1268 = vld [vmem:[#allocation10] sm:$0xff]
      %v1269 = vld [vmem:[#allocation10 + $0x8] sm:$0xff]
      %v1270 = vld [vmem:[#allocation10 + $0x10] sm:$0xff]
      %v1271 = vld [vmem:[#allocation10 + $0x18] sm:$0xff]
      %v1272 = vld [vmem:[#allocation10 + $0x20] sm:$0xff]
      %v1273 = vld [vmem:[#allocation10 + $0x28] sm:$0xff]
      %v1274 = vld [vmem:[#allocation10 + $0x30] sm:$0xff]
      %v1275 = vld [vmem:[#allocation10 + $0x38] sm:$0xff]
      %v1276 = vld [vmem:[#allocation10 + $0x40] sm:$0xff]
      %v1277 = vld [vmem:[#allocation10 + $0x48] sm:$0xff]
      %v1278 = vld [vmem:[#allocation10 + $0x50] sm:$0xff]
      %v1279 = vld [vmem:[#allocation10 + $0x58] sm:$0xff]
      %v1280 = vld [vmem:[#allocation10 + $0x60] sm:$0xff]
      %v1281 = vld [vmem:[#allocation10 + $0x68] sm:$0xff]
      %v1282 = vld [vmem:[#allocation10 + $0x70] sm:$0xff]
      %v1283 = vld [vmem:[#allocation10 + $0x78] sm:$0xff]
      %v1284 = vld [vmem:[#allocation10 + $0x80] sm:$0xff]
      %v1285 = vld [vmem:[#allocation10 + $0x88] sm:$0xff]
      %v1286 = vld [vmem:[#allocation10 + $0x90] sm:$0xff]
      %v1287 = vld [vmem:[#allocation10 + $0x98] sm:$0xff]
      %v1288 = vld [vmem:[#allocation10 + $0xa0] sm:$0xff]
      %v1289 = vld [vmem:[#allocation10 + $0xa8] sm:$0xff]
      %v1290 = vld [vmem:[#allocation10 + $0xb0] sm:$0xff]
      %v1291 = vld [vmem:[#allocation10 + $0xb8] sm:$0xff]
      %v1292 = vld [vmem:[#allocation10 + $0xc0] sm:$0xff]
      %v1293 = vld [vmem:[#allocation10 + $0xc8] sm:$0xff]
      %v1294 = vld [vmem:[#allocation10 + $0xd0] sm:$0xff]
      %v1295 = vld [vmem:[#allocation10 + $0xd8] sm:$0xff]
      %v1296 = vld [vmem:[#allocation10 + $0xe0] sm:$0xff]
      %v1297 = vld [vmem:[#allocation10 + $0xe8] sm:$0xff]
      %v1298 = vld [vmem:[#allocation10 + $0xf0] sm:$0xff]
      %v1299 = vld [vmem:[#allocation10 + $0xf8] sm:$0xff]
      %v1332 = vunpack.c.l.b16 %v1268
      %v1333 = vunpack.c.h.b16 %v1268
      %v1334 = vunpack.c.l.b16 %v1269
      %v1335 = vunpack.c.h.b16 %v1269
      %v1336 = vunpack.c.l.b16 %v1270
      %v1337 = vunpack.c.h.b16 %v1270
      %v1338 = vunpack.c.l.b16 %v1271
      %v1339 = vunpack.c.h.b16 %v1271
      %v1340 = vunpack.c.l.b16 %v1272
      %v1341 = vunpack.c.h.b16 %v1272
      %v1342 = vunpack.c.l.b16 %v1273
      %v1343 = vunpack.c.h.b16 %v1273
      %v1344 = vunpack.c.l.b16 %v1274
      %v1345 = vunpack.c.h.b16 %v1274
      %v1346 = vunpack.c.l.b16 %v1275
      %v1347 = vunpack.c.h.b16 %v1275
      %v1348 = vunpack.c.l.b16 %v1276
      %v1349 = vunpack.c.h.b16 %v1276
      %v1350 = vunpack.c.l.b16 %v1277
      %v1351 = vunpack.c.h.b16 %v1277
      %v1352 = vunpack.c.l.b16 %v1278
      %v1353 = vunpack.c.h.b16 %v1278
      %v1354 = vunpack.c.l.b16 %v1279
      %v1355 = vunpack.c.h.b16 %v1279
      %v1356 = vunpack.c.l.b16 %v1280
      %v1357 = vunpack.c.h.b16 %v1280
      %v1358 = vunpack.c.l.b16 %v1281
      %v1359 = vunpack.c.h.b16 %v1281
      %v1360 = vunpack.c.l.b16 %v1282
      %v1361 = vunpack.c.h.b16 %v1282
      %v1362 = vunpack.c.l.b16 %v1283
      %v1363 = vunpack.c.h.b16 %v1283
      %v1364 = vunpack.c.l.b16 %v1284
      %v1365 = vunpack.c.h.b16 %v1284
      %v1366 = vunpack.c.l.b16 %v1285
      %v1367 = vunpack.c.h.b16 %v1285
      %v1368 = vunpack.c.l.b16 %v1286
      %v1369 = vunpack.c.h.b16 %v1286
      %v1370 = vunpack.c.l.b16 %v1287
      %v1371 = vunpack.c.h.b16 %v1287
      %v1372 = vunpack.c.l.b16 %v1288
      %v1373 = vunpack.c.h.b16 %v1288
      %v1374 = vunpack.c.l.b16 %v1289
      %v1375 = vunpack.c.h.b16 %v1289
      %v1376 = vunpack.c.l.b16 %v1290
      %v1377 = vunpack.c.h.b16 %v1290
      %v1378 = vunpack.c.l.b16 %v1291
      %v1379 = vunpack.c.h.b16 %v1291
      %v1380 = vunpack.c.l.b16 %v1292
      %v1381 = vunpack.c.h.b16 %v1292
      %v1382 = vunpack.c.l.b16 %v1293
      %v1383 = vunpack.c.h.b16 %v1293
      %v1384 = vunpack.c.l.b16 %v1294
      %v1385 = vunpack.c.h.b16 %v1294
      %v1386 = vunpack.c.l.b16 %v1295
      %v1387 = vunpack.c.h.b16 %v1295
      %v1388 = vunpack.c.l.b16 %v1296
      %v1389 = vunpack.c.h.b16 %v1296
      %v1390 = vunpack.c.l.b16 %v1297
      %v1391 = vunpack.c.h.b16 %v1297
      %v1392 = vunpack.c.l.b16 %v1298
      %v1393 = vunpack.c.h.b16 %v1298
      %v1394 = vunpack.c.l.b16 %v1299
      %v1395 = vunpack.c.h.b16 %v1299
      %v1396 = vpack.c.b16 %v1336, %v1332
      %v1397 = vpack.c.b16 %v1337, %v1333
      %v1398 = vpack.c.b16 %v1338, %v1334
      %v1399 = vpack.c.b16 %v1339, %v1335
      %v1400 = vpack.c.b16 %v1344, %v1340
      %v1401 = vpack.c.b16 %v1345, %v1341
      %v1402 = vpack.c.b16 %v1346, %v1342
      %v1403 = vpack.c.b16 %v1347, %v1343
      %v1404 = vpack.c.b16 %v1352, %v1348
      %v1405 = vpack.c.b16 %v1353, %v1349
      %v1406 = vpack.c.b16 %v1354, %v1350
      %v1407 = vpack.c.b16 %v1355, %v1351
      %v1408 = vpack.c.b16 %v1360, %v1356
      %v1409 = vpack.c.b16 %v1361, %v1357
      %v1410 = vpack.c.b16 %v1362, %v1358
      %v1411 = vpack.c.b16 %v1363, %v1359
      %v1412 = vpack.c.b16 %v1368, %v1364
      %v1413 = vpack.c.b16 %v1369, %v1365
      %v1414 = vpack.c.b16 %v1370, %v1366
      %v1415 = vpack.c.b16 %v1371, %v1367
      %v1416 = vpack.c.b16 %v1376, %v1372
      %v1417 = vpack.c.b16 %v1377, %v1373
      %v1418 = vpack.c.b16 %v1378, %v1374
      %v1419 = vpack.c.b16 %v1379, %v1375
      %v1420 = vpack.c.b16 %v1384, %v1380
      %v1421 = vpack.c.b16 %v1385, %v1381
      %v1422 = vpack.c.b16 %v1386, %v1382
      %v1423 = vpack.c.b16 %v1387, %v1383
      %v1424 = vpack.c.b16 %v1392, %v1388
      %v1425 = vpack.c.b16 %v1393, %v1389
      %v1426 = vpack.c.b16 %v1394, %v1390
      %v1427 = vpack.c.b16 %v1395, %v1391
      %1460 = vmatprep.subr.bf16.mxu0 %v1397
      %1461 = vmatpush1.bf16.msra.mxu0 %v1396
      %1462 = vmatprep.subr.bf16.mxu0 %v1401
      %1463 = vmatpush1.bf16.msra.mxu0 %v1400
      %1464 = vmatprep.subr.bf16.mxu0 %v1405
      %1465 = vmatpush1.bf16.msra.mxu0 %v1404
      %1466 = vmatprep.subr.bf16.mxu0 %v1409
      %1467 = vmatpush1.bf16.msra.mxu0 %v1408
      %1468 = vmatprep.subr.bf16.mxu0 %v1413
      %1469 = vmatpush1.bf16.msra.mxu0 %v1412
      %1470 = vmatprep.subr.bf16.mxu0 %v1417
      %1471 = vmatpush1.bf16.msra.mxu0 %v1416
      %1472 = vmatprep.subr.bf16.mxu0 %v1421
      %1473 = vmatpush1.bf16.msra.mxu0 %v1420
      %1474 = vmatprep.subr.bf16.mxu0 %v1425
      %1475 = vmatpush1.bf16.msra.mxu0 %v1424
      %1476 = vmatprep.subr.bf16.mxu0 0
      %1477 = vmatpush1.bf16.msra.mxu0 0
      %1478 = vmatprep.subr.bf16.mxu0 0
      %1479 = vmatpush1.bf16.msra.mxu0 0
      %1480 = vmatprep.subr.bf16.mxu0 0
      %1481 = vmatpush1.bf16.msra.mxu0 0
      %1482 = vmatprep.subr.bf16.mxu0 0
      %1483 = vmatpush1.bf16.msra.mxu0 0
      %1484 = vmatprep.subr.bf16.mxu0 0
      %1485 = vmatpush1.bf16.msra.mxu0 0
      %1486 = vmatprep.subr.bf16.mxu0 0
      %1487 = vmatpush1.bf16.msra.mxu0 0
      %1488 = vmatprep.subr.bf16.mxu0 0
      %1489 = vmatpush1.bf16.msra.mxu0 0
      %1490 = vmatprep.subr.bf16.mxu0 0
      %1491 = vmatpush1.bf16.msra.mxu0 0
      %1492 = vmatprep.mubr.bf16.mxu0 0
      %1493 = vmatmul.mubr.bf16.gmra.mrb[0].mxu0 %v1267
      %v1494 = vpop.f32.mrb[0].mxu0
      %v1495 = vadd.f32 0.0, %v1494
      %v1496 = vpop.f32.mrb[0].mxu0
      %v1497 = vadd.f32 0.0, %v1496
      %v1498 = vpop.f32.mrb[0].mxu0
      %v1499 = vpop.f32.mrb[0].mxu0
      %1500 = vdwg.mxu0
      %1501 = vmatprep.subr.bf16.mxu0 %v1399
      %1502 = vmatpush1.bf16.msra.mxu0 %v1398
      %1503 = vmatprep.subr.bf16.mxu0 %v1403
      %1504 = vmatpush1.bf16.msra.mxu0 %v1402
      %1505 = vmatprep.subr.bf16.mxu0 %v1407
      %1506 = vmatpush1.bf16.msra.mxu0 %v1406
      %1507 = vmatprep.subr.bf16.mxu0 %v1411
      %1508 = vmatpush1.bf16.msra.mxu0 %v1410
      %1509 = vmatprep.subr.bf16.mxu0 %v1415
      %1510 = vmatpush1.bf16.msra.mxu0 %v1414
      %1511 = vmatprep.subr.bf16.mxu0 %v1419
      %1512 = vmatpush1.bf16.msra.mxu0 %v1418
      %1513 = vmatprep.subr.bf16.mxu0 %v1423
      %1514 = vmatpush1.bf16.msra.mxu0 %v1422
      %1515 = vmatprep.subr.bf16.mxu0 %v1427
      %1516 = vmatpush1.bf16.msra.mxu0 %v1426
      %1517 = vmatprep.subr.bf16.mxu0 0
      %1518 = vmatpush1.bf16.msra.mxu0 0
      %1519 = vmatprep.subr.bf16.mxu0 0
      %1520 = vmatpush1.bf16.msra.mxu0 0
      %1521 = vmatprep.subr.bf16.mxu0 0
      %1522 = vmatpush1.bf16.msra.mxu0 0
      %1523 = vmatprep.subr.bf16.mxu0 0
      %1524 = vmatpush1.bf16.msra.mxu0 0
      %1525 = vmatprep.subr.bf16.mxu0 0
      %1526 = vmatpush1.bf16.msra.mxu0 0
      %1527 = vmatprep.subr.bf16.mxu0 0
      %1528 = vmatpush1.bf16.msra.mxu0 0
      %1529 = vmatprep.subr.bf16.mxu0 0
      %1530 = vmatpush1.bf16.msra.mxu0 0
      %1531 = vmatprep.subr.bf16.mxu0 0
      %1532 = vmatpush1.bf16.msra.mxu0 0
      %1533 = vmatprep.mubr.bf16.mxu0 0
      %1534 = vmatmul.mubr.bf16.gmra.mrb[0].mxu0 %v1267
      %v1535 = vpop.f32.mrb[0].mxu0
      %v1536 = vadd.f32 0.0, %v1535
      %v1537 = vpop.f32.mrb[0].mxu0
      %v1538 = vadd.f32 0.0, %v1537
      %v1539 = vpop.f32.mrb[0].mxu0
      %v1540 = vpop.f32.mrb[0].mxu0
      %1541 = vdwg.mxu0
      %v1542 = vadd.f32 %v1263, %v1495
      %v1543 = vadd.f32 %v1264, %v1497
      %v1544 = vadd.f32 %v1265, %v1536
      %v1545 = vadd.f32 %v1266, %v1538
      %v1546 = vxor.u32 %v1256, 2147483648
      %v1547 = vxor.u32 %v1257, 2147483648
      %v1548 = vxor.u32 %v1258, 2147483648
      %v1549 = vxor.u32 %v1542, 2147483648
      %v1550 = vxor.u32 %v1543, 2147483648
      %v1551 = vxor.u32 %v1544, 2147483648
      %v1552 = vmul.f32 %v1546, 1.442695
      %v1553 = vpow.pop %v1552
      %v1554 = vmul.f32 %v1547, 1.442695
      %v1555 = vpow.pop %v1554
      %v1556 = vmul.f32 %v1548, 1.442695
      %v1557 = vpow.pop %v1556
      %v1558 = vmul.f32 %v1549, 1.442695
      %v1559 = vpow.pop %v1558
      %v1560 = vmul.f32 %v1550, 1.442695
      %v1561 = vpow.pop %v1560
      %v1562 = vmul.f32 %v1551, 1.442695
      %v1563 = vpow.pop %v1562
      %v1564 = vadd.f32 %v1553, 1.0
      %v1565 = vadd.f32 %v1555, 1.0
      %v1566 = vadd.f32 %v1557, 1.0
      %v1567 = vadd.f32 %v1559, 1.0
      %v1568 = vadd.f32 %v1561, 1.0
      %v1569 = vadd.f32 %v1563, 1.0
      %v1570 = vrcp.pop %v1564
      %v1571 = vmul.f32 1.0, %v1570
      %v1572 = vrcp.pop %v1565
      %v1573 = vmul.f32 1.0, %v1572
      %v1574 = vrcp.pop %v1566
      %v1575 = vmul.f32 1.0, %v1574
      %v1576 = vrcp.pop %v1567
      %v1577 = vmul.f32 1.0, %v1576
      %v1578 = vrcp.pop %v1568
      %v1579 = vmul.f32 1.0, %v1578
      %v1580 = vrcp.pop %v1569
      %v1581 = vmul.f32 1.0, %v1580
      %v1582 = vtanh.pop %v1259
      %v1583 = vtanh.pop %v1545
      %v1584 = vld [vmem:[#allocation5] sm:$0xff]
      %v1585 = vld [vmem:[#allocation5 + $0x8] sm:$0xff]
      %v1586 = vmul.f32 %v1573, %v1584
      %v1587 = vmul.f32 %v1579, %v1585
      %v1588 = vmul.f32 %v1571, %v1582
      %v1589 = vmul.f32 %v1577, %v1583
      %v1590 = vadd.f32 %v1586, %v1588
      %v1591 = vadd.f32 %v1587, %v1589
      %v1592 = vtanh.pop %v1590
      %v1593 = vtanh.pop %v1591
      %v1594 = vmul.f32 %v1575, %v1592
      %v1595 = vmul.f32 %v1581, %v1593
      %1596 = vst [vmem:[#allocation4] sm:$0xff] %v1594
      %1597 = vst [vmem:[#allocation5] sm:$0xff] %v1590
      %v1598 = vpack.c.bf16 %v1594, %v1594
      %s1599 = smul.addr %s966, 4
      %s1600 = scalar_lea.vmem %s8, %s1599
      %1601 = vst [vmem:[%s1600] sm:$0xf] %v1598
      %v1602 = vpack.c.bf16 %v1595, %v1595
      %s1603 = smul.addr %s971, 4
      %s1604 = scalar_lea.vmem %s105, %s1603
      %1605 = vst [vmem:[%s1604] sm:$0xf] %v1602
      %s1606 = ssub.s32 0, 0
      %s1607 = smul.u32 %s1606, 8
      %s1608 = sadd.s32 %s1607, %s971
      %p1609 = scmp.lt.s32.totalorder %s1608, 8
      // Predicated region
      $region57: #{seq_tagger_forward.3} parent=53 // pred_check
        %p1610 = pneg %p1609
      $region58: #{seq_tagger_forward.3} parent=53 // pred_check_branch
        %1612 = sbr.rel (%p1610) target = $region60
      $region59: #{seq_tagger_forward.3} parent=53 // pred_region
        %1613 = vst [vmem:[#allocation4 + $0x8] sm:$0xff] %v1595
        %1614 = vst [vmem:[#allocation5 + $0x8] sm:$0xff] %v1591
      $region60: #{seq_tagger_forward.3} parent=53 // pred_fallthru
        _
    $region54: #{seq_tagger_forward.3} parent=1 // loop_footer
      %s970 = sadd.s32 1, %s966
    $region55: #{seq_tagger_forward.3} parent=1 // loop_footer_branch
      %965 = sbr.rel target = $region51
    $region56: #{seq_tagger_forward.3} parent=1 // loop_exit
      _
    %s1615 = ssub.s32 0, 0
    %s1616 = smul.u32 8, %s1615
    %p1617 = scmp.lt.s32.totalorder %s1616, 7
    %s1618 = scalar_select %p1617, %s1616, 7
    %s1619 = smul.addr %s1618, 4
    %s1620 = scalar_lea.vmem %s9, %s1619
    // Predicated region
    $region61: #{seq_tagger_forward.3} parent=1 // pred_check
      _
    $region62: #{seq_tagger_forward.3} parent=1 // pred_check_branch
      %1622 = sbr.rel (0) target = $region64
    $region63: #{seq_tagger_forward.3} parent=1 // pred_region
      _
    $region64: #{seq_tagger_forward.3} parent=1 // pred_fallthru
      _
    // Predicated region
    $region65: #{seq_tagger_forward.3} parent=1 // pred_check
      _
    $region66: #{seq_tagger_forward.3} parent=1 // pred_check_branch
      %1624 = sbr.rel (0) target = $region68
    $region67: #{seq_tagger_forward.3} parent=1 // pred_region
      %s1625 = ssub.s32 0, 0
      %s1626 = smul.u32 8, %s1625
    $region68: #{seq_tagger_forward.3} parent=1 // pred_fallthru
      _
    // Predicated region
    $region69: #{seq_tagger_forward.3} parent=1 // pred_check
      _
    $region70: #{seq_tagger_forward.3} parent=1 // pred_check_branch
      %1628 = sbr.rel (0) target = $region72
    $region71: #{seq_tagger_forward.3} parent=1 // pred_region
      _
    $region72: #{seq_tagger_forward.3} parent=1 // pred_fallthru
      _
    // Predicated region
    $region73: #{seq_tagger_forward.3} parent=1 // pred_check
      _
    $region74: #{seq_tagger_forward.3} parent=1 // pred_check_branch
      %1630 = sbr.rel (0) target = $region76
    $region75: #{seq_tagger_forward.3} parent=1 // pred_region
      %s1631 = ssub.s32 0, 0
      %s1632 = smul.u32 8, %s1631
      %p1633 = scmp.lt.s32.totalorder %s1632, 7
      %s1634 = scalar_select %p1633, %s1632, 7
      %s1635 = smul.addr %s1634, 4
      %s1636 = scalar_lea.vmem %s9, %s1635
    $region76: #{seq_tagger_forward.3} parent=1 // pred_fallthru
      _
    %1637 = vsyncpa [#allocation7], 1
    %1638 = vsyncpa [#allocation9], 1

// kernel: seq_tagger_forward.4
$region0: #{seq_tagger_forward.4}
  #allocation0 [shape = 'u32[]', space=smem, size = 0x4, offset = 0x4, fixed_abs, tag = 'smem constant byte address 0x4 - core index']
  #allocation1 [shape = 'u32[144,128]{1,0:T(1,128)}', space=vmem, size = 0x12000, scoped, tag = 'internal scratch']
  #allocation2 [shape = 'f32[8,8,512]{2,1,0:T(8,128)}', space=vmem, size = 0x20000, scoped, tag = 'scratch operand']
  #allocation3 [shape = 'f32[8,8,512]{2,1,0:T(8,128)}', space=vmem, size = 0x20000, scoped, tag = 'scratch operand']
  #allocation4 [shape = 'f32[16,128]{1,0:T(8,128)}', space=vmem, size = 0x2000, scoped, tag = 'scratch operand']
  #allocation5 [shape = 'f32[16,128]{1,0:T(8,128)}', space=vmem, size = 0x2000, scoped, tag = 'scratch operand']
  %s0 = inlined_call_operand.vmem [shape: bf16[8,8,128], index: 0, kind: input, shape index: {}, may-alias: {0,2}]
  %s1 = inlined_call_operand.vmem [shape: bf16[8,8,128], index: 1, kind: input, shape index: {}, may-alias: {1,3}]
  %s2 = inlined_call_operand.vmem [shape: bf16[8,8,128], index: 2, kind: input, shape index: {}, may-alias: {0,2}]
  %s3 = inlined_call_operand.vmem [shape: bf16[8,8,128], index: 3, kind: input, shape index: {}, may-alias: {1,3}]
  %s4 = inlined_call_operand.vmem [shape: bf16[256,512], index: 4, kind: input, shape index: {}]
  %s5 = inlined_call_operand.vmem [shape: bf16[256,512], index: 5, kind: input, shape index: {}]
  %s6 = inlined_call_operand.vmem [shape: bf16[128,512], index: 6, kind: input, shape index: {}]
  %s7 = inlined_call_operand.hbm [shape: bf16[128,512], index: 7, kind: input, shape index: {}]
  %s8 = inlined_call_operand.vmem [shape: f32[1,512], index: 8, kind: input, shape index: {}]
  %s9 = inlined_call_operand.hbm [shape: f32[1,512], index: 9, kind: input, shape index: {}]
  %s10 = inlined_call_operand.vmem [shape: bf16[8,8,128], index: 10, kind: output, shape index: {0}]
  %s11 = inlined_call_operand.vmem [shape: bf16[8,8,128], index: 11, kind: output, shape index: {1}]
  %12 = xla_tuple %s10, %s11
  %s13 = sld [smem:[#allocation0]]
  $region81: #{seq_tagger_forward.4} parent=0
    _
  %s15 = ssub.s32 1, %s13
  %s16 = scalar_select 0, %s15, %s13
  $region1: #{seq_tagger_forward.4} parent=0
    #allocation6 [shape = 'u8[131072]{0}', space=vmem, size = 0x20000, scoped, tag = 'input window, operand 7, single buffered']
    #allocation7 [shape = 's32[1]{0}', space=sflag, size = 0x4, scoped, tag = 'scoped memory for seq_tagger_forward.4']
    #allocation8 [shape = 'u8[2048]{0}', space=vmem, size = 0x800, scoped, tag = 'input window, operand 9, single buffered']
    #allocation9 [shape = 's32[1]{0}', space=sflag, size = 0x4, scoped, tag = 'scoped memory for seq_tagger_forward.4']
    %17 = vsyncpa [#allocation7], 0
    %18 = vsyncpa [#allocation9], 0
    // Predicated region
    $region2: #{seq_tagger_forward.4} parent=1 // pred_check
      _
    $region3: #{seq_tagger_forward.4} parent=1 // pred_check_branch
      %20 = sbr.rel (0) target = $region5
    $region4: #{seq_tagger_forward.4} parent=1 // pred_region
      _
    $region5: #{seq_tagger_forward.4} parent=1 // pred_fallthru
      _
    // Predicated region
    $region6: #{seq_tagger_forward.4} parent=1 // pred_check
      _
    $region7: #{seq_tagger_forward.4} parent=1 // pred_check_branch
      %22 = sbr.rel (0) target = $region9
    $region8: #{seq_tagger_forward.4} parent=1 // pred_region
      _
    $region9: #{seq_tagger_forward.4} parent=1 // pred_fallthru
      _
    // Predicated region
    $region10: #{seq_tagger_forward.4} parent=1 // pred_check
      _
    $region11: #{seq_tagger_forward.4} parent=1 // pred_check_branch
      %24 = sbr.rel (0) target = $region13
    $region12: #{seq_tagger_forward.4} parent=1 // pred_region
      %s25 = ssub.s32 0, 0
      %s26 = smul.u32 8, %s25
      %p27 = scmp.lt.s32.totalorder %s26, 7
      %s28 = scalar_select %p27, %s26, 7
      %s29 = smul.addr %s28, 4
      %s30 = scalar_lea.vmem %s2, %s29
      %s31 = ssub.s32 0, 0
      %s32 = smul.u32 8, %s31
    $region13: #{seq_tagger_forward.4} parent=1 // pred_fallthru
      _
    // Predicated region
    $region14: #{seq_tagger_forward.4} parent=1 // pred_check
      _
    $region15: #{seq_tagger_forward.4} parent=1 // pred_check_branch
      %34 = sbr.rel (0) target = $region17
    $region16: #{seq_tagger_forward.4} parent=1 // pred_region
      %s35 = ssub.s32 0, 0
      %s36 = smul.u32 8, %s35
      %p37 = scmp.lt.s32.totalorder %s36, 7
      %s38 = scalar_select %p37, %s36, 7
      %s39 = smul.addr %s38, 4
      %s40 = scalar_lea.vmem %s3, %s39
      %s41 = ssub.s32 0, 0
      %s42 = smul.u32 8, %s41
    $region17: #{seq_tagger_forward.4} parent=1 // pred_fallthru
      _
    // Predicated region
    $region18: #{seq_tagger_forward.4} parent=1 // pred_check
      _
    $region19: #{seq_tagger_forward.4} parent=1 // pred_check_branch
      %44 = sbr.rel (0) target = $region21
    $region20: #{seq_tagger_forward.4} parent=1 // pred_region
      _
    $region21: #{seq_tagger_forward.4} parent=1 // pred_fallthru
      _
    // Predicated region
    $region22: #{seq_tagger_forward.4} parent=1 // pred_check
      _
    $region23: #{seq_tagger_forward.4} parent=1 // pred_check_branch
      %46 = sbr.rel (0) target = $region25
    $region24: #{seq_tagger_forward.4} parent=1 // pred_region
      _
    $region25: #{seq_tagger_forward.4} parent=1 // pred_fallthru
      _
    // Predicated region
    $region26: #{seq_tagger_forward.4} parent=1 // pred_check
      _
    $region27: #{seq_tagger_forward.4} parent=1 // pred_check_branch
      %48 = sbr.rel (0) target = $region29
    $region28: #{seq_tagger_forward.4} parent=1 // pred_region
      _
    $region29: #{seq_tagger_forward.4} parent=1 // pred_fallthru
      _
    // Predicated region
    $region30: #{seq_tagger_forward.4} parent=1 // pred_check
      _
    $region31: #{seq_tagger_forward.4} parent=1 // pred_check_branch
      %50 = sbr.rel (0) target = $region33
    $region32: #{seq_tagger_forward.4} parent=1 // pred_region
      %s52 = ssub.s32 4096, 4096
      %53 = vsyncadd [#allocation7], %s52
      %s54 = sshll.u32 [#allocation6], 4
      %s55 = int_to_ptr.vmem [resolvable:$true] %s54
      %60 = dma.hbm_to_vmem [thread:$0]  %s7, 4096, %s55, [#allocation7], 256, 256, 16
    $region33: #{seq_tagger_forward.4} parent=1 // pred_fallthru
      _
    // Predicated region
    $region34: #{seq_tagger_forward.4} parent=1 // pred_check
      _
    $region35: #{seq_tagger_forward.4} parent=1 // pred_check_branch
      %62 = sbr.rel (0) target = $region37
    $region36: #{seq_tagger_forward.4} parent=1 // pred_region
      _
    $region37: #{seq_tagger_forward.4} parent=1 // pred_fallthru
      _
    // Predicated region
    $region38: #{seq_tagger_forward.4} parent=1 // pred_check
      _
    $region39: #{seq_tagger_forward.4} parent=1 // pred_check_branch
      %64 = sbr.rel (0) target = $region41
    $region40: #{seq_tagger_forward.4} parent=1 // pred_region
      %s66 = ssub.s32 64, 64
      %67 = vsyncadd [#allocation9], %s66
      %s69 = sshll.u32 [#allocation8], 4
      %s70 = int_to_ptr.vmem [resolvable:$true] %s69
      %72 = dma.hbm_to_vmem [thread:$0]  %s9, 64, %s70, [#allocation9]
    $region41: #{seq_tagger_forward.4} parent=1 // pred_fallthru
      _
    // Predicated region
    $region42: #{seq_tagger_forward.4} parent=1 // pred_check
      _
    $region43: #{seq_tagger_forward.4} parent=1 // pred_check_branch
      %74 = sbr.rel (0) target = $region45
    $region44: #{seq_tagger_forward.4} parent=1 // pred_region
      %75 = dma.done [#allocation7], 4096
    $region45: #{seq_tagger_forward.4} parent=1 // pred_fallthru
      _
    // Predicated region
    $region46: #{seq_tagger_forward.4} parent=1 // pred_check
      _
    $region47: #{seq_tagger_forward.4} parent=1 // pred_check_branch
      %77 = sbr.rel (0) target = $region49
    $region48: #{seq_tagger_forward.4} parent=1 // pred_region
      %78 = dma.done [#allocation9], 64
    $region49: #{seq_tagger_forward.4} parent=1 // pred_fallthru
      _
    %s79 = ssub.s32 0, 0
    %s80 = smul.u32 8, %s79
    %p81 = scmp.lt.s32.totalorder %s80, 7
    %s82 = scalar_select %p81, %s80, 7
    %s83 = smul.addr %s82, 4
    %s84 = scalar_lea.vmem %s2, %s83
    %s85 = ssub.s32 0, 0
    %s86 = smul.u32 8, %s85
    %p87 = scmp.lt.s32.totalorder %s86, 7
    %s88 = scalar_select %p87, %s86, 7
    %s89 = smul.addr %s88, 4
    %s90 = scalar_lea.vmem %s3, %s89
    %s91 = ssub.s32 0, 0
    %s92 = smul.u32 8, %s91
    %p93 = scmp.lt.s32.totalorder %s92, 7
    %s94 = scalar_select %p93, %s92, 7
    %s95 = smul.addr %s94, 4
    %s96 = scalar_lea.vmem %s11, %s95
    %s97 = ssub.s32 0, 0
    %s98 = smul.u32 8, %s97
    %p99 = scmp.lt.s32.totalorder %s98, 7
    %s100 = scalar_select %p99, %s98, 7
    %s101 = smul.addr %s100, 4
    %s102 = scalar_lea.vmem %s2, %s101
    %s103 = ssub.s32 0, 0
    %s104 = smul.u32 8, %s103
    %s105 = ssub.s32 0, 0
    %s106 = smul.u32 8, %s105
    %p107 = scmp.lt.s32.totalorder %s106, 7
    %s108 = scalar_select %p107, %s106, 7
    %s109 = smul.addr %s108, 4
    %s110 = scalar_lea.vmem %s3, %s109
    %s111 = ssub.s32 0, 0
    %s112 = smul.u32 8, %s111
    %s113 = ssub.s32 0, 0
    %s114 = smul.u32 8, %s113
    %p115 = scmp.lt.s32.totalorder %s114, 7
    %s116 = scalar_select %p115, %s114, 7
    %s117 = smul.addr %s116, 4
    %s118 = scalar_lea.vmem %s11, %s117
    %s119 = ssub.s32 0, 0
    %s120 = smul.u32 8, %s119
    %p122 = scmp.eq.s32.totalorder 0, 0
    // Predicated region
    $region50: #{seq_tagger_forward.4} parent=1 // pred_check
      %p123 = pneg %p122
    $region51: #{seq_tagger_forward.4} parent=1 // pred_check_branch
      %125 = sbr.rel (%p123) target = $region53
    $region52: #{seq_tagger_forward.4} parent=1 // pred_region
      %126 = vst [vmem:[#allocation4] sm:$0xff] 0.0
      %127 = vst [vmem:[#allocation4 + $0x8] sm:$0xff] 0.0
      %128 = vst [vmem:[#allocation5] sm:$0xff] 0.0
      %129 = vst [vmem:[#allocation5 + $0x8] sm:$0xff] 0.0
    $region53: #{seq_tagger_forward.4} parent=1 // pred_fallthru
      _
    %v130 = vld [vmem:[%s0] sm:$0xf]
    %v131 = vld [vmem:[%s0 + $0x4] sm:$0xf]
    %v132 = vld [vmem:[%s0 + $0x8] sm:$0xf]
    %v133 = vld [vmem:[%s0 + $0xc] sm:$0xf]
    %v134 = vld [vmem:[%s0 + $0x10] sm:$0xf]
    %v135 = vld [vmem:[%s0 + $0x14] sm:$0xf]
    %v136 = vld [vmem:[%s0 + $0x18] sm:$0xf]
    %v137 = vld [vmem:[%s0 + $0x1c] sm:$0xf]
    %v138 = vld [vmem:[%s4] sm:$0xff]
    %v139 = vld [vmem:[%s4 + $0x8] sm:$0xff]
    %v140 = vld [vmem:[%s4 + $0x10] sm:$0xff]
    %v141 = vld [vmem:[%s4 + $0x18] sm:$0xff]
    %v142 = vld [vmem:[%s4 + $0x20] sm:$0xff]
    %v143 = vld [vmem:[%s4 + $0x28] sm:$0xff]
    %v144 = vld [vmem:[%s4 + $0x30] sm:$0xff]
    %v145 = vld [vmem:[%s4 + $0x38] sm:$0xff]
    %v146 = vld [vmem:[%s4 + $0x40] sm:$0xff]
    %v147 = vld [vmem:[%s4 + $0x48] sm:$0xff]
    %v148 = vld [vmem:[%s4 + $0x50] sm:$0xff]
    %v149 = vld [vmem:[%s4 + $0x58] sm:$0xff]
    %v150 = vld [vmem:[%s4 + $0x60] sm:$0xff]
    %v151 = vld [vmem:[%s4 + $0x68] sm:$0xff]
    %v152 = vld [vmem:[%s4 + $0x70] sm:$0xff]
    %v153 = vld [vmem:[%s4 + $0x78] sm:$0xff]
    %v154 = vld [vmem:[%s4 + $0x80] sm:$0xff]
    %v155 = vld [vmem:[%s4 + $0x88] sm:$0xff]
    %v156 = vld [vmem:[%s4 + $0x90] sm:$0xff]
    %v157 = vld [vmem:[%s4 + $0x98] sm:$0xff]
    %v158 = vld [vmem:[%s4 + $0xa0] sm:$0xff]
    %v159 = vld [vmem:[%s4 + $0xa8] sm:$0xff]
    %v160 = vld [vmem:[%s4 + $0xb0] sm:$0xff]
    %v161 = vld [vmem:[%s4 + $0xb8] sm:$0xff]
    %v162 = vld [vmem:[%s4 + $0xc0] sm:$0xff]
    %v163 = vld [vmem:[%s4 + $0xc8] sm:$0xff]
    %v164 = vld [vmem:[%s4 + $0xd0] sm:$0xff]
    %v165 = vld [vmem:[%s4 + $0xd8] sm:$0xff]
    %v166 = vld [vmem:[%s4 + $0xe0] sm:$0xff]
    %v167 = vld [vmem:[%s4 + $0xe8] sm:$0xff]
    %v168 = vld [vmem:[%s4 + $0xf0] sm:$0xff]
    %v169 = vld [vmem:[%s4 + $0xf8] sm:$0xff]
    %v170 = vld [vmem:[%s1] sm:$0xf]
    %v171 = vld [vmem:[%s1 + $0x4] sm:$0xf]
    %v172 = vld [vmem:[%s1 + $0x8] sm:$0xf]
    %v173 = vld [vmem:[%s1 + $0xc] sm:$0xf]
    %v174 = vld [vmem:[%s1 + $0x10] sm:$0xf]
    %v175 = vld [vmem:[%s1 + $0x14] sm:$0xf]
    %v176 = vld [vmem:[%s1 + $0x18] sm:$0xf]
    %v177 = vld [vmem:[%s1 + $0x1c] sm:$0xf]
    %v178 = vld [vmem:[%s4 + $0x100] sm:$0xff]
    %v179 = vld [vmem:[%s4 + $0x108] sm:$0xff]
    %v180 = vld [vmem:[%s4 + $0x110] sm:$0xff]
    %v181 = vld [vmem:[%s4 + $0x118] sm:$0xff]
    %v182 = vld [vmem:[%s4 + $0x120] sm:$0xff]
    %v183 = vld [vmem:[%s4 + $0x128] sm:$0xff]
    %v184 = vld [vmem:[%s4 + $0x130] sm:$0xff]
    %v185 = vld [vmem:[%s4 + $0x138] sm:$0xff]
    %v186 = vld [vmem:[%s4 + $0x140] sm:$0xff]
    %v187 = vld [vmem:[%s4 + $0x148] sm:$0xff]
    %v188 = vld [vmem:[%s4 + $0x150] sm:$0xff]
    %v189 = vld [vmem:[%s4 + $0x158] sm:$0xff]
    %v190 = vld [vmem:[%s4 + $0x160] sm:$0xff]
    %v191 = vld [vmem:[%s4 + $0x168] sm:$0xff]
    %v192 = vld [vmem:[%s4 + $0x170] sm:$0xff]
    %v193 = vld [vmem:[%s4 + $0x178] sm:$0xff]
    %v194 = vld [vmem:[%s4 + $0x180] sm:$0xff]
    %v195 = vld [vmem:[%s4 + $0x188] sm:$0xff]
    %v196 = vld [vmem:[%s4 + $0x190] sm:$0xff]
    %v197 = vld [vmem:[%s4 + $0x198] sm:$0xff]
    %v198 = vld [vmem:[%s4 + $0x1a0] sm:$0xff]
    %v199 = vld [vmem:[%s4 + $0x1a8] sm:$0xff]
    %v200 = vld [vmem:[%s4 + $0x1b0] sm:$0xff]
    %v201 = vld [vmem:[%s4 + $0x1b8] sm:$0xff]
    %v202 = vld [vmem:[%s4 + $0x1c0] sm:$0xff]
    %v203 = vld [vmem:[%s4 + $0x1c8] sm:$0xff]
    %v204 = vld [vmem:[%s4 + $0x1d0] sm:$0xff]
    %v205 = vld [vmem:[%s4 + $0x1d8] sm:$0xff]
    %v206 = vld [vmem:[%s4 + $0x1e0] sm:$0xff]
    %v207 = vld [vmem:[%s4 + $0x1e8] sm:$0xff]
    %v208 = vld [vmem:[%s4 + $0x1f0] sm:$0xff]
    %v209 = vld [vmem:[%s4 + $0x1f8] sm:$0xff]
    %v218 = vunpack.c.l.b16 %v170
    %v219 = vunpack.c.l.b16 %v171
    %v220 = vunpack.c.l.b16 %v172
    %v221 = vunpack.c.l.b16 %v173
    %v222 = vunpack.c.l.b16 %v174
    %v223 = vunpack.c.l.b16 %v175
    %v224 = vunpack.c.l.b16 %v176
    %v225 = vunpack.c.l.b16 %v177
    %v226 = vpack.c.b16 %v219, %v218
    %v227 = vpack.c.b16 %v221, %v220
    %v228 = vpack.c.b16 %v223, %v222
    %v229 = vpack.c.b16 %v225, %v224
    %v266 = vunpack.c.l.b16 %v178
    %v267 = vunpack.c.h.b16 %v178
    %v268 = vunpack.c.l.b16 %v179
    %v269 = vunpack.c.h.b16 %v179
    %v270 = vunpack.c.l.b16 %v180
    %v271 = vunpack.c.h.b16 %v180
    %v272 = vunpack.c.l.b16 %v181
    %v273 = vunpack.c.h.b16 %v181
    %v274 = vunpack.c.l.b16 %v182
    %v275 = vunpack.c.h.b16 %v182
    %v276 = vunpack.c.l.b16 %v183
    %v277 = vunpack.c.h.b16 %v183
    %v278 = vunpack.c.l.b16 %v184
    %v279 = vunpack.c.h.b16 %v184
    %v280 = vunpack.c.l.b16 %v185
    %v281 = vunpack.c.h.b16 %v185
    %v282 = vunpack.c.l.b16 %v186
    %v283 = vunpack.c.h.b16 %v186
    %v284 = vunpack.c.l.b16 %v187
    %v285 = vunpack.c.h.b16 %v187
    %v286 = vunpack.c.l.b16 %v188
    %v287 = vunpack.c.h.b16 %v188
    %v288 = vunpack.c.l.b16 %v189
    %v289 = vunpack.c.h.b16 %v189
    %v290 = vunpack.c.l.b16 %v190
    %v291 = vunpack.c.h.b16 %v190
    %v292 = vunpack.c.l.b16 %v191
    %v293 = vunpack.c.h.b16 %v191
    %v294 = vunpack.c.l.b16 %v192
    %v295 = vunpack.c.h.b16 %v192
    %v296 = vunpack.c.l.b16 %v193
    %v297 = vunpack.c.h.b16 %v193
    %v298 = vunpack.c.l.b16 %v194
    %v299 = vunpack.c.h.b16 %v194
    %v300 = vunpack.c.l.b16 %v195
    %v301 = vunpack.c.h.b16 %v195
    %v302 = vunpack.c.l.b16 %v196
    %v303 = vunpack.c.h.b16 %v196
    %v304 = vunpack.c.l.b16 %v197
    %v305 = vunpack.c.h.b16 %v197
    %v306 = vunpack.c.l.b16 %v198
    %v307 = vunpack.c.h.b16 %v198
    %v308 = vunpack.c.l.b16 %v199
    %v309 = vunpack.c.h.b16 %v199
    %v310 = vunpack.c.l.b16 %v200
    %v311 = vunpack.c.h.b16 %v200
    %v312 = vunpack.c.l.b16 %v201
    %v313 = vunpack.c.h.b16 %v201
    %v314 = vunpack.c.l.b16 %v202
    %v315 = vunpack.c.h.b16 %v202
    %v316 = vunpack.c.l.b16 %v203
    %v317 = vunpack.c.h.b16 %v203
    %v318 = vunpack.c.l.b16 %v204
    %v319 = vunpack.c.h.b16 %v204
    %v320 = vunpack.c.l.b16 %v205
    %v321 = vunpack.c.h.b16 %v205
    %v322 = vunpack.c.l.b16 %v206
    %v323 = vunpack.c.h.b16 %v206
    %v324 = vunpack.c.l.b16 %v207
    %v325 = vunpack.c.h.b16 %v207
    %v326 = vunpack.c.l.b16 %v208
    %v327 = vunpack.c.h.b16 %v208
    %v328 = vunpack.c.l.b16 %v209
    %v329 = vunpack.c.h.b16 %v209
    %v330 = vpack.c.b16 %v270, %v266
    %v331 = vpack.c.b16 %v271, %v267
    %v332 = vpack.c.b16 %v272, %v268
    %v333 = vpack.c.b16 %v273, %v269
    %v334 = vpack.c.b16 %v278, %v274
    %v335 = vpack.c.b16 %v279, %v275
    %v336 = vpack.c.b16 %v280, %v276
    %v337 = vpack.c.b16 %v281, %v277
    %v338 = vpack.c.b16 %v286, %v282
    %v339 = vpack.c.b16 %v287, %v283
    %v340 = vpack.c.b16 %v288, %v284
    %v341 = vpack.c.b16 %v289, %v285
    %v342 = vpack.c.b16 %v294, %v290
    %v343 = vpack.c.b16 %v295, %v291
    %v344 = vpack.c.b16 %v296, %v292
    %v345 = vpack.c.b16 %v297, %v293
    %v346 = vpack.c.b16 %v302, %v298
    %v347 = vpack.c.b16 %v303, %v299
    %v348 = vpack.c.b16 %v304, %v300
    %v349 = vpack.c.b16 %v305, %v301
    %v350 = vpack.c.b16 %v310, %v306
    %v351 = vpack.c.b16 %v311, %v307
    %v352 = vpack.c.b16 %v312, %v308
    %v353 = vpack.c.b16 %v313, %v309
    %v354 = vpack.c.b16 %v318, %v314
    %v355 = vpack.c.b16 %v319, %v315
    %v356 = vpack.c.b16 %v320, %v316
    %v357 = vpack.c.b16 %v321, %v317
    %v358 = vpack.c.b16 %v326, %v322
    %v359 = vpack.c.b16 %v327, %v323
    %v360 = vpack.c.b16 %v328, %v324
    %v361 = vpack.c.b16 %v329, %v325
    %394 = vmatprep.subr.bf16.mxu0 %v331
    %395 = vmatpush1.bf16.msra.mxu0 %v330
    %396 = vmatprep.subr.bf16.mxu0 %v335
    %397 = vmatpush1.bf16.msra.mxu0 %v334
    %398 = vmatprep.subr.bf16.mxu0 %v339
    %399 = vmatpush1.bf16.msra.mxu0 %v338
    %400 = vmatprep.subr.bf16.mxu0 %v343
    %401 = vmatpush1.bf16.msra.mxu0 %v342
    %402 = vmatprep.subr.bf16.mxu0 %v347
    %403 = vmatpush1.bf16.msra.mxu0 %v346
    %404 = vmatprep.subr.bf16.mxu0 %v351
    %405 = vmatpush1.bf16.msra.mxu0 %v350
    %406 = vmatprep.subr.bf16.mxu0 %v355
    %407 = vmatpush1.bf16.msra.mxu0 %v354
    %408 = vmatprep.subr.bf16.mxu0 %v359
    %409 = vmatpush1.bf16.msra.mxu0 %v358
    %410 = vmatprep.subr.bf16.mxu0 0
    %411 = vmatpush1.bf16.msra.mxu0 0
    %412 = vmatprep.subr.bf16.mxu0 0
    %413 = vmatpush1.bf16.msra.mxu0 0
    %414 = vmatprep.subr.bf16.mxu0 0
    %415 = vmatpush1.bf16.msra.mxu0 0
    %416 = vmatprep.subr.bf16.mxu0 0
    %417 = vmatpush1.bf16.msra.mxu0 0
    %418 = vmatprep.subr.bf16.mxu0 0
    %419 = vmatpush1.bf16.msra.mxu0 0
    %420 = vmatprep.subr.bf16.mxu0 0
    %421 = vmatpush1.bf16.msra.mxu0 0
    %422 = vmatprep.subr.bf16.mxu0 0
    %423 = vmatpush1.bf16.msra.mxu0 0
    %424 = vmatprep.subr.bf16.mxu0 0
    %425 = vmatpush1.bf16.msra.mxu0 0
    %426 = vmatprep.mubr.bf16.mxu0 0
    %427 = vmatmul.mubr.bf16.gmra.mrb[0].mxu0 %v226
    %v428 = vpop.f32.mrb[0].mxu0
    %v429 = vadd.f32 0.0, %v428
    %v430 = vpop.f32.mrb[0].mxu0
    %v431 = vadd.f32 0.0, %v430
    %v432 = vpop.f32.mrb[0].mxu0
    %v433 = vadd.f32 0.0, %v432
    %v434 = vpop.f32.mrb[0].mxu0
    %v435 = vadd.f32 0.0, %v434
    %436 = vmatprep.mubr.bf16.mxu0 0
    %437 = vmatmul.mubr.bf16.gmra.mrb[0].mxu0 %v227
    %v438 = vpop.f32.mrb[0].mxu0
    %v439 = vadd.f32 0.0, %v438
    %v440 = vpop.f32.mrb[0].mxu0
    %v441 = vadd.f32 0.0, %v440
    %v442 = vpop.f32.mrb[0].mxu0
    %v443 = vadd.f32 0.0, %v442
    %v444 = vpop.f32.mrb[0].mxu0
    %v445 = vadd.f32 0.0, %v444
    %446 = vmatprep.mubr.bf16.mxu0 0
    %447 = vmatmul.mubr.bf16.gmra.mrb[0].mxu0 %v228
    %v448 = vpop.f32.mrb[0].mxu0
    %v449 = vadd.f32 0.0, %v448
    %v450 = vpop.f32.mrb[0].mxu0
    %v451 = vadd.f32 0.0, %v450
    %v452 = vpop.f32.mrb[0].mxu0
    %v453 = vadd.f32 0.0, %v452
    %v454 = vpop.f32.mrb[0].mxu0
    %v455 = vadd.f32 0.0, %v454
    %456 = vmatprep.mubr.bf16.mxu0 0
    %457 = vmatmul.mubr.bf16.gmra.mrb[0].mxu0 %v229
    %v458 = vpop.f32.mrb[0].mxu0
    %v459 = vadd.f32 0.0, %v458
    %v460 = vpop.f32.mrb[0].mxu0
    %v461 = vadd.f32 0.0, %v460
    %v462 = vpop.f32.mrb[0].mxu0
    %v463 = vadd.f32 0.0, %v462
    %v464 = vpop.f32.mrb[0].mxu0
    %v465 = vadd.f32 0.0, %v464
    %466 = vdwg.mxu0
    %467 = vmatprep.subr.bf16.mxu0 %v333
    %468 = vmatpush1.bf16.msra.mxu0 %v332
    %469 = vmatprep.subr.bf16.mxu0 %v337
    %470 = vmatpush1.bf16.msra.mxu0 %v336
    %471 = vmatprep.subr.bf16.mxu0 %v341
    %472 = vmatpush1.bf16.msra.mxu0 %v340
    %473 = vmatprep.subr.bf16.mxu0 %v345
    %474 = vmatpush1.bf16.msra.mxu0 %v344
    %475 = vmatprep.subr.bf16.mxu0 %v349
    %476 = vmatpush1.bf16.msra.mxu0 %v348
    %477 = vmatprep.subr.bf16.mxu0 %v353
    %478 = vmatpush1.bf16.msra.mxu0 %v352
    %479 = vmatprep.subr.bf16.mxu0 %v357
    %480 = vmatpush1.bf16.msra.mxu0 %v356
    %481 = vmatprep.subr.bf16.mxu0 %v361
    %482 = vmatpush1.bf16.msra.mxu0 %v360
    %483 = vmatprep.subr.bf16.mxu0 0
    %484 = vmatpush1.bf16.msra.mxu0 0
    %485 = vmatprep.subr.bf16.mxu0 0
    %486 = vmatpush1.bf16.msra.mxu0 0
    %487 = vmatprep.subr.bf16.mxu0 0
    %488 = vmatpush1.bf16.msra.mxu0 0
    %489 = vmatprep.subr.bf16.mxu0 0
    %490 = vmatpush1.bf16.msra.mxu0 0
    %491 = vmatprep.subr.bf16.mxu0 0
    %492 = vmatpush1.bf16.msra.mxu0 0
    %493 = vmatprep.subr.bf16.mxu0 0
    %494 = vmatpush1.bf16.msra.mxu0 0
    %495 = vmatprep.subr.bf16.mxu0 0
    %496 = vmatpush1.bf16.msra.mxu0 0
    %497 = vmatprep.subr.bf16.mxu0 0
    %498 = vmatpush1.bf16.msra.mxu0 0
    %499 = vmatprep.mubr.bf16.mxu0 0
    %500 = vmatmul.mubr.bf16.gmra.mrb[0].mxu0 %v226
    %v501 = vpop.f32.mrb[0].mxu0
    %v502 = vadd.f32 0.0, %v501
    %v503 = vpop.f32.mrb[0].mxu0
    %v504 = vadd.f32 0.0, %v503
    %v505 = vpop.f32.mrb[0].mxu0
    %v506 = vadd.f32 0.0, %v505
    %v507 = vpop.f32.mrb[0].mxu0
    %v508 = vadd.f32 0.0, %v507
    %509 = vmatprep.mubr.bf16.mxu0 0
    %510 = vmatmul.mubr.bf16.gmra.mrb[0].mxu0 %v227
    %v511 = vpop.f32.mrb[0].mxu0
    %v512 = vadd.f32 0.0, %v511
    %v513 = vpop.f32.mrb[0].mxu0
    %v514 = vadd.f32 0.0, %v513
    %v515 = vpop.f32.mrb[0].mxu0
    %v516 = vadd.f32 0.0, %v515
    %v517 = vpop.f32.mrb[0].mxu0
    %v518 = vadd.f32 0.0, %v517
    %519 = vmatprep.mubr.bf16.mxu0 0
    %520 = vmatmul.mubr.bf16.gmra.mrb[0].mxu0 %v228
    %v521 = vpop.f32.mrb[0].mxu0
    %v522 = vadd.f32 0.0, %v521
    %v523 = vpop.f32.mrb[0].mxu0
    %v524 = vadd.f32 0.0, %v523
    %v525 = vpop.f32.mrb[0].mxu0
    %v526 = vadd.f32 0.0, %v525
    %v527 = vpop.f32.mrb[0].mxu0
    %v528 = vadd.f32 0.0, %v527
    %529 = vmatprep.mubr.bf16.mxu0 0
    %530 = vmatmul.mubr.bf16.gmra.mrb[0].mxu0 %v229
    %v531 = vpop.f32.mrb[0].mxu0
    %v532 = vadd.f32 0.0, %v531
    %v533 = vpop.f32.mrb[0].mxu0
    %v534 = vadd.f32 0.0, %v533
    %v535 = vpop.f32.mrb[0].mxu0
    %v536 = vadd.f32 0.0, %v535
    %v537 = vpop.f32.mrb[0].mxu0
    %v538 = vadd.f32 0.0, %v537
    %539 = vdwg.mxu0
    %v548 = vunpack.c.l.b16 %v130
    %v549 = vunpack.c.l.b16 %v131
    %v550 = vunpack.c.l.b16 %v132
    %v551 = vunpack.c.l.b16 %v133
    %v552 = vunpack.c.l.b16 %v134
    %v553 = vunpack.c.l.b16 %v135
    %v554 = vunpack.c.l.b16 %v136
    %v555 = vunpack.c.l.b16 %v137
    %v556 = vpack.c.b16 %v549, %v548
    %v557 = vpack.c.b16 %v551, %v550
    %v558 = vpack.c.b16 %v553, %v552
    %v559 = vpack.c.b16 %v555, %v554
    %v596 = vunpack.c.l.b16 %v138
    %v597 = vunpack.c.h.b16 %v138
    %v598 = vunpack.c.l.b16 %v139
    %v599 = vunpack.c.h.b16 %v139
    %v600 = vunpack.c.l.b16 %v140
    %v601 = vunpack.c.h.b16 %v140
    %v602 = vunpack.c.l.b16 %v141
    %v603 = vunpack.c.h.b16 %v141
    %v604 = vunpack.c.l.b16 %v142
    %v605 = vunpack.c.h.b16 %v142
    %v606 = vunpack.c.l.b16 %v143
    %v607 = vunpack.c.h.b16 %v143
    %v608 = vunpack.c.l.b16 %v144
    %v609 = vunpack.c.h.b16 %v144
    %v610 = vunpack.c.l.b16 %v145
    %v611 = vunpack.c.h.b16 %v145
    %v612 = vunpack.c.l.b16 %v146
    %v613 = vunpack.c.h.b16 %v146
    %v614 = vunpack.c.l.b16 %v147
    %v615 = vunpack.c.h.b16 %v147
    %v616 = vunpack.c.l.b16 %v148
    %v617 = vunpack.c.h.b16 %v148
    %v618 = vunpack.c.l.b16 %v149
    %v619 = vunpack.c.h.b16 %v149
    %v620 = vunpack.c.l.b16 %v150
    %v621 = vunpack.c.h.b16 %v150
    %v622 = vunpack.c.l.b16 %v151
    %v623 = vunpack.c.h.b16 %v151
    %v624 = vunpack.c.l.b16 %v152
    %v625 = vunpack.c.h.b16 %v152
    %v626 = vunpack.c.l.b16 %v153
    %v627 = vunpack.c.h.b16 %v153
    %v628 = vunpack.c.l.b16 %v154
    %v629 = vunpack.c.h.b16 %v154
    %v630 = vunpack.c.l.b16 %v155
    %v631 = vunpack.c.h.b16 %v155
    %v632 = vunpack.c.l.b16 %v156
    %v633 = vunpack.c.h.b16 %v156
    %v634 = vunpack.c.l.b16 %v157
    %v635 = vunpack.c.h.b16 %v157
    %v636 = vunpack.c.l.b16 %v158
    %v637 = vunpack.c.h.b16 %v158
    %v638 = vunpack.c.l.b16 %v159
    %v639 = vunpack.c.h.b16 %v159
    %v640 = vunpack.c.l.b16 %v160
    %v641 = vunpack.c.h.b16 %v160
    %v642 = vunpack.c.l.b16 %v161
    %v643 = vunpack.c.h.b16 %v161
    %v644 = vunpack.c.l.b16 %v162
    %v645 = vunpack.c.h.b16 %v162
    %v646 = vunpack.c.l.b16 %v163
    %v647 = vunpack.c.h.b16 %v163
    %v648 = vunpack.c.l.b16 %v164
    %v649 = vunpack.c.h.b16 %v164
    %v650 = vunpack.c.l.b16 %v165
    %v651 = vunpack.c.h.b16 %v165
    %v652 = vunpack.c.l.b16 %v166
    %v653 = vunpack.c.h.b16 %v166
    %v654 = vunpack.c.l.b16 %v167
    %v655 = vunpack.c.h.b16 %v167
    %v656 = vunpack.c.l.b16 %v168
    %v657 = vunpack.c.h.b16 %v168
    %v658 = vunpack.c.l.b16 %v169
    %v659 = vunpack.c.h.b16 %v169
    %v660 = vpack.c.b16 %v600, %v596
    %v661 = vpack.c.b16 %v601, %v597
    %v662 = vpack.c.b16 %v602, %v598
    %v663 = vpack.c.b16 %v603, %v599
    %v664 = vpack.c.b16 %v608, %v604
    %v665 = vpack.c.b16 %v609, %v605
    %v666 = vpack.c.b16 %v610, %v606
    %v667 = vpack.c.b16 %v611, %v607
    %v668 = vpack.c.b16 %v616, %v612
    %v669 = vpack.c.b16 %v617, %v613
    %v670 = vpack.c.b16 %v618, %v614
    %v671 = vpack.c.b16 %v619, %v615
    %v672 = vpack.c.b16 %v624, %v620
    %v673 = vpack.c.b16 %v625, %v621
    %v674 = vpack.c.b16 %v626, %v622
    %v675 = vpack.c.b16 %v627, %v623
    %v676 = vpack.c.b16 %v632, %v628
    %v677 = vpack.c.b16 %v633, %v629
    %v678 = vpack.c.b16 %v634, %v630
    %v679 = vpack.c.b16 %v635, %v631
    %v680 = vpack.c.b16 %v640, %v636
    %v681 = vpack.c.b16 %v641, %v637
    %v682 = vpack.c.b16 %v642, %v638
    %v683 = vpack.c.b16 %v643, %v639
    %v684 = vpack.c.b16 %v648, %v644
    %v685 = vpack.c.b16 %v649, %v645
    %v686 = vpack.c.b16 %v650, %v646
    %v687 = vpack.c.b16 %v651, %v647
    %v688 = vpack.c.b16 %v656, %v652
    %v689 = vpack.c.b16 %v657, %v653
    %v690 = vpack.c.b16 %v658, %v654
    %v691 = vpack.c.b16 %v659, %v655
    %724 = vmatprep.subr.bf16.mxu0 %v661
    %725 = vmatpush1.bf16.msra.mxu0 %v660
    %726 = vmatprep.subr.bf16.mxu0 %v665
    %727 = vmatpush1.bf16.msra.mxu0 %v664
    %728 = vmatprep.subr.bf16.mxu0 %v669
    %729 = vmatpush1.bf16.msra.mxu0 %v668
    %730 = vmatprep.subr.bf16.mxu0 %v673
    %731 = vmatpush1.bf16.msra.mxu0 %v672
    %732 = vmatprep.subr.bf16.mxu0 %v677
    %733 = vmatpush1.bf16.msra.mxu0 %v676
    %734 = vmatprep.subr.bf16.mxu0 %v681
    %735 = vmatpush1.bf16.msra.mxu0 %v680
    %736 = vmatprep.subr.bf16.mxu0 %v685
    %737 = vmatpush1.bf16.msra.mxu0 %v684
    %738 = vmatprep.subr.bf16.mxu0 %v689
    %739 = vmatpush1.bf16.msra.mxu0 %v688
    %740 = vmatprep.subr.bf16.mxu0 0
    %741 = vmatpush1.bf16.msra.mxu0 0
    %742 = vmatprep.subr.bf16.mxu0 0
    %743 = vmatpush1.bf16.msra.mxu0 0
    %744 = vmatprep.subr.bf16.mxu0 0
    %745 = vmatpush1.bf16.msra.mxu0 0
    %746 = vmatprep.subr.bf16.mxu0 0
    %747 = vmatpush1.bf16.msra.mxu0 0
    %748 = vmatprep.subr.bf16.mxu0 0
    %749 = vmatpush1.bf16.msra.mxu0 0
    %750 = vmatprep.subr.bf16.mxu0 0
    %751 = vmatpush1.bf16.msra.mxu0 0
    %752 = vmatprep.subr.bf16.mxu0 0
    %753 = vmatpush1.bf16.msra.mxu0 0
    %754 = vmatprep.subr.bf16.mxu0 0
    %755 = vmatpush1.bf16.msra.mxu0 0
    %756 = vmatprep.mubr.bf16.mxu0 0
    %757 = vmatmul.mubr.bf16.gmra.mrb[0].mxu0 %v556
    %v758 = vpop.f32.mrb[0].mxu0
    %v759 = vadd.f32 %v429, %v758
    %v760 = vpop.f32.mrb[0].mxu0
    %v761 = vadd.f32 %v431, %v760
    %v762 = vpop.f32.mrb[0].mxu0
    %v763 = vadd.f32 %v433, %v762
    %v764 = vpop.f32.mrb[0].mxu0
    %v765 = vadd.f32 %v435, %v764
    %766 = vmatprep.mubr.bf16.mxu0 0
    %767 = vmatmul.mubr.bf16.gmra.mrb[0].mxu0 %v557
    %v768 = vpop.f32.mrb[0].mxu0
    %v769 = vadd.f32 %v439, %v768
    %v770 = vpop.f32.mrb[0].mxu0
    %v771 = vadd.f32 %v441, %v770
    %v772 = vpop.f32.mrb[0].mxu0
    %v773 = vadd.f32 %v443, %v772
    %v774 = vpop.f32.mrb[0].mxu0
    %v775 = vadd.f32 %v445, %v774
    %776 = vmatprep.mubr.bf16.mxu0 0
    %777 = vmatmul.mubr.bf16.gmra.mrb[0].mxu0 %v558
    %v778 = vpop.f32.mrb[0].mxu0
    %v779 = vadd.f32 %v449, %v778
    %v780 = vpop.f32.mrb[0].mxu0
    %v781 = vadd.f32 %v451, %v780
    %v782 = vpop.f32.mrb[0].mxu0
    %v783 = vadd.f32 %v453, %v782
    %v784 = vpop.f32.mrb[0].mxu0
    %v785 = vadd.f32 %v455, %v784
    %786 = vmatprep.mubr.bf16.mxu0 0
    %787 = vmatmul.mubr.bf16.gmra.mrb[0].mxu0 %v559
    %v788 = vpop.f32.mrb[0].mxu0
    %v789 = vadd.f32 %v459, %v788
    %v790 = vpop.f32.mrb[0].mxu0
    %v791 = vadd.f32 %v461, %v790
    %v792 = vpop.f32.mrb[0].mxu0
    %v793 = vadd.f32 %v463, %v792
    %v794 = vpop.f32.mrb[0].mxu0
    %v795 = vadd.f32 %v465, %v794
    %796 = vdwg.mxu0
    %797 = vmatprep.subr.bf16.mxu0 %v663
    %798 = vmatpush1.bf16.msra.mxu0 %v662
    %799 = vmatprep.subr.bf16.mxu0 %v667
    %800 = vmatpush1.bf16.msra.mxu0 %v666
    %801 = vmatprep.subr.bf16.mxu0 %v671
    %802 = vmatpush1.bf16.msra.mxu0 %v670
    %803 = vmatprep.subr.bf16.mxu0 %v675
    %804 = vmatpush1.bf16.msra.mxu0 %v674
    %805 = vmatprep.subr.bf16.mxu0 %v679
    %806 = vmatpush1.bf16.msra.mxu0 %v678
    %807 = vmatprep.subr.bf16.mxu0 %v683
    %808 = vmatpush1.bf16.msra.mxu0 %v682
    %809 = vmatprep.subr.bf16.mxu0 %v687
    %810 = vmatpush1.bf16.msra.mxu0 %v686
    %811 = vmatprep.subr.bf16.mxu0 %v691
    %812 = vmatpush1.bf16.msra.mxu0 %v690
    %813 = vmatprep.subr.bf16.mxu0 0
    %814 = vmatpush1.bf16.msra.mxu0 0
    %815 = vmatprep.subr.bf16.mxu0 0
    %816 = vmatpush1.bf16.msra.mxu0 0
    %817 = vmatprep.subr.bf16.mxu0 0
    %818 = vmatpush1.bf16.msra.mxu0 0
    %819 = vmatprep.subr.bf16.mxu0 0
    %820 = vmatpush1.bf16.msra.mxu0 0
    %821 = vmatprep.subr.bf16.mxu0 0
    %822 = vmatpush1.bf16.msra.mxu0 0
    %823 = vmatprep.subr.bf16.mxu0 0
    %824 = vmatpush1.bf16.msra.mxu0 0
    %825 = vmatprep.subr.bf16.mxu0 0
    %826 = vmatpush1.bf16.msra.mxu0 0
    %827 = vmatprep.subr.bf16.mxu0 0
    %828 = vmatpush1.bf16.msra.mxu0 0
    %829 = vmatprep.mubr.bf16.mxu0 0
    %830 = vmatmul.mubr.bf16.gmra.mrb[0].mxu0 %v556
    %v831 = vpop.f32.mrb[0].mxu0
    %v832 = vadd.f32 %v502, %v831
    %v833 = vpop.f32.mrb[0].mxu0
    %v834 = vadd.f32 %v504, %v833
    %v835 = vpop.f32.mrb[0].mxu0
    %v836 = vadd.f32 %v506, %v835
    %v837 = vpop.f32.mrb[0].mxu0
    %v838 = vadd.f32 %v508, %v837
    %839 = vmatprep.mubr.bf16.mxu0 0
    %840 = vmatmul.mubr.bf16.gmra.mrb[0].mxu0 %v557
    %v841 = vpop.f32.mrb[0].mxu0
    %v842 = vadd.f32 %v512, %v841
    %v843 = vpop.f32.mrb[0].mxu0
    %v844 = vadd.f32 %v514, %v843
    %v845 = vpop.f32.mrb[0].mxu0
    %v846 = vadd.f32 %v516, %v845
    %v847 = vpop.f32.mrb[0].mxu0
    %v848 = vadd.f32 %v518, %v847
    %849 = vmatprep.mubr.bf16.mxu0 0
    %850 = vmatmul.mubr.bf16.gmra.mrb[0].mxu0 %v558
    %v851 = vpop.f32.mrb[0].mxu0
    %v852 = vadd.f32 %v522, %v851
    %v853 = vpop.f32.mrb[0].mxu0
    %v854 = vadd.f32 %v524, %v853
    %v855 = vpop.f32.mrb[0].mxu0
    %v856 = vadd.f32 %v526, %v855
    %v857 = vpop.f32.mrb[0].mxu0
    %v858 = vadd.f32 %v528, %v857
    %859 = vmatprep.mubr.bf16.mxu0 0
    %860 = vmatmul.mubr.bf16.gmra.mrb[0].mxu0 %v559
    %v861 = vpop.f32.mrb[0].mxu0
    %v862 = vadd.f32 %v532, %v861
    %v863 = vpop.f32.mrb[0].mxu0
    %v864 = vadd.f32 %v534, %v863
    %v865 = vpop.f32.mrb[0].mxu0
    %v866 = vadd.f32 %v536, %v865
    %v867 = vpop.f32.mrb[0].mxu0
    %v868 = vadd.f32 %v538, %v867
    %869 = vdwg.mxu0
    %v870 = vld [vmem:[%s8] sm:$0xf]
    %v872 = vlaneseq
    %v873 = vshrl.u32 %v872, 7
    %v874 = vsub.s32 0, %v873
    %v875 = vrot.slane %v870, %v874
    %v876 = vlaneseq
    %v877 = vshrl.u32 %v876, 7
    %v878 = vsub.s32 1, %v877
    %v879 = vrot.slane %v870, %v878
    %v880 = vlaneseq
    %v881 = vshrl.u32 %v880, 7
    %v882 = vsub.s32 2, %v881
    %v883 = vrot.slane %v870, %v882
    %v884 = vlaneseq
    %v885 = vshrl.u32 %v884, 7
    %v886 = vsub.s32 3, %v885
    %v887 = vrot.slane %v870, %v886
    %v892 = vadd.f32 %v759, %v875
    %v893 = vadd.f32 %v761, %v879
    %v894 = vadd.f32 %v832, %v883
    %v895 = vadd.f32 %v834, %v887
    %v896 = vadd.f32 %v763, %v875
    %v897 = vadd.f32 %v765, %v879
    %v898 = vadd.f32 %v836, %v883
    %v899 = vadd.f32 %v838, %v887
    %v900 = vadd.f32 %v769, %v875
    %v901 = vadd.f32 %v771, %v879
    %v902 = vadd.f32 %v842, %v883
    %v903 = vadd.f32 %v844, %v887
    %v904 = vadd.f32 %v773, %v875
    %v905 = vadd.f32 %v775, %v879
    %v906 = vadd.f32 %v846, %v883
    %v907 = vadd.f32 %v848, %v887
    %v908 = vadd.f32 %v779, %v875
    %v909 = vadd.f32 %v781, %v879
    %v910 = vadd.f32 %v852, %v883
    %v911 = vadd.f32 %v854, %v887
    %v912 = vadd.f32 %v783, %v875
    %v913 = vadd.f32 %v785, %v879
    %v914 = vadd.f32 %v856, %v883
    %v915 = vadd.f32 %v858, %v887
    %v916 = vadd.f32 %v789, %v875
    %v917 = vadd.f32 %v791, %v879
    %v918 = vadd.f32 %v862, %v883
    %v919 = vadd.f32 %v864, %v887
    %v920 = vadd.f32 %v793, %v875
    %v921 = vadd.f32 %v795, %v879
    %v922 = vadd.f32 %v866, %v883
    %v923 = vadd.f32 %v868, %v887
    %924 = vst [vmem:[#allocation2] sm:$0xff] %v892
    %925 = vst [vmem:[#allocation2 + $0x8] sm:$0xff] %v893
    %926 = vst [vmem:[#allocation2 + $0x10] sm:$0xff] %v894
    %927 = vst [vmem:[#allocation2 + $0x18] sm:$0xff] %v895
    %928 = vst [vmem:[#allocation2 + $0x20] sm:$0xff] %v896
    %929 = vst [vmem:[#allocation2 + $0x28] sm:$0xff] %v897
    %930 = vst [vmem:[#allocation2 + $0x30] sm:$0xff] %v898
    %931 = vst [vmem:[#allocation2 + $0x38] sm:$0xff] %v899
    %932 = vst [vmem:[#allocation2 + $0x40] sm:$0xff] %v900
    %933 = vst [vmem:[#allocation2 + $0x48] sm:$0xff] %v901
    %934 = vst [vmem:[#allocation2 + $0x50] sm:$0xff] %v902
    %935 = vst [vmem:[#allocation2 + $0x58] sm:$0xff] %v903
    %936 = vst [vmem:[#allocation2 + $0x60] sm:$0xff] %v904
    %937 = vst [vmem:[#allocation2 + $0x68] sm:$0xff] %v905
    %938 = vst [vmem:[#allocation2 + $0x70] sm:$0xff] %v906
    %939 = vst [vmem:[#allocation2 + $0x78] sm:$0xff] %v907
    %940 = vst [vmem:[#allocation2 + $0x80] sm:$0xff] %v908
    %941 = vst [vmem:[#allocation2 + $0x88] sm:$0xff] %v909
    %942 = vst [vmem:[#allocation2 + $0x90] sm:$0xff] %v910
    %943 = vst [vmem:[#allocation2 + $0x98] sm:$0xff] %v911
    %944 = vst [vmem:[#allocation2 + $0xa0] sm:$0xff] %v912
    %945 = vst [vmem:[#allocation2 + $0xa8] sm:$0xff] %v913
    %946 = vst [vmem:[#allocation2 + $0xb0] sm:$0xff] %v914
    %947 = vst [vmem:[#allocation2 + $0xb8] sm:$0xff] %v915
    %948 = vst [vmem:[#allocation2 + $0xc0] sm:$0xff] %v916
    %949 = vst [vmem:[#allocation2 + $0xc8] sm:$0xff] %v917
    %950 = vst [vmem:[#allocation2 + $0xd0] sm:$0xff] %v918
    %951 = vst [vmem:[#allocation2 + $0xd8] sm:$0xff] %v919
    %952 = vst [vmem:[#allocation2 + $0xe0] sm:$0xff] %v920
    %953 = vst [vmem:[#allocation2 + $0xe8] sm:$0xff] %v921
    %954 = vst [vmem:[#allocation2 + $0xf0] sm:$0xff] %v922
    %955 = vst [vmem:[#allocation2 + $0xf8] sm:$0xff] %v923
    %v956 = vld [vmem:[%s102] sm:$0xf]
    %v957 = vld [vmem:[%s102 + $0x4] sm:$0xf]
    %v958 = vld [vmem:[%s102 + $0x8] sm:$0xf]
    %v959 = vld [vmem:[%s102 + $0xc] sm:$0xf]
    %v960 = vld [vmem:[%s102 + $0x10] sm:$0xf]
    %v961 = vld [vmem:[%s102 + $0x14] sm:$0xf]
    %v962 = vld [vmem:[%s102 + $0x18] sm:$0xf]
    %v963 = vld [vmem:[%s102 + $0x1c] sm:$0xf]
    %v964 = vld [vmem:[%s5] sm:$0xff]
    %v965 = vld [vmem:[%s5 + $0x8] sm:$0xff]
    %v966 = vld [vmem:[%s5 + $0x10] sm:$0xff]
    %v967 = vld [vmem:[%s5 + $0x18] sm:$0xff]
    %v968 = vld [vmem:[%s5 + $0x20] sm:$0xff]
    %v969 = vld [vmem:[%s5 + $0x28] sm:$0xff]
    %v970 = vld [vmem:[%s5 + $0x30] sm:$0xff]
    %v971 = vld [vmem:[%s5 + $0x38] sm:$0xff]
    %v972 = vld [vmem:[%s5 + $0x40] sm:$0xff]
    %v973 = vld [vmem:[%s5 + $0x48] sm:$0xff]
    %v974 = vld [vmem:[%s5 + $0x50] sm:$0xff]
    %v975 = vld [vmem:[%s5 + $0x58] sm:$0xff]
    %v976 = vld [vmem:[%s5 + $0x60] sm:$0xff]
    %v977 = vld [vmem:[%s5 + $0x68] sm:$0xff]
    %v978 = vld [vmem:[%s5 + $0x70] sm:$0xff]
    %v979 = vld [vmem:[%s5 + $0x78] sm:$0xff]
    %v980 = vld [vmem:[%s5 + $0x80] sm:$0xff]
    %v981 = vld [vmem:[%s5 + $0x88] sm:$0xff]
    %v982 = vld [vmem:[%s5 + $0x90] sm:$0xff]
    %v983 = vld [vmem:[%s5 + $0x98] sm:$0xff]
    %v984 = vld [vmem:[%s5 + $0xa0] sm:$0xff]
    %v985 = vld [vmem:[%s5 + $0xa8] sm:$0xff]
    %v986 = vld [vmem:[%s5 + $0xb0] sm:$0xff]
    %v987 = vld [vmem:[%s5 + $0xb8] sm:$0xff]
    %v988 = vld [vmem:[%s5 + $0xc0] sm:$0xff]
    %v989 = vld [vmem:[%s5 + $0xc8] sm:$0xff]
    %v990 = vld [vmem:[%s5 + $0xd0] sm:$0xff]
    %v991 = vld [vmem:[%s5 + $0xd8] sm:$0xff]
    %v992 = vld [vmem:[%s5 + $0xe0] sm:$0xff]
    %v993 = vld [vmem:[%s5 + $0xe8] sm:$0xff]
    %v994 = vld [vmem:[%s5 + $0xf0] sm:$0xff]
    %v995 = vld [vmem:[%s5 + $0xf8] sm:$0xff]
    %v996 = vld [vmem:[%s110] sm:$0xf]
    %v997 = vld [vmem:[%s110 + $0x4] sm:$0xf]
    %v998 = vld [vmem:[%s110 + $0x8] sm:$0xf]
    %v999 = vld [vmem:[%s110 + $0xc] sm:$0xf]
    %v1000 = vld [vmem:[%s110 + $0x10] sm:$0xf]
    %v1001 = vld [vmem:[%s110 + $0x14] sm:$0xf]
    %v1002 = vld [vmem:[%s110 + $0x18] sm:$0xf]
    %v1003 = vld [vmem:[%s110 + $0x1c] sm:$0xf]
    %v1004 = vld [vmem:[%s5 + $0x100] sm:$0xff]
    %v1005 = vld [vmem:[%s5 + $0x108] sm:$0xff]
    %v1006 = vld [vmem:[%s5 + $0x110] sm:$0xff]
    %v1007 = vld [vmem:[%s5 + $0x118] sm:$0xff]
    %v1008 = vld [vmem:[%s5 + $0x120] sm:$0xff]
    %v1009 = vld [vmem:[%s5 + $0x128] sm:$0xff]
    %v1010 = vld [vmem:[%s5 + $0x130] sm:$0xff]
    %v1011 = vld [vmem:[%s5 + $0x138] sm:$0xff]
    %v1012 = vld [vmem:[%s5 + $0x140] sm:$0xff]
    %v1013 = vld [vmem:[%s5 + $0x148] sm:$0xff]
    %v1014 = vld [vmem:[%s5 + $0x150] sm:$0xff]
    %v1015 = vld [vmem:[%s5 + $0x158] sm:$0xff]
    %v1016 = vld [vmem:[%s5 + $0x160] sm:$0xff]
    %v1017 = vld [vmem:[%s5 + $0x168] sm:$0xff]
    %v1018 = vld [vmem:[%s5 + $0x170] sm:$0xff]
    %v1019 = vld [vmem:[%s5 + $0x178] sm:$0xff]
    %v1020 = vld [vmem:[%s5 + $0x180] sm:$0xff]
    %v1021 = vld [vmem:[%s5 + $0x188] sm:$0xff]
    %v1022 = vld [vmem:[%s5 + $0x190] sm:$0xff]
    %v1023 = vld [vmem:[%s5 + $0x198] sm:$0xff]
    %v1024 = vld [vmem:[%s5 + $0x1a0] sm:$0xff]
    %v1025 = vld [vmem:[%s5 + $0x1a8] sm:$0xff]
    %v1026 = vld [vmem:[%s5 + $0x1b0] sm:$0xff]
    %v1027 = vld [vmem:[%s5 + $0x1b8] sm:$0xff]
    %v1028 = vld [vmem:[%s5 + $0x1c0] sm:$0xff]
    %v1029 = vld [vmem:[%s5 + $0x1c8] sm:$0xff]
    %v1030 = vld [vmem:[%s5 + $0x1d0] sm:$0xff]
    %v1031 = vld [vmem:[%s5 + $0x1d8] sm:$0xff]
    %v1032 = vld [vmem:[%s5 + $0x1e0] sm:$0xff]
    %v1033 = vld [vmem:[%s5 + $0x1e8] sm:$0xff]
    %v1034 = vld [vmem:[%s5 + $0x1f0] sm:$0xff]
    %v1035 = vld [vmem:[%s5 + $0x1f8] sm:$0xff]
    %v1044 = vunpack.c.l.b16 %v996
    %v1045 = vunpack.c.l.b16 %v997
    %v1046 = vunpack.c.l.b16 %v998
    %v1047 = vunpack.c.l.b16 %v999
    %v1048 = vunpack.c.l.b16 %v1000
    %v1049 = vunpack.c.l.b16 %v1001
    %v1050 = vunpack.c.l.b16 %v1002
    %v1051 = vunpack.c.l.b16 %v1003
    %v1052 = vpack.c.b16 %v1045, %v1044
    %v1053 = vpack.c.b16 %v1047, %v1046
    %v1054 = vpack.c.b16 %v1049, %v1048
    %v1055 = vpack.c.b16 %v1051, %v1050
    %v1092 = vunpack.c.l.b16 %v1004
    %v1093 = vunpack.c.h.b16 %v1004
    %v1094 = vunpack.c.l.b16 %v1005
    %v1095 = vunpack.c.h.b16 %v1005
    %v1096 = vunpack.c.l.b16 %v1006
    %v1097 = vunpack.c.h.b16 %v1006
    %v1098 = vunpack.c.l.b16 %v1007
    %v1099 = vunpack.c.h.b16 %v1007
    %v1100 = vunpack.c.l.b16 %v1008
    %v1101 = vunpack.c.h.b16 %v1008
    %v1102 = vunpack.c.l.b16 %v1009
    %v1103 = vunpack.c.h.b16 %v1009
    %v1104 = vunpack.c.l.b16 %v1010
    %v1105 = vunpack.c.h.b16 %v1010
    %v1106 = vunpack.c.l.b16 %v1011
    %v1107 = vunpack.c.h.b16 %v1011
    %v1108 = vunpack.c.l.b16 %v1012
    %v1109 = vunpack.c.h.b16 %v1012
    %v1110 = vunpack.c.l.b16 %v1013
    %v1111 = vunpack.c.h.b16 %v1013
    %v1112 = vunpack.c.l.b16 %v1014
    %v1113 = vunpack.c.h.b16 %v1014
    %v1114 = vunpack.c.l.b16 %v1015
    %v1115 = vunpack.c.h.b16 %v1015
    %v1116 = vunpack.c.l.b16 %v1016
    %v1117 = vunpack.c.h.b16 %v1016
    %v1118 = vunpack.c.l.b16 %v1017
    %v1119 = vunpack.c.h.b16 %v1017
    %v1120 = vunpack.c.l.b16 %v1018
    %v1121 = vunpack.c.h.b16 %v1018
    %v1122 = vunpack.c.l.b16 %v1019
    %v1123 = vunpack.c.h.b16 %v1019
    %v1124 = vunpack.c.l.b16 %v1020
    %v1125 = vunpack.c.h.b16 %v1020
    %v1126 = vunpack.c.l.b16 %v1021
    %v1127 = vunpack.c.h.b16 %v1021
    %v1128 = vunpack.c.l.b16 %v1022
    %v1129 = vunpack.c.h.b16 %v1022
    %v1130 = vunpack.c.l.b16 %v1023
    %v1131 = vunpack.c.h.b16 %v1023
    %v1132 = vunpack.c.l.b16 %v1024
    %v1133 = vunpack.c.h.b16 %v1024
    %v1134 = vunpack.c.l.b16 %v1025
    %v1135 = vunpack.c.h.b16 %v1025
    %v1136 = vunpack.c.l.b16 %v1026
    %v1137 = vunpack.c.h.b16 %v1026
    %v1138 = vunpack.c.l.b16 %v1027
    %v1139 = vunpack.c.h.b16 %v1027
    %v1140 = vunpack.c.l.b16 %v1028
    %v1141 = vunpack.c.h.b16 %v1028
    %v1142 = vunpack.c.l.b16 %v1029
    %v1143 = vunpack.c.h.b16 %v1029
    %v1144 = vunpack.c.l.b16 %v1030
    %v1145 = vunpack.c.h.b16 %v1030
    %v1146 = vunpack.c.l.b16 %v1031
    %v1147 = vunpack.c.h.b16 %v1031
    %v1148 = vunpack.c.l.b16 %v1032
    %v1149 = vunpack.c.h.b16 %v1032
    %v1150 = vunpack.c.l.b16 %v1033
    %v1151 = vunpack.c.h.b16 %v1033
    %v1152 = vunpack.c.l.b16 %v1034
    %v1153 = vunpack.c.h.b16 %v1034
    %v1154 = vunpack.c.l.b16 %v1035
    %v1155 = vunpack.c.h.b16 %v1035
    %v1156 = vpack.c.b16 %v1096, %v1092
    %v1157 = vpack.c.b16 %v1097, %v1093
    %v1158 = vpack.c.b16 %v1098, %v1094
    %v1159 = vpack.c.b16 %v1099, %v1095
    %v1160 = vpack.c.b16 %v1104, %v1100
    %v1161 = vpack.c.b16 %v1105, %v1101
    %v1162 = vpack.c.b16 %v1106, %v1102
    %v1163 = vpack.c.b16 %v1107, %v1103
    %v1164 = vpack.c.b16 %v1112, %v1108
    %v1165 = vpack.c.b16 %v1113, %v1109
    %v1166 = vpack.c.b16 %v1114, %v1110
    %v1167 = vpack.c.b16 %v1115, %v1111
    %v1168 = vpack.c.b16 %v1120, %v1116
    %v1169 = vpack.c.b16 %v1121, %v1117
    %v1170 = vpack.c.b16 %v1122, %v1118
    %v1171 = vpack.c.b16 %v1123, %v1119
    %v1172 = vpack.c.b16 %v1128, %v1124
    %v1173 = vpack.c.b16 %v1129, %v1125
    %v1174 = vpack.c.b16 %v1130, %v1126
    %v1175 = vpack.c.b16 %v1131, %v1127
    %v1176 = vpack.c.b16 %v1136, %v1132
    %v1177 = vpack.c.b16 %v1137, %v1133
    %v1178 = vpack.c.b16 %v1138, %v1134
    %v1179 = vpack.c.b16 %v1139, %v1135
    %v1180 = vpack.c.b16 %v1144, %v1140
    %v1181 = vpack.c.b16 %v1145, %v1141
    %v1182 = vpack.c.b16 %v1146, %v1142
    %v1183 = vpack.c.b16 %v1147, %v1143
    %v1184 = vpack.c.b16 %v1152, %v1148
    %v1185 = vpack.c.b16 %v1153, %v1149
    %v1186 = vpack.c.b16 %v1154, %v1150
    %v1187 = vpack.c.b16 %v1155, %v1151
    %1220 = vmatprep.subr.bf16.mxu0 %v1157
    %1221 = vmatpush1.bf16.msra.mxu0 %v1156
    %1222 = vmatprep.subr.bf16.mxu0 %v1161
    %1223 = vmatpush1.bf16.msra.mxu0 %v1160
    %1224 = vmatprep.subr.bf16.mxu0 %v1165
    %1225 = vmatpush1.bf16.msra.mxu0 %v1164
    %1226 = vmatprep.subr.bf16.mxu0 %v1169
    %1227 = vmatpush1.bf16.msra.mxu0 %v1168
    %1228 = vmatprep.subr.bf16.mxu0 %v1173
    %1229 = vmatpush1.bf16.msra.mxu0 %v1172
    %1230 = vmatprep.subr.bf16.mxu0 %v1177
    %1231 = vmatpush1.bf16.msra.mxu0 %v1176
    %1232 = vmatprep.subr.bf16.mxu0 %v1181
    %1233 = vmatpush1.bf16.msra.mxu0 %v1180
    %1234 = vmatprep.subr.bf16.mxu0 %v1185
    %1235 = vmatpush1.bf16.msra.mxu0 %v1184
    %1236 = vmatprep.subr.bf16.mxu0 0
    %1237 = vmatpush1.bf16.msra.mxu0 0
    %1238 = vmatprep.subr.bf16.mxu0 0
    %1239 = vmatpush1.bf16.msra.mxu0 0
    %1240 = vmatprep.subr.bf16.mxu0 0
    %1241 = vmatpush1.bf16.msra.mxu0 0
    %1242 = vmatprep.subr.bf16.mxu0 0
    %1243 = vmatpush1.bf16.msra.mxu0 0
    %1244 = vmatprep.subr.bf16.mxu0 0
    %1245 = vmatpush1.bf16.msra.mxu0 0
    %1246 = vmatprep.subr.bf16.mxu0 0
    %1247 = vmatpush1.bf16.msra.mxu0 0
    %1248 = vmatprep.subr.bf16.mxu0 0
    %1249 = vmatpush1.bf16.msra.mxu0 0
    %1250 = vmatprep.subr.bf16.mxu0 0
    %1251 = vmatpush1.bf16.msra.mxu0 0
    %1252 = vmatprep.mubr.bf16.mxu0 0
    %1253 = vmatmul.mubr.bf16.gmra.mrb[0].mxu0 %v1052
    %v1254 = vpop.f32.mrb[0].mxu0
    %v1255 = vadd.f32 0.0, %v1254
    %v1256 = vpop.f32.mrb[0].mxu0
    %v1257 = vadd.f32 0.0, %v1256
    %v1258 = vpop.f32.mrb[0].mxu0
    %v1259 = vadd.f32 0.0, %v1258
    %v1260 = vpop.f32.mrb[0].mxu0
    %v1261 = vadd.f32 0.0, %v1260
    %1262 = vmatprep.mubr.bf16.mxu0 0
    %1263 = vmatmul.mubr.bf16.gmra.mrb[0].mxu0 %v1053
    %v1264 = vpop.f32.mrb[0].mxu0
    %v1265 = vadd.f32 0.0, %v1264
    %v1266 = vpop.f32.mrb[0].mxu0
    %v1267 = vadd.f32 0.0, %v1266
    %v1268 = vpop.f32.mrb[0].mxu0
    %v1269 = vadd.f32 0.0, %v1268
    %v1270 = vpop.f32.mrb[0].mxu0
    %v1271 = vadd.f32 0.0, %v1270
    %1272 = vmatprep.mubr.bf16.mxu0 0
    %1273 = vmatmul.mubr.bf16.gmra.mrb[0].mxu0 %v1054
    %v1274 = vpop.f32.mrb[0].mxu0
    %v1275 = vadd.f32 0.0, %v1274
    %v1276 = vpop.f32.mrb[0].mxu0
    %v1277 = vadd.f32 0.0, %v1276
    %v1278 = vpop.f32.mrb[0].mxu0
    %v1279 = vadd.f32 0.0, %v1278
    %v1280 = vpop.f32.mrb[0].mxu0
    %v1281 = vadd.f32 0.0, %v1280
    %1282 = vmatprep.mubr.bf16.mxu0 0
    %1283 = vmatmul.mubr.bf16.gmra.mrb[0].mxu0 %v1055
    %v1284 = vpop.f32.mrb[0].mxu0
    %v1285 = vadd.f32 0.0, %v1284
    %v1286 = vpop.f32.mrb[0].mxu0
    %v1287 = vadd.f32 0.0, %v1286
    %v1288 = vpop.f32.mrb[0].mxu0
    %v1289 = vadd.f32 0.0, %v1288
    %v1290 = vpop.f32.mrb[0].mxu0
    %v1291 = vadd.f32 0.0, %v1290
    %1292 = vdwg.mxu0
    %1293 = vmatprep.subr.bf16.mxu0 %v1159
    %1294 = vmatpush1.bf16.msra.mxu0 %v1158
    %1295 = vmatprep.subr.bf16.mxu0 %v1163
    %1296 = vmatpush1.bf16.msra.mxu0 %v1162
    %1297 = vmatprep.subr.bf16.mxu0 %v1167
    %1298 = vmatpush1.bf16.msra.mxu0 %v1166
    %1299 = vmatprep.subr.bf16.mxu0 %v1171
    %1300 = vmatpush1.bf16.msra.mxu0 %v1170
    %1301 = vmatprep.subr.bf16.mxu0 %v1175
    %1302 = vmatpush1.bf16.msra.mxu0 %v1174
    %1303 = vmatprep.subr.bf16.mxu0 %v1179
    %1304 = vmatpush1.bf16.msra.mxu0 %v1178
    %1305 = vmatprep.subr.bf16.mxu0 %v1183
    %1306 = vmatpush1.bf16.msra.mxu0 %v1182
    %1307 = vmatprep.subr.bf16.mxu0 %v1187
    %1308 = vmatpush1.bf16.msra.mxu0 %v1186
    %1309 = vmatprep.subr.bf16.mxu0 0
    %1310 = vmatpush1.bf16.msra.mxu0 0
    %1311 = vmatprep.subr.bf16.mxu0 0
    %1312 = vmatpush1.bf16.msra.mxu0 0
    %1313 = vmatprep.subr.bf16.mxu0 0
    %1314 = vmatpush1.bf16.msra.mxu0 0
    %1315 = vmatprep.subr.bf16.mxu0 0
    %1316 = vmatpush1.bf16.msra.mxu0 0
    %1317 = vmatprep.subr.bf16.mxu0 0
    %1318 = vmatpush1.bf16.msra.mxu0 0
    %1319 = vmatprep.subr.bf16.mxu0 0
    %1320 = vmatpush1.bf16.msra.mxu0 0
    %1321 = vmatprep.subr.bf16.mxu0 0
    %1322 = vmatpush1.bf16.msra.mxu0 0
    %1323 = vmatprep.subr.bf16.mxu0 0
    %1324 = vmatpush1.bf16.msra.mxu0 0
    %1325 = vmatprep.mubr.bf16.mxu0 0
    %1326 = vmatmul.mubr.bf16.gmra.mrb[0].mxu0 %v1052
    %v1327 = vpop.f32.mrb[0].mxu0
    %v1328 = vadd.f32 0.0, %v1327
    %v1329 = vpop.f32.mrb[0].mxu0
    %v1330 = vadd.f32 0.0, %v1329
    %v1331 = vpop.f32.mrb[0].mxu0
    %v1332 = vadd.f32 0.0, %v1331
    %v1333 = vpop.f32.mrb[0].mxu0
    %v1334 = vadd.f32 0.0, %v1333
    %1335 = vmatprep.mubr.bf16.mxu0 0
    %1336 = vmatmul.mubr.bf16.gmra.mrb[0].mxu0 %v1053
    %v1337 = vpop.f32.mrb[0].mxu0
    %v1338 = vadd.f32 0.0, %v1337
    %v1339 = vpop.f32.mrb[0].mxu0
    %v1340 = vadd.f32 0.0, %v1339
    %v1341 = vpop.f32.mrb[0].mxu0
    %v1342 = vadd.f32 0.0, %v1341
    %v1343 = vpop.f32.mrb[0].mxu0
    %v1344 = vadd.f32 0.0, %v1343
    %1345 = vmatprep.mubr.bf16.mxu0 0
    %1346 = vmatmul.mubr.bf16.gmra.mrb[0].mxu0 %v1054
    %v1347 = vpop.f32.mrb[0].mxu0
    %v1348 = vadd.f32 0.0, %v1347
    %v1349 = vpop.f32.mrb[0].mxu0
    %v1350 = vadd.f32 0.0, %v1349
    %v1351 = vpop.f32.mrb[0].mxu0
    %v1352 = vadd.f32 0.0, %v1351
    %v1353 = vpop.f32.mrb[0].mxu0
    %v1354 = vadd.f32 0.0, %v1353
    %1355 = vmatprep.mubr.bf16.mxu0 0
    %1356 = vmatmul.mubr.bf16.gmra.mrb[0].mxu0 %v1055
    %v1357 = vpop.f32.mrb[0].mxu0
    %v1358 = vadd.f32 0.0, %v1357
    %v1359 = vpop.f32.mrb[0].mxu0
    %v1360 = vadd.f32 0.0, %v1359
    %v1361 = vpop.f32.mrb[0].mxu0
    %v1362 = vadd.f32 0.0, %v1361
    %v1363 = vpop.f32.mrb[0].mxu0
    %v1364 = vadd.f32 0.0, %v1363
    %1365 = vdwg.mxu0
    %v1374 = vunpack.c.l.b16 %v956
    %v1375 = vunpack.c.l.b16 %v957
    %v1376 = vunpack.c.l.b16 %v958
    %v1377 = vunpack.c.l.b16 %v959
    %v1378 = vunpack.c.l.b16 %v960
    %v1379 = vunpack.c.l.b16 %v961
    %v1380 = vunpack.c.l.b16 %v962
    %v1381 = vunpack.c.l.b16 %v963
    %v1382 = vpack.c.b16 %v1375, %v1374
    %v1383 = vpack.c.b16 %v1377, %v1376
    %v1384 = vpack.c.b16 %v1379, %v1378
    %v1385 = vpack.c.b16 %v1381, %v1380
    %v1422 = vunpack.c.l.b16 %v964
    %v1423 = vunpack.c.h.b16 %v964
    %v1424 = vunpack.c.l.b16 %v965
    %v1425 = vunpack.c.h.b16 %v965
    %v1426 = vunpack.c.l.b16 %v966
    %v1427 = vunpack.c.h.b16 %v966
    %v1428 = vunpack.c.l.b16 %v967
    %v1429 = vunpack.c.h.b16 %v967
    %v1430 = vunpack.c.l.b16 %v968
    %v1431 = vunpack.c.h.b16 %v968
    %v1432 = vunpack.c.l.b16 %v969
    %v1433 = vunpack.c.h.b16 %v969
    %v1434 = vunpack.c.l.b16 %v970
    %v1435 = vunpack.c.h.b16 %v970
    %v1436 = vunpack.c.l.b16 %v971
    %v1437 = vunpack.c.h.b16 %v971
    %v1438 = vunpack.c.l.b16 %v972
    %v1439 = vunpack.c.h.b16 %v972
    %v1440 = vunpack.c.l.b16 %v973
    %v1441 = vunpack.c.h.b16 %v973
    %v1442 = vunpack.c.l.b16 %v974
    %v1443 = vunpack.c.h.b16 %v974
    %v1444 = vunpack.c.l.b16 %v975
    %v1445 = vunpack.c.h.b16 %v975
    %v1446 = vunpack.c.l.b16 %v976
    %v1447 = vunpack.c.h.b16 %v976
    %v1448 = vunpack.c.l.b16 %v977
    %v1449 = vunpack.c.h.b16 %v977
    %v1450 = vunpack.c.l.b16 %v978
    %v1451 = vunpack.c.h.b16 %v978
    %v1452 = vunpack.c.l.b16 %v979
    %v1453 = vunpack.c.h.b16 %v979
    %v1454 = vunpack.c.l.b16 %v980
    %v1455 = vunpack.c.h.b16 %v980
    %v1456 = vunpack.c.l.b16 %v981
    %v1457 = vunpack.c.h.b16 %v981
    %v1458 = vunpack.c.l.b16 %v982
    %v1459 = vunpack.c.h.b16 %v982
    %v1460 = vunpack.c.l.b16 %v983
    %v1461 = vunpack.c.h.b16 %v983
    %v1462 = vunpack.c.l.b16 %v984
    %v1463 = vunpack.c.h.b16 %v984
    %v1464 = vunpack.c.l.b16 %v985
    %v1465 = vunpack.c.h.b16 %v985
    %v1466 = vunpack.c.l.b16 %v986
    %v1467 = vunpack.c.h.b16 %v986
    %v1468 = vunpack.c.l.b16 %v987
    %v1469 = vunpack.c.h.b16 %v987
    %v1470 = vunpack.c.l.b16 %v988
    %v1471 = vunpack.c.h.b16 %v988
    %v1472 = vunpack.c.l.b16 %v989
    %v1473 = vunpack.c.h.b16 %v989
    %v1474 = vunpack.c.l.b16 %v990
    %v1475 = vunpack.c.h.b16 %v990
    %v1476 = vunpack.c.l.b16 %v991
    %v1477 = vunpack.c.h.b16 %v991
    %v1478 = vunpack.c.l.b16 %v992
    %v1479 = vunpack.c.h.b16 %v992
    %v1480 = vunpack.c.l.b16 %v993
    %v1481 = vunpack.c.h.b16 %v993
    %v1482 = vunpack.c.l.b16 %v994
    %v1483 = vunpack.c.h.b16 %v994
    %v1484 = vunpack.c.l.b16 %v995
    %v1485 = vunpack.c.h.b16 %v995
    %v1486 = vpack.c.b16 %v1426, %v1422
    %v1487 = vpack.c.b16 %v1427, %v1423
    %v1488 = vpack.c.b16 %v1428, %v1424
    %v1489 = vpack.c.b16 %v1429, %v1425
    %v1490 = vpack.c.b16 %v1434, %v1430
    %v1491 = vpack.c.b16 %v1435, %v1431
    %v1492 = vpack.c.b16 %v1436, %v1432
    %v1493 = vpack.c.b16 %v1437, %v1433
    %v1494 = vpack.c.b16 %v1442, %v1438
    %v1495 = vpack.c.b16 %v1443, %v1439
    %v1496 = vpack.c.b16 %v1444, %v1440
    %v1497 = vpack.c.b16 %v1445, %v1441
    %v1498 = vpack.c.b16 %v1450, %v1446
    %v1499 = vpack.c.b16 %v1451, %v1447
    %v1500 = vpack.c.b16 %v1452, %v1448
    %v1501 = vpack.c.b16 %v1453, %v1449
    %v1502 = vpack.c.b16 %v1458, %v1454
    %v1503 = vpack.c.b16 %v1459, %v1455
    %v1504 = vpack.c.b16 %v1460, %v1456
    %v1505 = vpack.c.b16 %v1461, %v1457
    %v1506 = vpack.c.b16 %v1466, %v1462
    %v1507 = vpack.c.b16 %v1467, %v1463
    %v1508 = vpack.c.b16 %v1468, %v1464
    %v1509 = vpack.c.b16 %v1469, %v1465
    %v1510 = vpack.c.b16 %v1474, %v1470
    %v1511 = vpack.c.b16 %v1475, %v1471
    %v1512 = vpack.c.b16 %v1476, %v1472
    %v1513 = vpack.c.b16 %v1477, %v1473
    %v1514 = vpack.c.b16 %v1482, %v1478
    %v1515 = vpack.c.b16 %v1483, %v1479
    %v1516 = vpack.c.b16 %v1484, %v1480
    %v1517 = vpack.c.b16 %v1485, %v1481
    %1550 = vmatprep.subr.bf16.mxu0 %v1487
    %1551 = vmatpush1.bf16.msra.mxu0 %v1486
    %1552 = vmatprep.subr.bf16.mxu0 %v1491
    %1553 = vmatpush1.bf16.msra.mxu0 %v1490
    %1554 = vmatprep.subr.bf16.mxu0 %v1495
    %1555 = vmatpush1.bf16.msra.mxu0 %v1494
    %1556 = vmatprep.subr.bf16.mxu0 %v1499
    %1557 = vmatpush1.bf16.msra.mxu0 %v1498
    %1558 = vmatprep.subr.bf16.mxu0 %v1503
    %1559 = vmatpush1.bf16.msra.mxu0 %v1502
    %1560 = vmatprep.subr.bf16.mxu0 %v1507
    %1561 = vmatpush1.bf16.msra.mxu0 %v1506
    %1562 = vmatprep.subr.bf16.mxu0 %v1511
    %1563 = vmatpush1.bf16.msra.mxu0 %v1510
    %1564 = vmatprep.subr.bf16.mxu0 %v1515
    %1565 = vmatpush1.bf16.msra.mxu0 %v1514
    %1566 = vmatprep.subr.bf16.mxu0 0
    %1567 = vmatpush1.bf16.msra.mxu0 0
    %1568 = vmatprep.subr.bf16.mxu0 0
    %1569 = vmatpush1.bf16.msra.mxu0 0
    %1570 = vmatprep.subr.bf16.mxu0 0
    %1571 = vmatpush1.bf16.msra.mxu0 0
    %1572 = vmatprep.subr.bf16.mxu0 0
    %1573 = vmatpush1.bf16.msra.mxu0 0
    %1574 = vmatprep.subr.bf16.mxu0 0
    %1575 = vmatpush1.bf16.msra.mxu0 0
    %1576 = vmatprep.subr.bf16.mxu0 0
    %1577 = vmatpush1.bf16.msra.mxu0 0
    %1578 = vmatprep.subr.bf16.mxu0 0
    %1579 = vmatpush1.bf16.msra.mxu0 0
    %1580 = vmatprep.subr.bf16.mxu0 0
    %1581 = vmatpush1.bf16.msra.mxu0 0
    %1582 = vmatprep.mubr.bf16.mxu0 0
    %1583 = vmatmul.mubr.bf16.gmra.mrb[0].mxu0 %v1382
    %v1584 = vpop.f32.mrb[0].mxu0
    %v1585 = vadd.f32 %v1255, %v1584
    %v1586 = vpop.f32.mrb[0].mxu0
    %v1587 = vadd.f32 %v1257, %v1586
    %v1588 = vpop.f32.mrb[0].mxu0
    %v1589 = vadd.f32 %v1259, %v1588
    %v1590 = vpop.f32.mrb[0].mxu0
    %v1591 = vadd.f32 %v1261, %v1590
    %1592 = vmatprep.mubr.bf16.mxu0 0
    %1593 = vmatmul.mubr.bf16.gmra.mrb[0].mxu0 %v1383
    %v1594 = vpop.f32.mrb[0].mxu0
    %v1595 = vadd.f32 %v1265, %v1594
    %v1596 = vpop.f32.mrb[0].mxu0
    %v1597 = vadd.f32 %v1267, %v1596
    %v1598 = vpop.f32.mrb[0].mxu0
    %v1599 = vadd.f32 %v1269, %v1598
    %v1600 = vpop.f32.mrb[0].mxu0
    %v1601 = vadd.f32 %v1271, %v1600
    %1602 = vmatprep.mubr.bf16.mxu0 0
    %1603 = vmatmul.mubr.bf16.gmra.mrb[0].mxu0 %v1384
    %v1604 = vpop.f32.mrb[0].mxu0
    %v1605 = vadd.f32 %v1275, %v1604
    %v1606 = vpop.f32.mrb[0].mxu0
    %v1607 = vadd.f32 %v1277, %v1606
    %v1608 = vpop.f32.mrb[0].mxu0
    %v1609 = vadd.f32 %v1279, %v1608
    %v1610 = vpop.f32.mrb[0].mxu0
    %v1611 = vadd.f32 %v1281, %v1610
    %1612 = vmatprep.mubr.bf16.mxu0 0
    %1613 = vmatmul.mubr.bf16.gmra.mrb[0].mxu0 %v1385
    %v1614 = vpop.f32.mrb[0].mxu0
    %v1615 = vadd.f32 %v1285, %v1614
    %v1616 = vpop.f32.mrb[0].mxu0
    %v1617 = vadd.f32 %v1287, %v1616
    %v1618 = vpop.f32.mrb[0].mxu0
    %v1619 = vadd.f32 %v1289, %v1618
    %v1620 = vpop.f32.mrb[0].mxu0
    %v1621 = vadd.f32 %v1291, %v1620
    %1622 = vdwg.mxu0
    %1623 = vmatprep.subr.bf16.mxu0 %v1489
    %1624 = vmatpush1.bf16.msra.mxu0 %v1488
    %1625 = vmatprep.subr.bf16.mxu0 %v1493
    %1626 = vmatpush1.bf16.msra.mxu0 %v1492
    %1627 = vmatprep.subr.bf16.mxu0 %v1497
    %1628 = vmatpush1.bf16.msra.mxu0 %v1496
    %1629 = vmatprep.subr.bf16.mxu0 %v1501
    %1630 = vmatpush1.bf16.msra.mxu0 %v1500
    %1631 = vmatprep.subr.bf16.mxu0 %v1505
    %1632 = vmatpush1.bf16.msra.mxu0 %v1504
    %1633 = vmatprep.subr.bf16.mxu0 %v1509
    %1634 = vmatpush1.bf16.msra.mxu0 %v1508
    %1635 = vmatprep.subr.bf16.mxu0 %v1513
    %1636 = vmatpush1.bf16.msra.mxu0 %v1512
    %1637 = vmatprep.subr.bf16.mxu0 %v1517
    %1638 = vmatpush1.bf16.msra.mxu0 %v1516
    %1639 = vmatprep.subr.bf16.mxu0 0
    %1640 = vmatpush1.bf16.msra.mxu0 0
    %1641 = vmatprep.subr.bf16.mxu0 0
    %1642 = vmatpush1.bf16.msra.mxu0 0
    %1643 = vmatprep.subr.bf16.mxu0 0
    %1644 = vmatpush1.bf16.msra.mxu0 0
    %1645 = vmatprep.subr.bf16.mxu0 0
    %1646 = vmatpush1.bf16.msra.mxu0 0
    %1647 = vmatprep.subr.bf16.mxu0 0
    %1648 = vmatpush1.bf16.msra.mxu0 0
    %1649 = vmatprep.subr.bf16.mxu0 0
    %1650 = vmatpush1.bf16.msra.mxu0 0
    %1651 = vmatprep.subr.bf16.mxu0 0
    %1652 = vmatpush1.bf16.msra.mxu0 0
    %1653 = vmatprep.subr.bf16.mxu0 0
    %1654 = vmatpush1.bf16.msra.mxu0 0
    %1655 = vmatprep.mubr.bf16.mxu0 0
    %1656 = vmatmul.mubr.bf16.gmra.mrb[0].mxu0 %v1382
    %v1657 = vpop.f32.mrb[0].mxu0
    %v1658 = vadd.f32 %v1328, %v1657
    %v1659 = vpop.f32.mrb[0].mxu0
    %v1660 = vadd.f32 %v1330, %v1659
    %v1661 = vpop.f32.mrb[0].mxu0
    %v1662 = vadd.f32 %v1332, %v1661
    %v1663 = vpop.f32.mrb[0].mxu0
    %v1664 = vadd.f32 %v1334, %v1663
    %1665 = vmatprep.mubr.bf16.mxu0 0
    %1666 = vmatmul.mubr.bf16.gmra.mrb[0].mxu0 %v1383
    %v1667 = vpop.f32.mrb[0].mxu0
    %v1668 = vadd.f32 %v1338, %v1667
    %v1669 = vpop.f32.mrb[0].mxu0
    %v1670 = vadd.f32 %v1340, %v1669
    %v1671 = vpop.f32.mrb[0].mxu0
    %v1672 = vadd.f32 %v1342, %v1671
    %v1673 = vpop.f32.mrb[0].mxu0
    %v1674 = vadd.f32 %v1344, %v1673
    %1675 = vmatprep.mubr.bf16.mxu0 0
    %1676 = vmatmul.mubr.bf16.gmra.mrb[0].mxu0 %v1384
    %v1677 = vpop.f32.mrb[0].mxu0
    %v1678 = vadd.f32 %v1348, %v1677
    %v1679 = vpop.f32.mrb[0].mxu0
    %v1680 = vadd.f32 %v1350, %v1679
    %v1681 = vpop.f32.mrb[0].mxu0
    %v1682 = vadd.f32 %v1352, %v1681
    %v1683 = vpop.f32.mrb[0].mxu0
    %v1684 = vadd.f32 %v1354, %v1683
    %1685 = vmatprep.mubr.bf16.mxu0 0
    %1686 = vmatmul.mubr.bf16.gmra.mrb[0].mxu0 %v1385
    %v1687 = vpop.f32.mrb[0].mxu0
    %v1688 = vadd.f32 %v1358, %v1687
    %v1689 = vpop.f32.mrb[0].mxu0
    %v1690 = vadd.f32 %v1360, %v1689
    %v1691 = vpop.f32.mrb[0].mxu0
    %v1692 = vadd.f32 %v1362, %v1691
    %v1693 = vpop.f32.mrb[0].mxu0
    %v1694 = vadd.f32 %v1364, %v1693
    %1695 = vdwg.mxu0
    %v1696 = vld [vmem:[#allocation8] sm:$0xf]
    %v1698 = vlaneseq
    %v1699 = vshrl.u32 %v1698, 7
    %v1700 = vsub.s32 0, %v1699
    %v1701 = vrot.slane %v1696, %v1700
    %v1702 = vlaneseq
    %v1703 = vshrl.u32 %v1702, 7
    %v1704 = vsub.s32 1, %v1703
    %v1705 = vrot.slane %v1696, %v1704
    %v1706 = vlaneseq
    %v1707 = vshrl.u32 %v1706, 7
    %v1708 = vsub.s32 2, %v1707
    %v1709 = vrot.slane %v1696, %v1708
    %v1710 = vlaneseq
    %v1711 = vshrl.u32 %v1710, 7
    %v1712 = vsub.s32 3, %v1711
    %v1713 = vrot.slane %v1696, %v1712
    %v1718 = vadd.f32 %v1585, %v1701
    %v1719 = vadd.f32 %v1587, %v1705
    %v1720 = vadd.f32 %v1658, %v1709
    %v1721 = vadd.f32 %v1660, %v1713
    %v1722 = vadd.f32 %v1589, %v1701
    %v1723 = vadd.f32 %v1591, %v1705
    %v1724 = vadd.f32 %v1662, %v1709
    %v1725 = vadd.f32 %v1664, %v1713
    %v1726 = vadd.f32 %v1595, %v1701
    %v1727 = vadd.f32 %v1597, %v1705
    %v1728 = vadd.f32 %v1668, %v1709
    %v1729 = vadd.f32 %v1670, %v1713
    %v1730 = vadd.f32 %v1599, %v1701
    %v1731 = vadd.f32 %v1601, %v1705
    %v1732 = vadd.f32 %v1672, %v1709
    %v1733 = vadd.f32 %v1674, %v1713
    %v1734 = vadd.f32 %v1605, %v1701
    %v1735 = vadd.f32 %v1607, %v1705
    %v1736 = vadd.f32 %v1678, %v1709
    %v1737 = vadd.f32 %v1680, %v1713
    %v1738 = vadd.f32 %v1609, %v1701
    %v1739 = vadd.f32 %v1611, %v1705
    %v1740 = vadd.f32 %v1682, %v1709
    %v1741 = vadd.f32 %v1684, %v1713
    %v1742 = vadd.f32 %v1615, %v1701
    %v1743 = vadd.f32 %v1617, %v1705
    %v1744 = vadd.f32 %v1688, %v1709
    %v1745 = vadd.f32 %v1690, %v1713
    %v1746 = vadd.f32 %v1619, %v1701
    %v1747 = vadd.f32 %v1621, %v1705
    %v1748 = vadd.f32 %v1692, %v1709
    %v1749 = vadd.f32 %v1694, %v1713
    %1750 = vst [vmem:[#allocation3] sm:$0xff] %v1718
    %1751 = vst [vmem:[#allocation3 + $0x8] sm:$0xff] %v1719
    %1752 = vst [vmem:[#allocation3 + $0x10] sm:$0xff] %v1720
    %1753 = vst [vmem:[#allocation3 + $0x18] sm:$0xff] %v1721
    %1754 = vst [vmem:[#allocation3 + $0x20] sm:$0xff] %v1722
    %1755 = vst [vmem:[#allocation3 + $0x28] sm:$0xff] %v1723
    %1756 = vst [vmem:[#allocation3 + $0x30] sm:$0xff] %v1724
    %1757 = vst [vmem:[#allocation3 + $0x38] sm:$0xff] %v1725
    %1758 = vst [vmem:[#allocation3 + $0x40] sm:$0xff] %v1726
    %1759 = vst [vmem:[#allocation3 + $0x48] sm:$0xff] %v1727
    %1760 = vst [vmem:[#allocation3 + $0x50] sm:$0xff] %v1728
    %1761 = vst [vmem:[#allocation3 + $0x58] sm:$0xff] %v1729
    %1762 = vst [vmem:[#allocation3 + $0x60] sm:$0xff] %v1730
    %1763 = vst [vmem:[#allocation3 + $0x68] sm:$0xff] %v1731
    %1764 = vst [vmem:[#allocation3 + $0x70] sm:$0xff] %v1732
    %1765 = vst [vmem:[#allocation3 + $0x78] sm:$0xff] %v1733
    %1766 = vst [vmem:[#allocation3 + $0x80] sm:$0xff] %v1734
    %1767 = vst [vmem:[#allocation3 + $0x88] sm:$0xff] %v1735
    %1768 = vst [vmem:[#allocation3 + $0x90] sm:$0xff] %v1736
    %1769 = vst [vmem:[#allocation3 + $0x98] sm:$0xff] %v1737
    %1770 = vst [vmem:[#allocation3 + $0xa0] sm:$0xff] %v1738
    %1771 = vst [vmem:[#allocation3 + $0xa8] sm:$0xff] %v1739
    %1772 = vst [vmem:[#allocation3 + $0xb0] sm:$0xff] %v1740
    %1773 = vst [vmem:[#allocation3 + $0xb8] sm:$0xff] %v1741
    %1774 = vst [vmem:[#allocation3 + $0xc0] sm:$0xff] %v1742
    %1775 = vst [vmem:[#allocation3 + $0xc8] sm:$0xff] %v1743
    %1776 = vst [vmem:[#allocation3 + $0xd0] sm:$0xff] %v1744
    %1777 = vst [vmem:[#allocation3 + $0xd8] sm:$0xff] %v1745
    %1778 = vst [vmem:[#allocation3 + $0xe0] sm:$0xff] %v1746
    %1779 = vst [vmem:[#allocation3 + $0xe8] sm:$0xff] %v1747
    %1780 = vst [vmem:[#allocation3 + $0xf0] sm:$0xff] %v1748
    %1781 = vst [vmem:[#allocation3 + $0xf8] sm:$0xff] %v1749
    loop: start=0, step=1, limit=8
    $region54: #{seq_tagger_forward.4} parent=1 // loop_pre_header
      _
    $region55: #{seq_tagger_forward.4} parent=1 // loop_header
      %s1783 = sphi 0, %s1787
      %p1784 = scmp.ge.s32.totalorder %s1783, 8
    $region56: #{seq_tagger_forward.4} parent=1 // loop_header_branch
      %1786 = sbr.rel (%p1784) target = $region60
    $region57: #{seq_tagger_forward.4} parent=1 // loop_body
      %s1788 = ssub.s32 7, %s1783
      %v1789 = vld [vmem:[#allocation4] sm:$0xff]
      %v1790 = vld [vmem:[#allocation4 + $0x8] sm:$0xff]
      %s1791 = smul.u32 %s1783, 4
      %s1792 = smul.addr %s1791, 8
      %s1793 = scalar_lea.vmem [#allocation2], %s1792
      %v1794 = vld [vmem:[%s1793] sm:$0xff]
      %v1795 = vld [vmem:[%s1793 + $0x8] sm:$0xff]
      %v1796 = vld [vmem:[%s1793 + $0x10] sm:$0xff]
      %v1797 = vld [vmem:[%s1793 + $0x18] sm:$0xff]
      %v1798 = vpack.c.bf16 %v1789, %v1789
      %v1799 = vld [vmem:[%s6] sm:$0xff]
      %v1800 = vld [vmem:[%s6 + $0x8] sm:$0xff]
      %v1801 = vld [vmem:[%s6 + $0x10] sm:$0xff]
      %v1802 = vld [vmem:[%s6 + $0x18] sm:$0xff]
      %v1803 = vld [vmem:[%s6 + $0x20] sm:$0xff]
      %v1804 = vld [vmem:[%s6 + $0x28] sm:$0xff]
      %v1805 = vld [vmem:[%s6 + $0x30] sm:$0xff]
      %v1806 = vld [vmem:[%s6 + $0x38] sm:$0xff]
      %v1807 = vld [vmem:[%s6 + $0x40] sm:$0xff]
      %v1808 = vld [vmem:[%s6 + $0x48] sm:$0xff]
      %v1809 = vld [vmem:[%s6 + $0x50] sm:$0xff]
      %v1810 = vld [vmem:[%s6 + $0x58] sm:$0xff]
      %v1811 = vld [vmem:[%s6 + $0x60] sm:$0xff]
      %v1812 = vld [vmem:[%s6 + $0x68] sm:$0xff]
      %v1813 = vld [vmem:[%s6 + $0x70] sm:$0xff]
      %v1814 = vld [vmem:[%s6 + $0x78] sm:$0xff]
      %v1815 = vld [vmem:[%s6 + $0x80] sm:$0xff]
      %v1816 = vld [vmem:[%s6 + $0x88] sm:$0xff]
      %v1817 = vld [vmem:[%s6 + $0x90] sm:$0xff]
      %v1818 = vld [vmem:[%s6 + $0x98] sm:$0xff]
      %v1819 = vld [vmem:[%s6 + $0xa0] sm:$0xff]
      %v1820 = vld [vmem:[%s6 + $0xa8] sm:$0xff]
      %v1821 = vld [vmem:[%s6 + $0xb0] sm:$0xff]
      %v1822 = vld [vmem:[%s6 + $0xb8] sm:$0xff]
      %v1823 = vld [vmem:[%s6 + $0xc0] sm:$0xff]
      %v1824 = vld [vmem:[%s6 + $0xc8] sm:$0xff]
      %v1825 = vld [vmem:[%s6 + $0xd0] sm:$0xff]
      %v1826 = vld [vmem:[%s6 + $0xd8] sm:$0xff]
      %v1827 = vld [vmem:[%s6 + $0xe0] sm:$0xff]
      %v1828 = vld [vmem:[%s6 + $0xe8] sm:$0xff]
      %v1829 = vld [vmem:[%s6 + $0xf0] sm:$0xff]
      %v1830 = vld [vmem:[%s6 + $0xf8] sm:$0xff]
      %v1863 = vunpack.c.l.b16 %v1799
      %v1864 = vunpack.c.h.b16 %v1799
      %v1865 = vunpack.c.l.b16 %v1800
      %v1866 = vunpack.c.h.b16 %v1800
      %v1867 = vunpack.c.l.b16 %v1801
      %v1868 = vunpack.c.h.b16 %v1801
      %v1869 = vunpack.c.l.b16 %v1802
      %v1870 = vunpack.c.h.b16 %v1802
      %v1871 = vunpack.c.l.b16 %v1803
      %v1872 = vunpack.c.h.b16 %v1803
      %v1873 = vunpack.c.l.b16 %v1804
      %v1874 = vunpack.c.h.b16 %v1804
      %v1875 = vunpack.c.l.b16 %v1805
      %v1876 = vunpack.c.h.b16 %v1805
      %v1877 = vunpack.c.l.b16 %v1806
      %v1878 = vunpack.c.h.b16 %v1806
      %v1879 = vunpack.c.l.b16 %v1807
      %v1880 = vunpack.c.h.b16 %v1807
      %v1881 = vunpack.c.l.b16 %v1808
      %v1882 = vunpack.c.h.b16 %v1808
      %v1883 = vunpack.c.l.b16 %v1809
      %v1884 = vunpack.c.h.b16 %v1809
      %v1885 = vunpack.c.l.b16 %v1810
      %v1886 = vunpack.c.h.b16 %v1810
      %v1887 = vunpack.c.l.b16 %v1811
      %v1888 = vunpack.c.h.b16 %v1811
      %v1889 = vunpack.c.l.b16 %v1812
      %v1890 = vunpack.c.h.b16 %v1812
      %v1891 = vunpack.c.l.b16 %v1813
      %v1892 = vunpack.c.h.b16 %v1813
      %v1893 = vunpack.c.l.b16 %v1814
      %v1894 = vunpack.c.h.b16 %v1814
      %v1895 = vunpack.c.l.b16 %v1815
      %v1896 = vunpack.c.h.b16 %v1815
      %v1897 = vunpack.c.l.b16 %v1816
      %v1898 = vunpack.c.h.b16 %v1816
      %v1899 = vunpack.c.l.b16 %v1817
      %v1900 = vunpack.c.h.b16 %v1817
      %v1901 = vunpack.c.l.b16 %v1818
      %v1902 = vunpack.c.h.b16 %v1818
      %v1903 = vunpack.c.l.b16 %v1819
      %v1904 = vunpack.c.h.b16 %v1819
      %v1905 = vunpack.c.l.b16 %v1820
      %v1906 = vunpack.c.h.b16 %v1820
      %v1907 = vunpack.c.l.b16 %v1821
      %v1908 = vunpack.c.h.b16 %v1821
      %v1909 = vunpack.c.l.b16 %v1822
      %v1910 = vunpack.c.h.b16 %v1822
      %v1911 = vunpack.c.l.b16 %v1823
      %v1912 = vunpack.c.h.b16 %v1823
      %v1913 = vunpack.c.l.b16 %v1824
      %v1914 = vunpack.c.h.b16 %v1824
      %v1915 = vunpack.c.l.b16 %v1825
      %v1916 = vunpack.c.h.b16 %v1825
      %v1917 = vunpack.c.l.b16 %v1826
      %v1918 = vunpack.c.h.b16 %v1826
      %v1919 = vunpack.c.l.b16 %v1827
      %v1920 = vunpack.c.h.b16 %v1827
      %v1921 = vunpack.c.l.b16 %v1828
      %v1922 = vunpack.c.h.b16 %v1828
      %v1923 = vunpack.c.l.b16 %v1829
      %v1924 = vunpack.c.h.b16 %v1829
      %v1925 = vunpack.c.l.b16 %v1830
      %v1926 = vunpack.c.h.b16 %v1830
      %v1927 = vpack.c.b16 %v1867, %v1863
      %v1928 = vpack.c.b16 %v1868, %v1864
      %v1929 = vpack.c.b16 %v1869, %v1865
      %v1930 = vpack.c.b16 %v1870, %v1866
      %v1931 = vpack.c.b16 %v1875, %v1871
      %v1932 = vpack.c.b16 %v1876, %v1872
      %v1933 = vpack.c.b16 %v1877, %v1873
      %v1934 = vpack.c.b16 %v1878, %v1874
      %v1935 = vpack.c.b16 %v1883, %v1879
      %v1936 = vpack.c.b16 %v1884, %v1880
      %v1937 = vpack.c.b16 %v1885, %v1881
      %v1938 = vpack.c.b16 %v1886, %v1882
      %v1939 = vpack.c.b16 %v1891, %v1887
      %v1940 = vpack.c.b16 %v1892, %v1888
      %v1941 = vpack.c.b16 %v1893, %v1889
      %v1942 = vpack.c.b16 %v1894, %v1890
      %v1943 = vpack.c.b16 %v1899, %v1895
      %v1944 = vpack.c.b16 %v1900, %v1896
      %v1945 = vpack.c.b16 %v1901, %v1897
      %v1946 = vpack.c.b16 %v1902, %v1898
      %v1947 = vpack.c.b16 %v1907, %v1903
      %v1948 = vpack.c.b16 %v1908, %v1904
      %v1949 = vpack.c.b16 %v1909, %v1905
      %v1950 = vpack.c.b16 %v1910, %v1906
      %v1951 = vpack.c.b16 %v1915, %v1911
      %v1952 = vpack.c.b16 %v1916, %v1912
      %v1953 = vpack.c.b16 %v1917, %v1913
      %v1954 = vpack.c.b16 %v1918, %v1914
      %v1955 = vpack.c.b16 %v1923, %v1919
      %v1956 = vpack.c.b16 %v1924, %v1920
      %v1957 = vpack.c.b16 %v1925, %v1921
      %v1958 = vpack.c.b16 %v1926, %v1922
      %1991 = vmatprep.subr.bf16.mxu0 %v1928
      %1992 = vmatpush1.bf16.msra.mxu0 %v1927
      %1993 = vmatprep.subr.bf16.mxu0 %v1932
      %1994 = vmatpush1.bf16.msra.mxu0 %v1931
      %1995 = vmatprep.subr.bf16.mxu0 %v1936
      %1996 = vmatpush1.bf16.msra.mxu0 %v1935
      %1997 = vmatprep.subr.bf16.mxu0 %v1940
      %1998 = vmatpush1.bf16.msra.mxu0 %v1939
      %1999 = vmatprep.subr.bf16.mxu0 %v1944
      %2000 = vmatpush1.bf16.msra.mxu0 %v1943
      %2001 = vmatprep.subr.bf16.mxu0 %v1948
      %2002 = vmatpush1.bf16.msra.mxu0 %v1947
      %2003 = vmatprep.subr.bf16.mxu0 %v1952
      %2004 = vmatpush1.bf16.msra.mxu0 %v1951
      %2005 = vmatprep.subr.bf16.mxu0 %v1956
      %2006 = vmatpush1.bf16.msra.mxu0 %v1955
      %2007 = vmatprep.subr.bf16.mxu0 0
      %2008 = vmatpush1.bf16.msra.mxu0 0
      %2009 = vmatprep.subr.bf16.mxu0 0
      %2010 = vmatpush1.bf16.msra.mxu0 0
      %2011 = vmatprep.subr.bf16.mxu0 0
      %2012 = vmatpush1.bf16.msra.mxu0 0
      %2013 = vmatprep.subr.bf16.mxu0 0
      %2014 = vmatpush1.bf16.msra.mxu0 0
      %2015 = vmatprep.subr.bf16.mxu0 0
      %2016 = vmatpush1.bf16.msra.mxu0 0
      %2017 = vmatprep.subr.bf16.mxu0 0
      %2018 = vmatpush1.bf16.msra.mxu0 0
      %2019 = vmatprep.subr.bf16.mxu0 0
      %2020 = vmatpush1.bf16.msra.mxu0 0
      %2021 = vmatprep.subr.bf16.mxu0 0
      %2022 = vmatpush1.bf16.msra.mxu0 0
      %2023 = vmatprep.mubr.bf16.mxu0 0
      %2024 = vmatmul.mubr.bf16.gmra.mrb[0].mxu0 %v1798
      %v2025 = vpop.f32.mrb[0].mxu0
      %v2026 = vadd.f32 0.0, %v2025
      %v2027 = vpop.f32.mrb[0].mxu0
      %v2028 = vadd.f32 0.0, %v2027
      %v2029 = vpop.f32.mrb[0].mxu0
      %v2030 = vpop.f32.mrb[0].mxu0
      %2031 = vdwg.mxu0
      %2032 = vmatprep.subr.bf16.mxu0 %v1930
      %2033 = vmatpush1.bf16.msra.mxu0 %v1929
      %2034 = vmatprep.subr.bf16.mxu0 %v1934
      %2035 = vmatpush1.bf16.msra.mxu0 %v1933
      %2036 = vmatprep.subr.bf16.mxu0 %v1938
      %2037 = vmatpush1.bf16.msra.mxu0 %v1937
      %2038 = vmatprep.subr.bf16.mxu0 %v1942
      %2039 = vmatpush1.bf16.msra.mxu0 %v1941
      %2040 = vmatprep.subr.bf16.mxu0 %v1946
      %2041 = vmatpush1.bf16.msra.mxu0 %v1945
      %2042 = vmatprep.subr.bf16.mxu0 %v1950
      %2043 = vmatpush1.bf16.msra.mxu0 %v1949
      %2044 = vmatprep.subr.bf16.mxu0 %v1954
      %2045 = vmatpush1.bf16.msra.mxu0 %v1953
      %2046 = vmatprep.subr.bf16.mxu0 %v1958
      %2047 = vmatpush1.bf16.msra.mxu0 %v1957
      %2048 = vmatprep.subr.bf16.mxu0 0
      %2049 = vmatpush1.bf16.msra.mxu0 0
      %2050 = vmatprep.subr.bf16.mxu0 0
      %2051 = vmatpush1.bf16.msra.mxu0 0
      %2052 = vmatprep.subr.bf16.mxu0 0
      %2053 = vmatpush1.bf16.msra.mxu0 0
      %2054 = vmatprep.subr.bf16.mxu0 0
      %2055 = vmatpush1.bf16.msra.mxu0 0
      %2056 = vmatprep.subr.bf16.mxu0 0
      %2057 = vmatpush1.bf16.msra.mxu0 0
      %2058 = vmatprep.subr.bf16.mxu0 0
      %2059 = vmatpush1.bf16.msra.mxu0 0
      %2060 = vmatprep.subr.bf16.mxu0 0
      %2061 = vmatpush1.bf16.msra.mxu0 0
      %2062 = vmatprep.subr.bf16.mxu0 0
      %2063 = vmatpush1.bf16.msra.mxu0 0
      %2064 = vmatprep.mubr.bf16.mxu0 0
      %2065 = vmatmul.mubr.bf16.gmra.mrb[0].mxu0 %v1798
      %v2066 = vpop.f32.mrb[0].mxu0
      %v2067 = vadd.f32 0.0, %v2066
      %v2068 = vpop.f32.mrb[0].mxu0
      %v2069 = vadd.f32 0.0, %v2068
      %v2070 = vpop.f32.mrb[0].mxu0
      %v2071 = vpop.f32.mrb[0].mxu0
      %2072 = vdwg.mxu0
      %v2073 = vadd.f32 %v1794, %v2026
      %v2074 = vadd.f32 %v1795, %v2028
      %v2075 = vadd.f32 %v1796, %v2067
      %v2076 = vadd.f32 %v1797, %v2069
      %s2077 = smul.u32 %s1788, 4
      %s2078 = smul.addr %s2077, 8
      %s2079 = scalar_lea.vmem [#allocation3], %s2078
      %v2080 = vld [vmem:[%s2079] sm:$0xff]
      %v2081 = vld [vmem:[%s2079 + $0x8] sm:$0xff]
      %v2082 = vld [vmem:[%s2079 + $0x10] sm:$0xff]
      %v2083 = vld [vmem:[%s2079 + $0x18] sm:$0xff]
      %v2084 = vpack.c.bf16 %v1790, %v1790
      %v2085 = vld [vmem:[#allocation6] sm:$0xff]
      %v2086 = vld [vmem:[#allocation6 + $0x8] sm:$0xff]
      %v2087 = vld [vmem:[#allocation6 + $0x10] sm:$0xff]
      %v2088 = vld [vmem:[#allocation6 + $0x18] sm:$0xff]
      %v2089 = vld [vmem:[#allocation6 + $0x20] sm:$0xff]
      %v2090 = vld [vmem:[#allocation6 + $0x28] sm:$0xff]
      %v2091 = vld [vmem:[#allocation6 + $0x30] sm:$0xff]
      %v2092 = vld [vmem:[#allocation6 + $0x38] sm:$0xff]
      %v2093 = vld [vmem:[#allocation6 + $0x40] sm:$0xff]
      %v2094 = vld [vmem:[#allocation6 + $0x48] sm:$0xff]
      %v2095 = vld [vmem:[#allocation6 + $0x50] sm:$0xff]
      %v2096 = vld [vmem:[#allocation6 + $0x58] sm:$0xff]
      %v2097 = vld [vmem:[#allocation6 + $0x60] sm:$0xff]
      %v2098 = vld [vmem:[#allocation6 + $0x68] sm:$0xff]
      %v2099 = vld [vmem:[#allocation6 + $0x70] sm:$0xff]
      %v2100 = vld [vmem:[#allocation6 + $0x78] sm:$0xff]
      %v2101 = vld [vmem:[#allocation6 + $0x80] sm:$0xff]
      %v2102 = vld [vmem:[#allocation6 + $0x88] sm:$0xff]
      %v2103 = vld [vmem:[#allocation6 + $0x90] sm:$0xff]
      %v2104 = vld [vmem:[#allocation6 + $0x98] sm:$0xff]
      %v2105 = vld [vmem:[#allocation6 + $0xa0] sm:$0xff]
      %v2106 = vld [vmem:[#allocation6 + $0xa8] sm:$0xff]
      %v2107 = vld [vmem:[#allocation6 + $0xb0] sm:$0xff]
      %v2108 = vld [vmem:[#allocation6 + $0xb8] sm:$0xff]
      %v2109 = vld [vmem:[#allocation6 + $0xc0] sm:$0xff]
      %v2110 = vld [vmem:[#allocation6 + $0xc8] sm:$0xff]
      %v2111 = vld [vmem:[#allocation6 + $0xd0] sm:$0xff]
      %v2112 = vld [vmem:[#allocation6 + $0xd8] sm:$0xff]
      %v2113 = vld [vmem:[#allocation6 + $0xe0] sm:$0xff]
      %v2114 = vld [vmem:[#allocation6 + $0xe8] sm:$0xff]
      %v2115 = vld [vmem:[#allocation6 + $0xf0] sm:$0xff]
      %v2116 = vld [vmem:[#allocation6 + $0xf8] sm:$0xff]
      %v2149 = vunpack.c.l.b16 %v2085
      %v2150 = vunpack.c.h.b16 %v2085
      %v2151 = vunpack.c.l.b16 %v2086
      %v2152 = vunpack.c.h.b16 %v2086
      %v2153 = vunpack.c.l.b16 %v2087
      %v2154 = vunpack.c.h.b16 %v2087
      %v2155 = vunpack.c.l.b16 %v2088
      %v2156 = vunpack.c.h.b16 %v2088
      %v2157 = vunpack.c.l.b16 %v2089
      %v2158 = vunpack.c.h.b16 %v2089
      %v2159 = vunpack.c.l.b16 %v2090
      %v2160 = vunpack.c.h.b16 %v2090
      %v2161 = vunpack.c.l.b16 %v2091
      %v2162 = vunpack.c.h.b16 %v2091
      %v2163 = vunpack.c.l.b16 %v2092
      %v2164 = vunpack.c.h.b16 %v2092
      %v2165 = vunpack.c.l.b16 %v2093
      %v2166 = vunpack.c.h.b16 %v2093
      %v2167 = vunpack.c.l.b16 %v2094
      %v2168 = vunpack.c.h.b16 %v2094
      %v2169 = vunpack.c.l.b16 %v2095
      %v2170 = vunpack.c.h.b16 %v2095
      %v2171 = vunpack.c.l.b16 %v2096
      %v2172 = vunpack.c.h.b16 %v2096
      %v2173 = vunpack.c.l.b16 %v2097
      %v2174 = vunpack.c.h.b16 %v2097
      %v2175 = vunpack.c.l.b16 %v2098
      %v2176 = vunpack.c.h.b16 %v2098
      %v2177 = vunpack.c.l.b16 %v2099
      %v2178 = vunpack.c.h.b16 %v2099
      %v2179 = vunpack.c.l.b16 %v2100
      %v2180 = vunpack.c.h.b16 %v2100
      %v2181 = vunpack.c.l.b16 %v2101
      %v2182 = vunpack.c.h.b16 %v2101
      %v2183 = vunpack.c.l.b16 %v2102
      %v2184 = vunpack.c.h.b16 %v2102
      %v2185 = vunpack.c.l.b16 %v2103
      %v2186 = vunpack.c.h.b16 %v2103
      %v2187 = vunpack.c.l.b16 %v2104
      %v2188 = vunpack.c.h.b16 %v2104
      %v2189 = vunpack.c.l.b16 %v2105
      %v2190 = vunpack.c.h.b16 %v2105
      %v2191 = vunpack.c.l.b16 %v2106
      %v2192 = vunpack.c.h.b16 %v2106
      %v2193 = vunpack.c.l.b16 %v2107
      %v2194 = vunpack.c.h.b16 %v2107
      %v2195 = vunpack.c.l.b16 %v2108
      %v2196 = vunpack.c.h.b16 %v2108
      %v2197 = vunpack.c.l.b16 %v2109
      %v2198 = vunpack.c.h.b16 %v2109
      %v2199 = vunpack.c.l.b16 %v2110
      %v2200 = vunpack.c.h.b16 %v2110
      %v2201 = vunpack.c.l.b16 %v2111
      %v2202 = vunpack.c.h.b16 %v2111
      %v2203 = vunpack.c.l.b16 %v2112
      %v2204 = vunpack.c.h.b16 %v2112
      %v2205 = vunpack.c.l.b16 %v2113
      %v2206 = vunpack.c.h.b16 %v2113
      %v2207 = vunpack.c.l.b16 %v2114
      %v2208 = vunpack.c.h.b16 %v2114
      %v2209 = vunpack.c.l.b16 %v2115
      %v2210 = vunpack.c.h.b16 %v2115
      %v2211 = vunpack.c.l.b16 %v2116
      %v2212 = vunpack.c.h.b16 %v2116
      %v2213 = vpack.c.b16 %v2153, %v2149
      %v2214 = vpack.c.b16 %v2154, %v2150
      %v2215 = vpack.c.b16 %v2155, %v2151
      %v2216 = vpack.c.b16 %v2156, %v2152
      %v2217 = vpack.c.b16 %v2161, %v2157
      %v2218 = vpack.c.b16 %v2162, %v2158
      %v2219 = vpack.c.b16 %v2163, %v2159
      %v2220 = vpack.c.b16 %v2164, %v2160
      %v2221 = vpack.c.b16 %v2169, %v2165
      %v2222 = vpack.c.b16 %v2170, %v2166
      %v2223 = vpack.c.b16 %v2171, %v2167
      %v2224 = vpack.c.b16 %v2172, %v2168
      %v2225 = vpack.c.b16 %v2177, %v2173
      %v2226 = vpack.c.b16 %v2178, %v2174
      %v2227 = vpack.c.b16 %v2179, %v2175
      %v2228 = vpack.c.b16 %v2180, %v2176
      %v2229 = vpack.c.b16 %v2185, %v2181
      %v2230 = vpack.c.b16 %v2186, %v2182
      %v2231 = vpack.c.b16 %v2187, %v2183
      %v2232 = vpack.c.b16 %v2188, %v2184
      %v2233 = vpack.c.b16 %v2193, %v2189
      %v2234 = vpack.c.b16 %v2194, %v2190
      %v2235 = vpack.c.b16 %v2195, %v2191
      %v2236 = vpack.c.b16 %v2196, %v2192
      %v2237 = vpack.c.b16 %v2201, %v2197
      %v2238 = vpack.c.b16 %v2202, %v2198
      %v2239 = vpack.c.b16 %v2203, %v2199
      %v2240 = vpack.c.b16 %v2204, %v2200
      %v2241 = vpack.c.b16 %v2209, %v2205
      %v2242 = vpack.c.b16 %v2210, %v2206
      %v2243 = vpack.c.b16 %v2211, %v2207
      %v2244 = vpack.c.b16 %v2212, %v2208
      %2277 = vmatprep.subr.bf16.mxu0 %v2214
      %2278 = vmatpush1.bf16.msra.mxu0 %v2213
      %2279 = vmatprep.subr.bf16.mxu0 %v2218
      %2280 = vmatpush1.bf16.msra.mxu0 %v2217
      %2281 = vmatprep.subr.bf16.mxu0 %v2222
      %2282 = vmatpush1.bf16.msra.mxu0 %v2221
      %2283 = vmatprep.subr.bf16.mxu0 %v2226
      %2284 = vmatpush1.bf16.msra.mxu0 %v2225
      %2285 = vmatprep.subr.bf16.mxu0 %v2230
      %2286 = vmatpush1.bf16.msra.mxu0 %v2229
      %2287 = vmatprep.subr.bf16.mxu0 %v2234
      %2288 = vmatpush1.bf16.msra.mxu0 %v2233
      %2289 = vmatprep.subr.bf16.mxu0 %v2238
      %2290 = vmatpush1.bf16.msra.mxu0 %v2237
      %2291 = vmatprep.subr.bf16.mxu0 %v2242
      %2292 = vmatpush1.bf16.msra.mxu0 %v2241
      %2293 = vmatprep.subr.bf16.mxu0 0
      %2294 = vmatpush1.bf16.msra.mxu0 0
      %2295 = vmatprep.subr.bf16.mxu0 0
      %2296 = vmatpush1.bf16.msra.mxu0 0
      %2297 = vmatprep.subr.bf16.mxu0 0
      %2298 = vmatpush1.bf16.msra.mxu0 0
      %2299 = vmatprep.subr.bf16.mxu0 0
      %2300 = vmatpush1.bf16.msra.mxu0 0
      %2301 = vmatprep.subr.bf16.mxu0 0
      %2302 = vmatpush1.bf16.msra.mxu0 0
      %2303 = vmatprep.subr.bf16.mxu0 0
      %2304 = vmatpush1.bf16.msra.mxu0 0
      %2305 = vmatprep.subr.bf16.mxu0 0
      %2306 = vmatpush1.bf16.msra.mxu0 0
      %2307 = vmatprep.subr.bf16.mxu0 0
      %2308 = vmatpush1.bf16.msra.mxu0 0
      %2309 = vmatprep.mubr.bf16.mxu0 0
      %2310 = vmatmul.mubr.bf16.gmra.mrb[0].mxu0 %v2084
      %v2311 = vpop.f32.mrb[0].mxu0
      %v2312 = vadd.f32 0.0, %v2311
      %v2313 = vpop.f32.mrb[0].mxu0
      %v2314 = vadd.f32 0.0, %v2313
      %v2315 = vpop.f32.mrb[0].mxu0
      %v2316 = vpop.f32.mrb[0].mxu0
      %2317 = vdwg.mxu0
      %2318 = vmatprep.subr.bf16.mxu0 %v2216
      %2319 = vmatpush1.bf16.msra.mxu0 %v2215
      %2320 = vmatprep.subr.bf16.mxu0 %v2220
      %2321 = vmatpush1.bf16.msra.mxu0 %v2219
      %2322 = vmatprep.subr.bf16.mxu0 %v2224
      %2323 = vmatpush1.bf16.msra.mxu0 %v2223
      %2324 = vmatprep.subr.bf16.mxu0 %v2228
      %2325 = vmatpush1.bf16.msra.mxu0 %v2227
      %2326 = vmatprep.subr.bf16.mxu0 %v2232
      %2327 = vmatpush1.bf16.msra.mxu0 %v2231
      %2328 = vmatprep.subr.bf16.mxu0 %v2236
      %2329 = vmatpush1.bf16.msra.mxu0 %v2235
      %2330 = vmatprep.subr.bf16.mxu0 %v2240
      %2331 = vmatpush1.bf16.msra.mxu0 %v2239
      %2332 = vmatprep.subr.bf16.mxu0 %v2244
      %2333 = vmatpush1.bf16.msra.mxu0 %v2243
      %2334 = vmatprep.subr.bf16.mxu0 0
      %2335 = vmatpush1.bf16.msra.mxu0 0
      %2336 = vmatprep.subr.bf16.mxu0 0
      %2337 = vmatpush1.bf16.msra.mxu0 0
      %2338 = vmatprep.subr.bf16.mxu0 0
      %2339 = vmatpush1.bf16.msra.mxu0 0
      %2340 = vmatprep.subr.bf16.mxu0 0
      %2341 = vmatpush1.bf16.msra.mxu0 0
      %2342 = vmatprep.subr.bf16.mxu0 0
      %2343 = vmatpush1.bf16.msra.mxu0 0
      %2344 = vmatprep.subr.bf16.mxu0 0
      %2345 = vmatpush1.bf16.msra.mxu0 0
      %2346 = vmatprep.subr.bf16.mxu0 0
      %2347 = vmatpush1.bf16.msra.mxu0 0
      %2348 = vmatprep.subr.bf16.mxu0 0
      %2349 = vmatpush1.bf16.msra.mxu0 0
      %2350 = vmatprep.mubr.bf16.mxu0 0
      %2351 = vmatmul.mubr.bf16.gmra.mrb[0].mxu0 %v2084
      %v2352 = vpop.f32.mrb[0].mxu0
      %v2353 = vadd.f32 0.0, %v2352
      %v2354 = vpop.f32.mrb[0].mxu0
      %v2355 = vadd.f32 0.0, %v2354
      %v2356 = vpop.f32.mrb[0].mxu0
      %v2357 = vpop.f32.mrb[0].mxu0
      %2358 = vdwg.mxu0
      %v2359 = vadd.f32 %v2080, %v2312
      %v2360 = vadd.f32 %v2081, %v2314
      %v2361 = vadd.f32 %v2082, %v2353
      %v2362 = vadd.f32 %v2083, %v2355
      %v2363 = vxor.u32 %v2073, 2147483648
      %v2364 = vxor.u32 %v2074, 2147483648
      %v2365 = vxor.u32 %v2075, 2147483648
      %v2366 = vxor.u32 %v2359, 2147483648
      %v2367 = vxor.u32 %v2360, 2147483648
      %v2368 = vxor.u32 %v2361, 2147483648
      %v2369 = vmul.f32 %v2363, 1.442695
      %v2370 = vpow.pop %v2369
      %v2371 = vmul.f32 %v2364, 1.442695
      %v2372 = vpow.pop %v2371
      %v2373 = vmul.f32 %v2365, 1.442695
      %v2374 = vpow.pop %v2373
      %v2375 = vmul.f32 %v2366, 1.442695
      %v2376 = vpow.pop %v2375
      %v2377 = vmul.f32 %v2367, 1.442695
      %v2378 = vpow.pop %v2377
      %v2379 = vmul.f32 %v2368, 1.442695
      %v2380 = vpow.pop %v2379
      %v2381 = vadd.f32 %v2370, 1.0
      %v2382 = vadd.f32 %v2372, 1.0
      %v2383 = vadd.f32 %v2374, 1.0
      %v2384 = vadd.f32 %v2376, 1.0
      %v2385 = vadd.f32 %v2378, 1.0
      %v2386 = vadd.f32 %v2380, 1.0
      %v2387 = vrcp.pop %v2381
      %v2388 = vmul.f32 1.0, %v2387
      %v2389 = vrcp.pop %v2382
      %v2390 = vmul.f32 1.0, %v2389
      %v2391 = vrcp.pop %v2383
      %v2392 = vmul.f32 1.0, %v2391
      %v2393 = vrcp.pop %v2384
      %v2394 = vmul.f32 1.0, %v2393
      %v2395 = vrcp.pop %v2385
      %v2396 = vmul.f32 1.0, %v2395
      %v2397 = vrcp.pop %v2386
      %v2398 = vmul.f32 1.0, %v2397
      %v2399 = vtanh.pop %v2076
      %v2400 = vtanh.pop %v2362
      %v2401 = vld [vmem:[#allocation5] sm:$0xff]
      %v2402 = vld [vmem:[#allocation5 + $0x8] sm:$0xff]
      %v2403 = vmul.f32 %v2390, %v2401
      %v2404 = vmul.f32 %v2396, %v2402
      %v2405 = vmul.f32 %v2388, %v2399
      %v2406 = vmul.f32 %v2394, %v2400
      %v2407 = vadd.f32 %v2403, %v2405
      %v2408 = vadd.f32 %v2404, %v2406
      %v2409 = vtanh.pop %v2407
      %v2410 = vtanh.pop %v2408
      %v2411 = vmul.f32 %v2392, %v2409
      %v2412 = vmul.f32 %v2398, %v2410
      %2413 = vst [vmem:[#allocation4] sm:$0xff] %v2411
      %2414 = vst [vmem:[#allocation5] sm:$0xff] %v2407
      %v2415 = vpack.c.bf16 %v2411, %v2411
      %s2416 = smul.addr %s1783, 4
      %s2417 = scalar_lea.vmem %s10, %s2416
      %2418 = vst [vmem:[%s2417] sm:$0xf] %v2415
      %v2419 = vpack.c.bf16 %v2412, %v2412
      %s2420 = smul.addr %s1788, 4
      %s2421 = scalar_lea.vmem %s118, %s2420
      %2422 = vst [vmem:[%s2421] sm:$0xf] %v2419
      %s2423 = ssub.s32 0, 0
      %s2424 = smul.u32 %s2423, 8
      %s2425 = sadd.s32 %s2424, %s1788
      %p2426 = scmp.lt.s32.totalorder %s2425, 8
      // Predicated region
      $region61: #{seq_tagger_forward.4} parent=57 // pred_check
        %p2427 = pneg %p2426
      $region62: #{seq_tagger_forward.4} parent=57 // pred_check_branch
        %2429 = sbr.rel (%p2427) target = $region64
      $region63: #{seq_tagger_forward.4} parent=57 // pred_region
        %2430 = vst [vmem:[#allocation4 + $0x8] sm:$0xff] %v2412
        %2431 = vst [vmem:[#allocation5 + $0x8] sm:$0xff] %v2408
      $region64: #{seq_tagger_forward.4} parent=57 // pred_fallthru
        _
    $region58: #{seq_tagger_forward.4} parent=1 // loop_footer
      %s1787 = sadd.s32 1, %s1783
    $region59: #{seq_tagger_forward.4} parent=1 // loop_footer_branch
      %1782 = sbr.rel target = $region55
    $region60: #{seq_tagger_forward.4} parent=1 // loop_exit
      _
    %s2432 = ssub.s32 0, 0
    %s2433 = smul.u32 8, %s2432
    %p2434 = scmp.lt.s32.totalorder %s2433, 7
    %s2435 = scalar_select %p2434, %s2433, 7
    %s2436 = smul.addr %s2435, 4
    %s2437 = scalar_lea.vmem %s11, %s2436
    // Predicated region
    $region65: #{seq_tagger_forward.4} parent=1 // pred_check
      _
    $region66: #{seq_tagger_forward.4} parent=1 // pred_check_branch
      %2439 = sbr.rel (0) target = $region68
    $region67: #{seq_tagger_forward.4} parent=1 // pred_region
      _
    $region68: #{seq_tagger_forward.4} parent=1 // pred_fallthru
      _
    // Predicated region
    $region69: #{seq_tagger_forward.4} parent=1 // pred_check
      _
    $region70: #{seq_tagger_forward.4} parent=1 // pred_check_branch
      %2441 = sbr.rel (0) target = $region72
    $region71: #{seq_tagger_forward.4} parent=1 // pred_region
      %s2442 = ssub.s32 0, 0
      %s2443 = smul.u32 8, %s2442
    $region72: #{seq_tagger_forward.4} parent=1 // pred_fallthru
      _
    // Predicated region
    $region73: #{seq_tagger_forward.4} parent=1 // pred_check
      _
    $region74: #{seq_tagger_forward.4} parent=1 // pred_check_branch
      %2445 = sbr.rel (0) target = $region76
    $region75: #{seq_tagger_forward.4} parent=1 // pred_region
      _
    $region76: #{seq_tagger_forward.4} parent=1 // pred_fallthru
      _
    // Predicated region
    $region77: #{seq_tagger_forward.4} parent=1 // pred_check
      _
    $region78: #{seq_tagger_forward.4} parent=1 // pred_check_branch
      %2447 = sbr.rel (0) target = $region80
    $region79: #{seq_tagger_forward.4} parent=1 // pred_region
      %s2448 = ssub.s32 0, 0
      %s2449 = smul.u32 8, %s2448
      %p2450 = scmp.lt.s32.totalorder %s2449, 7
      %s2451 = scalar_select %p2450, %s2449, 7
      %s2452 = smul.addr %s2451, 4
      %s2453 = scalar_lea.vmem %s11, %s2452
    $region80: #{seq_tagger_forward.4} parent=1 // pred_fallthru
      _
    %2454 = vsyncpa [#allocation7], 1
    %2455 = vsyncpa [#allocation9], 1

</llo_original>
